<compile_context>
chip_gen: v7x
topology: tpu7x:2x2x1
jax: 0.10.0
libtpu: 0.0.40
codegen_flags: <defaults>
</compile_context>

<pallas_src>
import numpy as np
import jax
import jax.numpy as jnp
from jax.experimental import pallas as pl
from jax.experimental.pallas import tpu as pltpu


# Fixed geometry implied by the PyTorch module (fc1 = Linear(16*7*7, .) => 28x28 input).
_H1 = _W1 = 28          # conv1 output spatial == input spatial
_H2 = _W2 = 14          # after pool1
_H3 = _W3 = 7           # after pool2
_C1, _C2 = 8, 16        # conv1 / conv2 output channels
_TB = 8                 # images per grid step (stacked along the sublane/M axis)


# ----------------------------- fused Pallas kernel ----------------------------- #

def _fused_cnn_kernel(x_ref, w1_ref, b1_ref, p1a_ref, p1b_ref,
                      w2_ref, b2_ref, p2a_ref, p2b_ref,
                      wfc_ref, bfc_ref, out_ref, s2_ref):
    f32, bf16 = jnp.float32, jnp.bfloat16
    m1 = p1a_ref.shape[1]            # TB*(H1+2) - 2 = 238
    m2 = p2a_ref.shape[1]            # TB*(H2+2) - 2 = 126
    tb = out_ref.shape[0]            # TB
    nh3 = wfc_ref.shape[0]           # 7

    # --- conv1 (3x3, pad 1) + bias + ReLU: three row-tap matmuls over the whole
    #     batched slab; both output-column parities live in the 256-lane band.
    acc = b1_ref[...]                                                 # (1, 256) f32
    for dy in range(3):
        acc = acc + jnp.dot(x_ref[pl.ds(dy, m1), :].astype(bf16), w1_ref[dy],
                            preferred_element_type=f32)               # (m1, 256)
    acc = jnp.maximum(acc, 0.0)
    # 2x2 pool, column half: max of the two parity halves (vreg-lane aligned).
    cp = jnp.maximum(acc[:, :128], acc[:, 128:]).astype(bf16)         # (m1, 128)

    # 2x2 pool, row half + conv2 H zero-padding rows: two 0/1 selection matmuls.
    s2 = jnp.maximum(jnp.dot(p1a_ref[...], cp, preferred_element_type=f32),
                     jnp.dot(p1b_ref[...], cp, preferred_element_type=f32))
    s2_ref[...] = s2                                                  # (TB*16, 128) f32

    # --- conv2 (3x3, pad 1) + bias + ReLU, same banded/parity structure.
    acc2 = b2_ref[...]                                                # (1, 256) f32
    for dy in range(3):
        acc2 = acc2 + jnp.dot(s2_ref[pl.ds(dy, m2), :].astype(bf16), w2_ref[dy],
                              preferred_element_type=f32)             # (m2, 256)
    acc2 = jnp.maximum(acc2, 0.0)
    cp2 = jnp.maximum(acc2[:, :128], acc2[:, 128:]).astype(bf16)      # (m2, 128)
    s4 = jnp.maximum(jnp.dot(p2a_ref[...], cp2, preferred_element_type=f32),
                     jnp.dot(p2b_ref[...], cp2, preferred_element_type=f32))  # (7*TB, 128)

    # --- FC: accumulate (TB, 128) x (128, 128) over the 7 pooled rows; output is a
    #     128-lane padded slab (only num_classes lanes are non-zero).
    out = bfc_ref[...]                                                # (1, 128) f32
    for h in range(nh3):
        out = out + jnp.dot(s4[h * tb:(h + 1) * tb, :].astype(bf16), wfc_ref[h],
                            preferred_element_type=f32)
    out_ref[...] = out


# ------------------------- one-time parameter re-layout ------------------------ #

def prepare_params(params, tb=_TB):
    """Convert PyTorch-layout params into the banded / pre-permuted bf16 layout the
    fused kernel consumes.  Done ONCE (outside jit)."""
    w1 = np.asarray(params["w1"], np.float32)        # (C1, C0, 3, 3)
    b1 = np.asarray(params["b1"], np.float32)
    w2 = np.asarray(params["w2"], np.float32)        # (C2, C1, 3, 3)
    b2 = np.asarray(params["b2"], np.float32)
    wfc = np.asarray(params["wfc"], np.float32)      # (NC, C2*7*7)
    bfc = np.asarray(params["bfc"], np.float32)
    C1, C0 = w1.shape[0], w1.shape[1]
    C2, NC = w2.shape[0], wfc.shape[0]
    assert (C1, C2) == (_C1, _C2) and NC <= 128

    # conv1 band: one (28*C0, 256) matrix per row tap; even output columns in lanes
    # [0,128), odd in [128,256).  W zero-padding = out-of-range taps simply omitted.
    w1b = np.zeros((3, _W1 * C0, 256), np.float32)
    b1r = np.zeros((1, 256), np.float32)
    for dy in range(3):
        for p in range(2):
            for j in range(_W1 // 2):
                for dx in range(3):
                    wi = 2 * j + p + dx - 1
                    if 0 <= wi < _W1:
                        w1b[dy, wi * C0:(wi + 1) * C0,
                            p * 128 + j * C1: p * 128 + (j + 1) * C1] = w1[:, :, dy, dx].T
    for p in range(2):
        for j in range(_W1 // 2):
            b1r[0, p * 128 + j * C1: p * 128 + (j + 1) * C1] = b1

    # conv2 band: input lane = w2_in*C1 + c_in (lanes 112..127 zero), same parity packing.
    w2b = np.zeros((3, 128, 256), np.float32)
    b2r = np.zeros((1, 256), np.float32)
    for dy in range(3):
        for p in range(2):
            for j in range(_W2 // 2):
                for dx in range(3):
                    wi = 2 * j + p + dx - 1
                    if 0 <= wi < _W2:
                        w2b[dy, wi * C1:(wi + 1) * C1,
                            p * 128 + j * C2: p * 128 + (j + 1) * C2] = w2[:, :, dy, dx].T
    for p in range(2):
        for j in range(_W2 // 2):
            b2r[0, p * 128 + j * C2: p * 128 + (j + 1) * C2] = b2

    # pool1 row-selection (0/1) matrices: pick the two pooled rows per image (max taken
    # elementwise in-kernel) and insert the zero rows that give conv2 its H padding.
    m1 = tb * (_H1 + 2) - 2
    p1a = np.zeros((tb * (_H2 + 2), m1), np.float32)
    p1b = np.zeros((tb * (_H2 + 2), m1), np.float32)
    for t in range(tb):
        for h2 in range(_H2):
            p1a[t * (_H2 + 2) + h2 + 1, t * (_H1 + 2) + 2 * h2] = 1.0
            p1b[t * (_H2 + 2) + h2 + 1, t * (_H1 + 2) + 2 * h2 + 1] = 1.0

    # pool2 row-selection matrices; output row = h3*TB + t so the FC can slice
    # contiguous (TB, 128) blocks per pooled row.
    m2 = tb * (_H2 + 2) - 2
    p2a = np.zeros((tb * _H3, m2), np.float32)
    p2b = np.zeros((tb * _H3, m2), np.float32)
    for t in range(tb):
        for h3 in range(_H3):
            p2a[h3 * tb + t, t * (_H2 + 2) + 2 * h3] = 1.0
            p2b[h3 * tb + t, t * (_H2 + 2) + 2 * h3 + 1] = 1.0

    # FC weight permuted from PyTorch's (C, H, W) flatten order to (h, lane=w*C2+c, class),
    # padded to 128 lanes in both K (rows 112..127 zero) and N (classes NC..127 zero).
    wfcb = np.zeros((_H3, 128, 128), np.float32)
    for h in range(_H3):
        for w in range(_W3):
            for c in range(C2):
                wfcb[h, w * C2 + c, :NC] = wfc[:, c * (_H3 * _W3) + h * _W3 + w]
    bfcr = np.zeros((1, 128), np.float32)
    bfcr[0, :NC] = bfc

    bf = jnp.bfloat16
    return {
        "w1b": jnp.asarray(w1b, bf), "b1r": jnp.asarray(b1r),
        "p1a": jnp.asarray(p1a, bf), "p1b": jnp.asarray(p1b, bf),
        "w2b": jnp.asarray(w2b, bf), "b2r": jnp.asarray(b2r),
        "p2a": jnp.asarray(p2a, bf), "p2b": jnp.asarray(p2b, bf),
        "wfcb": jnp.asarray(wfcb, bf), "bfcr": jnp.asarray(bfcr),
    }


# --------------------------------- forward pass -------------------------------- #

def cnn_forward(prep, x_nchw, num_classes=10, tb=_TB):
    """Fused conv1+relu+pool -> conv2+relu+pool -> fc forward: one pallas_call,
    TB images per grid step."""
    N, C0, H, W = x_nchw.shape
    assert (H, W) == (_H1, _W1)
    G = -(-N // tb)                       # grid length; >=2 lets both v7x TCs work
    Np = G * tb

    # Per-image slab: row = h_padded (30 rows, zero rows top/bottom = conv1 H padding),
    # lane = w*C0 + c.  TB images are stacked along the sublane axis (row = t*30 + h_pad).
    x = jnp.transpose(x_nchw, (0, 2, 3, 1)).reshape(N, H, W * C0).astype(jnp.float32)
    x = jnp.pad(x, ((0, Np - N), (1, 1), (0, 0)))
    x = x.reshape(G, tb * (H + 2), W * C0)

    def rep(arr):                         # constant (grid-invariant) weight block
        nd = arr.ndim
        return pl.BlockSpec(arr.shape, lambda g, _n=nd: (0,) * _n)

    out = pl.pallas_call(
        _fused_cnn_kernel,
        out_shape=jax.ShapeDtypeStruct((Np, 128), jnp.float32),
        grid=(G,),
        in_specs=[
            pl.BlockSpec((None, tb * (H + 2), W * C0), lambda g: (g, 0, 0)),  # x slab
            rep(prep["w1b"]), rep(prep["b1r"]), rep(prep["p1a"]), rep(prep["p1b"]),
            rep(prep["w2b"]), rep(prep["b2r"]), rep(prep["p2a"]), rep(prep["p2b"]),
            rep(prep["wfcb"]), rep(prep["bfcr"]),
        ],
        out_specs=pl.BlockSpec((tb, 128), lambda g: (g, 0)),
        scratch_shapes=[pltpu.VMEM((tb * (_H2 + 2), 128), jnp.float32)],   # pooled1 slab
        compiler_params=pltpu.CompilerParams(
            dimension_semantics=("parallel",)),
    )(x, prep["w1b"], prep["b1r"], prep["p1a"], prep["p1b"],
      prep["w2b"], prep["b2r"], prep["p2a"], prep["p2b"],
      prep["wfcb"], prep["bfcr"])
    return out[:N, :num_classes]


# ------------------------------- model setup / ref ------------------------------ #

def init_params(key, in_channels=1, num_classes=10):
    k1, k2, k3, k4, k5, k6 = jax.random.split(key, 6)
    return {
        "w1": 0.1 * jax.random.normal(k1, (8, in_channels, 3, 3), jnp.float32),
        "b1": 0.1 * jax.random.normal(k2, (8,), jnp.float32),
        "w2": 0.1 * jax.random.normal(k3, (16, 8, 3, 3), jnp.float32),
        "b2": 0.1 * jax.random.normal(k4, (16,), jnp.float32),
        "wfc": 0.1 * jax.random.normal(k5, (num_classes, 16 * 7 * 7), jnp.float32),
        "bfc": 0.1 * jax.random.normal(k6, (num_classes,), jnp.float32),
    }


def reference_forward(params, x_nchw):
    """Pure-JAX f32 reference matching the PyTorch module semantics."""
    dn = ("NCHW", "OIHW", "NCHW")
    x = jax.lax.conv_general_dilated(x_nchw, params["w1"], (1, 1),
                                     ((1, 1), (1, 1)), dimension_numbers=dn)
    x = jnp.maximum(x + params["b1"][None, :, None, None], 0.0)
    x = jax.lax.reduce_window(x, -jnp.inf, jax.lax.max,
                              (1, 1, 2, 2), (1, 1, 2, 2), "VALID")
    x = jax.lax.conv_general_dilated(x, params["w2"], (1, 1),
                                     ((1, 1), (1, 1)), dimension_numbers=dn)
    x = jnp.maximum(x + params["b2"][None, :, None, None], 0.0)
    x = jax.lax.reduce_window(x, -jnp.inf, jax.lax.max,
                              (1, 1, 2, 2), (1, 1, 2, 2), "VALID")
    x = x.reshape(x.shape[0], -1)
    return x @ params["wfc"].T + params["bfc"]


if __name__ == "__main__":
    key = jax.random.PRNGKey(0)
    k_params, k_x = jax.random.split(key)
    params = init_params(k_params, in_channels=1, num_classes=10)
    prep = prepare_params(params)          # one-time weight re-layout (outside jit)

    # fc1 expects 16*7*7 features => 28x28 spatial input (MNIST-like), batch=2.
    x = jax.random.normal(k_x, (2, 1, 28, 28), jnp.float32)

    fwd = jax.jit(cnn_forward)
    out = jax.block_until_ready(fwd(prep, x))
    assert out.shape == (2, 10), out.shape

    ref = jax.block_until_ready(reference_forward(params, x))
    # bf16 matmul operands with f32 accumulation -> slightly looser tolerance than f32.
    assert jnp.allclose(out, ref, atol=3e-2, rtol=3e-2), (
        f"max abs err = {jnp.max(jnp.abs(out - ref))}")

    print("KERNEL_OK")
</pallas_src>

<mosaic_0001>
module attributes {stable_mosaic.version = 11 : i64} {
  func.func @_fused_cnn_kernel(%arg0: i32, %arg1: memref<1x240x28xf32, #tpu.memory_space<vmem>>, %arg2: memref<3x28x256xbf16, #tpu.memory_space<vmem>>, %arg3: memref<1x256xf32, #tpu.memory_space<vmem>>, %arg4: memref<128x238xbf16, #tpu.memory_space<vmem>>, %arg5: memref<128x238xbf16, #tpu.memory_space<vmem>>, %arg6: memref<3x128x256xbf16, #tpu.memory_space<vmem>>, %arg7: memref<1x256xf32, #tpu.memory_space<vmem>>, %arg8: memref<56x126xbf16, #tpu.memory_space<vmem>>, %arg9: memref<56x126xbf16, #tpu.memory_space<vmem>>, %arg10: memref<7x128x128xbf16, #tpu.memory_space<vmem>>, %arg11: memref<1x128xf32, #tpu.memory_space<vmem>>, %arg12: memref<8x128xf32, #tpu.memory_space<vmem>>, %arg13: memref<128x128xf32, #tpu.memory_space<vmem>>) attributes {dimension_semantics = [#tpu.dimension_semantics<parallel>], iteration_bounds = array<i64: 1>, scalar_prefetch = 0 : i64, scratch_operands = 1 : i64, tpu.core_type = #tpu.core_type<tc>, window_params = [{transform_indices = @transform_0, window_bounds = array<i64: 1, 240, 28>}, {pipeline_mode = #tpu.pipeline_mode<synchronous>, transform_indices = @transform_1, window_bounds = array<i64: 3, 28, 256>}, {pipeline_mode = #tpu.pipeline_mode<synchronous>, transform_indices = @transform_2, window_bounds = array<i64: 1, 256>}, {pipeline_mode = #tpu.pipeline_mode<synchronous>, transform_indices = @transform_3, window_bounds = array<i64: 128, 238>}, {pipeline_mode = #tpu.pipeline_mode<synchronous>, transform_indices = @transform_4, window_bounds = array<i64: 128, 238>}, {pipeline_mode = #tpu.pipeline_mode<synchronous>, transform_indices = @transform_5, window_bounds = array<i64: 3, 128, 256>}, {pipeline_mode = #tpu.pipeline_mode<synchronous>, transform_indices = @transform_6, window_bounds = array<i64: 1, 256>}, {pipeline_mode = #tpu.pipeline_mode<synchronous>, transform_indices = @transform_7, window_bounds = array<i64: 56, 126>}, {pipeline_mode = #tpu.pipeline_mode<synchronous>, transform_indices = @transform_8, window_bounds = array<i64: 56, 126>}, {pipeline_mode = #tpu.pipeline_mode<synchronous>, transform_indices = @transform_9, window_bounds = array<i64: 7, 128, 128>}, {pipeline_mode = #tpu.pipeline_mode<synchronous>, transform_indices = @transform_10, window_bounds = array<i64: 1, 128>}, {transform_indices = @transform_11, window_bounds = array<i64: 8, 128>}]} {
    %c0 = arith.constant 0 : index
    %c0_0 = arith.constant 0 : index
    %0 = vector.load %arg3[%c0, %c0_0] : memref<1x256xf32, #tpu.memory_space<vmem>>, vector<1x256xf32>
    %c0_1 = arith.constant 0 : index
    %c0_2 = arith.constant 0 : index
    %c0_3 = arith.constant 0 : index
    %1 = vector.load %arg1[%c0_1, %c0_2, %c0_3] : memref<1x240x28xf32, #tpu.memory_space<vmem>>, vector<1x238x28xf32>
    %2 = vector.shape_cast %1 : vector<1x238x28xf32> to vector<238x28xf32>
    %3 = arith.truncf %2 : vector<238x28xf32> to vector<238x28xbf16>
    %c0_4 = arith.constant 0 : index
    %c0_5 = arith.constant 0 : index
    %c0_6 = arith.constant 0 : index
    %4 = vector.load %arg2[%c0_4, %c0_5, %c0_6] : memref<3x28x256xbf16, #tpu.memory_space<vmem>>, vector<1x28x256xbf16>
    %5 = vector.shape_cast %4 : vector<1x28x256xbf16> to vector<28x256xbf16>
    %cst = arith.constant dense<0.000000e+00> : vector<238x256xf32>
    %6 = tpu.matmul %3, %5, %cst {dimension_numbers = #tpu.dot_dimension_numbers<[1], [0], [0], [1], [0, 0, 1, 1], [], []>} : vector<238x28xbf16>, vector<28x256xbf16>, vector<238x256xf32> -> vector<238x256xf32>
    %7 = vector.broadcast %0 : vector<1x256xf32> to vector<238x256xf32>
    %8 = arith.addf %7, %6 : vector<238x256xf32>
    %c0_7 = arith.constant 0 : index
    %c1 = arith.constant 1 : index
    %c0_8 = arith.constant 0 : index
    %9 = vector.load %arg1[%c0_7, %c1, %c0_8] : memref<1x240x28xf32, #tpu.memory_space<vmem>>, vector<1x238x28xf32>
    %10 = vector.shape_cast %9 : vector<1x238x28xf32> to vector<238x28xf32>
    %11 = arith.truncf %10 : vector<238x28xf32> to vector<238x28xbf16>
    %c1_9 = arith.constant 1 : index
    %c0_10 = arith.constant 0 : index
    %c0_11 = arith.constant 0 : index
    %12 = vector.load %arg2[%c1_9, %c0_10, %c0_11] : memref<3x28x256xbf16, #tpu.memory_space<vmem>>, vector<1x28x256xbf16>
    %13 = vector.shape_cast %12 : vector<1x28x256xbf16> to vector<28x256xbf16>
    %cst_12 = arith.constant dense<0.000000e+00> : vector<238x256xf32>
    %14 = tpu.matmul %11, %13, %cst_12 {dimension_numbers = #tpu.dot_dimension_numbers<[1], [0], [0], [1], [0, 0, 1, 1], [], []>} : vector<238x28xbf16>, vector<28x256xbf16>, vector<238x256xf32> -> vector<238x256xf32>
    %15 = arith.addf %8, %14 : vector<238x256xf32>
    %c0_13 = arith.constant 0 : index
    %c2 = arith.constant 2 : index
    %c0_14 = arith.constant 0 : index
    %16 = vector.load %arg1[%c0_13, %c2, %c0_14] : memref<1x240x28xf32, #tpu.memory_space<vmem>>, vector<1x238x28xf32>
    %17 = vector.shape_cast %16 : vector<1x238x28xf32> to vector<238x28xf32>
    %18 = arith.truncf %17 : vector<238x28xf32> to vector<238x28xbf16>
    %c2_15 = arith.constant 2 : index
    %c0_16 = arith.constant 0 : index
    %c0_17 = arith.constant 0 : index
    %19 = vector.load %arg2[%c2_15, %c0_16, %c0_17] : memref<3x28x256xbf16, #tpu.memory_space<vmem>>, vector<1x28x256xbf16>
    %20 = vector.shape_cast %19 : vector<1x28x256xbf16> to vector<28x256xbf16>
    %cst_18 = arith.constant dense<0.000000e+00> : vector<238x256xf32>
    %21 = tpu.matmul %18, %20, %cst_18 {dimension_numbers = #tpu.dot_dimension_numbers<[1], [0], [0], [1], [0, 0, 1, 1], [], []>} : vector<238x28xbf16>, vector<28x256xbf16>, vector<238x256xf32> -> vector<238x256xf32>
    %22 = arith.addf %15, %21 : vector<238x256xf32>
    %cst_19 = arith.constant 0.000000e+00 : f32
    %23 = vector.broadcast %cst_19 : f32 to vector<238x256xf32>
    %24 = arith.maximumf %22, %23 : vector<238x256xf32>
    %25 = vector.extract_strided_slice %24 {offsets = [0, 0], sizes = [238, 128], strides = [1, 1]} : vector<238x256xf32> to vector<238x128xf32>
    %26 = vector.extract_strided_slice %24 {offsets = [0, 128], sizes = [238, 128], strides = [1, 1]} : vector<238x256xf32> to vector<238x128xf32>
    %27 = arith.maximumf %25, %26 : vector<238x128xf32>
    %28 = arith.truncf %27 : vector<238x128xf32> to vector<238x128xbf16>
    %c0_20 = arith.constant 0 : index
    %c0_21 = arith.constant 0 : index
    %29 = vector.load %arg4[%c0_20, %c0_21] : memref<128x238xbf16, #tpu.memory_space<vmem>>, vector<128x238xbf16>
    %cst_22 = arith.constant dense<0.000000e+00> : vector<128x128xf32>
    %30 = tpu.matmul %29, %28, %cst_22 {dimension_numbers = #tpu.dot_dimension_numbers<[1], [0], [0], [1], [0, 0, 1, 1], [], []>} : vector<128x238xbf16>, vector<238x128xbf16>, vector<128x128xf32> -> vector<128x128xf32>
    %c0_23 = arith.constant 0 : index
    %c0_24 = arith.constant 0 : index
    %31 = vector.load %arg5[%c0_23, %c0_24] : memref<128x238xbf16, #tpu.memory_space<vmem>>, vector<128x238xbf16>
    %cst_25 = arith.constant dense<0.000000e+00> : vector<128x128xf32>
    %32 = tpu.matmul %31, %28, %cst_25 {dimension_numbers = #tpu.dot_dimension_numbers<[1], [0], [0], [1], [0, 0, 1, 1], [], []>} : vector<128x238xbf16>, vector<238x128xbf16>, vector<128x128xf32> -> vector<128x128xf32>
    %33 = arith.maximumf %30, %32 : vector<128x128xf32>
    %c0_26 = arith.constant 0 : index
    %c0_27 = arith.constant 0 : index
    %34 = vector.load %arg13[%c0_26, %c0_27] : memref<128x128xf32, #tpu.memory_space<vmem>>, vector<128x128xf32>
    tpu.vector_store %arg13[%c0_26, %c0_27], %33 {strides = array<i32>} : memref<128x128xf32, #tpu.memory_space<vmem>>, vector<128x128xf32>,
    %c0_28 = arith.constant 0 : index
    %c0_29 = arith.constant 0 : index
    %35 = vector.load %arg7[%c0_28, %c0_29] : memref<1x256xf32, #tpu.memory_space<vmem>>, vector<1x256xf32>
    %c0_30 = arith.constant 0 : index
    %c0_31 = arith.constant 0 : index
    %36 = vector.load %arg13[%c0_30, %c0_31] : memref<128x128xf32, #tpu.memory_space<vmem>>, vector<126x128xf32>
    %37 = arith.truncf %36 : vector<126x128xf32> to vector<126x128xbf16>
    %c0_32 = arith.constant 0 : index
    %c0_33 = arith.constant 0 : index
    %c0_34 = arith.constant 0 : index
    %38 = vector.load %arg6[%c0_32, %c0_33, %c0_34] : memref<3x128x256xbf16, #tpu.memory_space<vmem>>, vector<1x128x256xbf16>
    %39 = vector.shape_cast %38 : vector<1x128x256xbf16> to vector<128x256xbf16>
    %cst_35 = arith.constant dense<0.000000e+00> : vector<126x256xf32>
    %40 = tpu.matmul %37, %39, %cst_35 {dimension_numbers = #tpu.dot_dimension_numbers<[1], [0], [0], [1], [0, 0, 1, 1], [], []>} : vector<126x128xbf16>, vector<128x256xbf16>, vector<126x256xf32> -> vector<126x256xf32>
    %41 = vector.broadcast %35 : vector<1x256xf32> to vector<126x256xf32>
    %42 = arith.addf %41, %40 : vector<126x256xf32>
    %c1_36 = arith.constant 1 : index
    %c0_37 = arith.constant 0 : index
    %43 = vector.load %arg13[%c1_36, %c0_37] : memref<128x128xf32, #tpu.memory_space<vmem>>, vector<126x128xf32>
    %44 = arith.truncf %43 : vector<126x128xf32> to vector<126x128xbf16>
    %c1_38 = arith.constant 1 : index
    %c0_39 = arith.constant 0 : index
    %c0_40 = arith.constant 0 : index
    %45 = vector.load %arg6[%c1_38, %c0_39, %c0_40] : memref<3x128x256xbf16, #tpu.memory_space<vmem>>, vector<1x128x256xbf16>
    %46 = vector.shape_cast %45 : vector<1x128x256xbf16> to vector<128x256xbf16>
    %cst_41 = arith.constant dense<0.000000e+00> : vector<126x256xf32>
    %47 = tpu.matmul %44, %46, %cst_41 {dimension_numbers = #tpu.dot_dimension_numbers<[1], [0], [0], [1], [0, 0, 1, 1], [], []>} : vector<126x128xbf16>, vector<128x256xbf16>, vector<126x256xf32> -> vector<126x256xf32>
    %48 = arith.addf %42, %47 : vector<126x256xf32>
    %c2_42 = arith.constant 2 : index
    %c0_43 = arith.constant 0 : index
    %49 = vector.load %arg13[%c2_42, %c0_43] : memref<128x128xf32, #tpu.memory_space<vmem>>, vector<126x128xf32>
    %50 = arith.truncf %49 : vector<126x128xf32> to vector<126x128xbf16>
    %c2_44 = arith.constant 2 : index
    %c0_45 = arith.constant 0 : index
    %c0_46 = arith.constant 0 : index
    %51 = vector.load %arg6[%c2_44, %c0_45, %c0_46] : memref<3x128x256xbf16, #tpu.memory_space<vmem>>, vector<1x128x256xbf16>
    %52 = vector.shape_cast %51 : vector<1x128x256xbf16> to vector<128x256xbf16>
    %cst_47 = arith.constant dense<0.000000e+00> : vector<126x256xf32>
    %53 = tpu.matmul %50, %52, %cst_47 {dimension_numbers = #tpu.dot_dimension_numbers<[1], [0], [0], [1], [0, 0, 1, 1], [], []>} : vector<126x128xbf16>, vector<128x256xbf16>, vector<126x256xf32> -> vector<126x256xf32>
    %54 = arith.addf %48, %53 : vector<126x256xf32>
    %cst_48 = arith.constant 0.000000e+00 : f32
    %55 = vector.broadcast %cst_48 : f32 to vector<126x256xf32>
    %56 = arith.maximumf %54, %55 : vector<126x256xf32>
    %57 = vector.extract_strided_slice %56 {offsets = [0, 0], sizes = [126, 128], strides = [1, 1]} : vector<126x256xf32> to vector<126x128xf32>
    %58 = vector.extract_strided_slice %56 {offsets = [0, 128], sizes = [126, 128], strides = [1, 1]} : vector<126x256xf32> to vector<126x128xf32>
    %59 = arith.maximumf %57, %58 : vector<126x128xf32>
    %60 = arith.truncf %59 : vector<126x128xf32> to vector<126x128xbf16>
    %c0_49 = arith.constant 0 : index
    %c0_50 = arith.constant 0 : index
    %61 = vector.load %arg8[%c0_49, %c0_50] : memref<56x126xbf16, #tpu.memory_space<vmem>>, vector<56x126xbf16>
    %cst_51 = arith.constant dense<0.000000e+00> : vector<56x128xf32>
    %62 = tpu.matmul %61, %60, %cst_51 {dimension_numbers = #tpu.dot_dimension_numbers<[1], [0], [0], [1], [0, 0, 1, 1], [], []>} : vector<56x126xbf16>, vector<126x128xbf16>, vector<56x128xf32> -> vector<56x128xf32>
    %c0_52 = arith.constant 0 : index
    %c0_53 = arith.constant 0 : index
    %63 = vector.load %arg9[%c0_52, %c0_53] : memref<56x126xbf16, #tpu.memory_space<vmem>>, vector<56x126xbf16>
    %cst_54 = arith.constant dense<0.000000e+00> : vector<56x128xf32>
    %64 = tpu.matmul %63, %60, %cst_54 {dimension_numbers = #tpu.dot_dimension_numbers<[1], [0], [0], [1], [0, 0, 1, 1], [], []>} : vector<56x126xbf16>, vector<126x128xbf16>, vector<56x128xf32> -> vector<56x128xf32>
    %65 = arith.maximumf %62, %64 : vector<56x128xf32>
    %c0_55 = arith.constant 0 : index
    %c0_56 = arith.constant 0 : index
    %66 = vector.load %arg11[%c0_55, %c0_56] : memref<1x128xf32, #tpu.memory_space<vmem>>, vector<1x128xf32>
    %67 = vector.extract_strided_slice %65 {offsets = [0, 0], sizes = [8, 128], strides = [1, 1]} : vector<56x128xf32> to vector<8x128xf32>
    %68 = arith.truncf %67 : vector<8x128xf32> to vector<8x128xbf16>
    %c0_57 = arith.constant 0 : index
    %c0_58 = arith.constant 0 : index
    %c0_59 = arith.constant 0 : index
    %69 = vector.load %arg10[%c0_57, %c0_58, %c0_59] : memref<7x128x128xbf16, #tpu.memory_space<vmem>>, vector<1x128x128xbf16>
    %70 = vector.shape_cast %69 : vector<1x128x128xbf16> to vector<128x128xbf16>
    %cst_60 = arith.constant dense<0.000000e+00> : vector<8x128xf32>
    %71 = tpu.matmul %68, %70, %cst_60 {dimension_numbers = #tpu.dot_dimension_numbers<[1], [0], [0], [1], [0, 0, 1, 1], [], []>} : vector<8x128xbf16>, vector<128x128xbf16>, vector<8x128xf32> -> vector<8x128xf32>
    %72 = vector.broadcast %66 : vector<1x128xf32> to vector<8x128xf32>
    %73 = arith.addf %72, %71 : vector<8x128xf32>
    %74 = vector.extract_strided_slice %65 {offsets = [8, 0], sizes = [8, 128], strides = [1, 1]} : vector<56x128xf32> to vector<8x128xf32>
    %75 = arith.truncf %74 : vector<8x128xf32> to vector<8x128xbf16>
    %c1_61 = arith.constant 1 : index
    %c0_62 = arith.constant 0 : index
    %c0_63 = arith.constant 0 : index
    %76 = vector.load %arg10[%c1_61, %c0_62, %c0_63] : memref<7x128x128xbf16, #tpu.memory_space<vmem>>, vector<1x128x128xbf16>
    %77 = vector.shape_cast %76 : vector<1x128x128xbf16> to vector<128x128xbf16>
    %cst_64 = arith.constant dense<0.000000e+00> : vector<8x128xf32>
    %78 = tpu.matmul %75, %77, %cst_64 {dimension_numbers = #tpu.dot_dimension_numbers<[1], [0], [0], [1], [0, 0, 1, 1], [], []>} : vector<8x128xbf16>, vector<128x128xbf16>, vector<8x128xf32> -> vector<8x128xf32>
    %79 = arith.addf %73, %78 : vector<8x128xf32>
    %80 = vector.extract_strided_slice %65 {offsets = [16, 0], sizes = [8, 128], strides = [1, 1]} : vector<56x128xf32> to vector<8x128xf32>
    %81 = arith.truncf %80 : vector<8x128xf32> to vector<8x128xbf16>
    %c2_65 = arith.constant 2 : index
    %c0_66 = arith.constant 0 : index
    %c0_67 = arith.constant 0 : index
    %82 = vector.load %arg10[%c2_65, %c0_66, %c0_67] : memref<7x128x128xbf16, #tpu.memory_space<vmem>>, vector<1x128x128xbf16>
    %83 = vector.shape_cast %82 : vector<1x128x128xbf16> to vector<128x128xbf16>
    %cst_68 = arith.constant dense<0.000000e+00> : vector<8x128xf32>
    %84 = tpu.matmul %81, %83, %cst_68 {dimension_numbers = #tpu.dot_dimension_numbers<[1], [0], [0], [1], [0, 0, 1, 1], [], []>} : vector<8x128xbf16>, vector<128x128xbf16>, vector<8x128xf32> -> vector<8x128xf32>
    %85 = arith.addf %79, %84 : vector<8x128xf32>
    %86 = vector.extract_strided_slice %65 {offsets = [24, 0], sizes = [8, 128], strides = [1, 1]} : vector<56x128xf32> to vector<8x128xf32>
    %87 = arith.truncf %86 : vector<8x128xf32> to vector<8x128xbf16>
    %c3 = arith.constant 3 : index
    %c0_69 = arith.constant 0 : index
    %c0_70 = arith.constant 0 : index
    %88 = vector.load %arg10[%c3, %c0_69, %c0_70] : memref<7x128x128xbf16, #tpu.memory_space<vmem>>, vector<1x128x128xbf16>
    %89 = vector.shape_cast %88 : vector<1x128x128xbf16> to vector<128x128xbf16>
    %cst_71 = arith.constant dense<0.000000e+00> : vector<8x128xf32>
    %90 = tpu.matmul %87, %89, %cst_71 {dimension_numbers = #tpu.dot_dimension_numbers<[1], [0], [0], [1], [0, 0, 1, 1], [], []>} : vector<8x128xbf16>, vector<128x128xbf16>, vector<8x128xf32> -> vector<8x128xf32>
    %91 = arith.addf %85, %90 : vector<8x128xf32>
    %92 = vector.extract_strided_slice %65 {offsets = [32, 0], sizes = [8, 128], strides = [1, 1]} : vector<56x128xf32> to vector<8x128xf32>
    %93 = arith.truncf %92 : vector<8x128xf32> to vector<8x128xbf16>
    %c4 = arith.constant 4 : index
    %c0_72 = arith.constant 0 : index
    %c0_73 = arith.constant 0 : index
    %94 = vector.load %arg10[%c4, %c0_72, %c0_73] : memref<7x128x128xbf16, #tpu.memory_space<vmem>>, vector<1x128x128xbf16>
    %95 = vector.shape_cast %94 : vector<1x128x128xbf16> to vector<128x128xbf16>
    %cst_74 = arith.constant dense<0.000000e+00> : vector<8x128xf32>
    %96 = tpu.matmul %93, %95, %cst_74 {dimension_numbers = #tpu.dot_dimension_numbers<[1], [0], [0], [1], [0, 0, 1, 1], [], []>} : vector<8x128xbf16>, vector<128x128xbf16>, vector<8x128xf32> -> vector<8x128xf32>
    %97 = arith.addf %91, %96 : vector<8x128xf32>
    %98 = vector.extract_strided_slice %65 {offsets = [40, 0], sizes = [8, 128], strides = [1, 1]} : vector<56x128xf32> to vector<8x128xf32>
    %99 = arith.truncf %98 : vector<8x128xf32> to vector<8x128xbf16>
    %c5 = arith.constant 5 : index
    %c0_75 = arith.constant 0 : index
    %c0_76 = arith.constant 0 : index
    %100 = vector.load %arg10[%c5, %c0_75, %c0_76] : memref<7x128x128xbf16, #tpu.memory_space<vmem>>, vector<1x128x128xbf16>
    %101 = vector.shape_cast %100 : vector<1x128x128xbf16> to vector<128x128xbf16>
    %cst_77 = arith.constant dense<0.000000e+00> : vector<8x128xf32>
    %102 = tpu.matmul %99, %101, %cst_77 {dimension_numbers = #tpu.dot_dimension_numbers<[1], [0], [0], [1], [0, 0, 1, 1], [], []>} : vector<8x128xbf16>, vector<128x128xbf16>, vector<8x128xf32> -> vector<8x128xf32>
    %103 = arith.addf %97, %102 : vector<8x128xf32>
    %104 = vector.extract_strided_slice %65 {offsets = [48, 0], sizes = [8, 128], strides = [1, 1]} : vector<56x128xf32> to vector<8x128xf32>
    %105 = arith.truncf %104 : vector<8x128xf32> to vector<8x128xbf16>
    %c6 = arith.constant 6 : index
    %c0_78 = arith.constant 0 : index
    %c0_79 = arith.constant 0 : index
    %106 = vector.load %arg10[%c6, %c0_78, %c0_79] : memref<7x128x128xbf16, #tpu.memory_space<vmem>>, vector<1x128x128xbf16>
    %107 = vector.shape_cast %106 : vector<1x128x128xbf16> to vector<128x128xbf16>
    %cst_80 = arith.constant dense<0.000000e+00> : vector<8x128xf32>
    %108 = tpu.matmul %105, %107, %cst_80 {dimension_numbers = #tpu.dot_dimension_numbers<[1], [0], [0], [1], [0, 0, 1, 1], [], []>} : vector<8x128xbf16>, vector<128x128xbf16>, vector<8x128xf32> -> vector<8x128xf32>
    %109 = arith.addf %103, %108 : vector<8x128xf32>
    %c0_81 = arith.constant 0 : index
    %c0_82 = arith.constant 0 : index
    %110 = vector.load %arg12[%c0_81, %c0_82] : memref<8x128xf32, #tpu.memory_space<vmem>>, vector<8x128xf32>
    tpu.vector_store %arg12[%c0_81, %c0_82], %109 {strides = array<i32>} : memref<8x128xf32, #tpu.memory_space<vmem>>, vector<8x128xf32>,
    return
  }
  func.func @transform_0(%arg0: i32) -> (i32, i32, i32) {
    %c0_i32 = arith.constant 0 : i32
    %c0_i32_0 = arith.constant 0 : i32
    %c0_i32_1 = arith.constant 0 : i32
    return %arg0, %c0_i32, %c0_i32_0 : i32, i32, i32
  }
  func.func @transform_1(%arg0: i32) -> (i32, i32, i32) {
    %c0_i32 = arith.constant 0 : i32
    %c0_i32_0 = arith.constant 0 : i32
    %c0_i32_1 = arith.constant 0 : i32
    %c0_i32_2 = arith.constant 0 : i32
    return %c0_i32, %c0_i32_0, %c0_i32_1 : i32, i32, i32
  }
  func.func @transform_2(%arg0: i32) -> (i32, i32) {
    %c0_i32 = arith.constant 0 : i32
    %c0_i32_0 = arith.constant 0 : i32
    %c0_i32_1 = arith.constant 0 : i32
    return %c0_i32, %c0_i32_0 : i32, i32
  }
  func.func @transform_3(%arg0: i32) -> (i32, i32) {
    %c0_i32 = arith.constant 0 : i32
    %c0_i32_0 = arith.constant 0 : i32
    %c0_i32_1 = arith.constant 0 : i32
    return %c0_i32, %c0_i32_0 : i32, i32
  }
  func.func @transform_4(%arg0: i32) -> (i32, i32) {
    %c0_i32 = arith.constant 0 : i32
    %c0_i32_0 = arith.constant 0 : i32
    %c0_i32_1 = arith.constant 0 : i32
    return %c0_i32, %c0_i32_0 : i32, i32
  }
  func.func @transform_5(%arg0: i32) -> (i32, i32, i32) {
    %c0_i32 = arith.constant 0 : i32
    %c0_i32_0 = arith.constant 0 : i32
    %c0_i32_1 = arith.constant 0 : i32
    %c0_i32_2 = arith.constant 0 : i32
    return %c0_i32, %c0_i32_0, %c0_i32_1 : i32, i32, i32
  }
  func.func @transform_6(%arg0: i32) -> (i32, i32) {
    %c0_i32 = arith.constant 0 : i32
    %c0_i32_0 = arith.constant 0 : i32
    %c0_i32_1 = arith.constant 0 : i32
    return %c0_i32, %c0_i32_0 : i32, i32
  }
  func.func @transform_7(%arg0: i32) -> (i32, i32) {
    %c0_i32 = arith.constant 0 : i32
    %c0_i32_0 = arith.constant 0 : i32
    %c0_i32_1 = arith.constant 0 : i32
    return %c0_i32, %c0_i32_0 : i32, i32
  }
  func.func @transform_8(%arg0: i32) -> (i32, i32) {
    %c0_i32 = arith.constant 0 : i32
    %c0_i32_0 = arith.constant 0 : i32
    %c0_i32_1 = arith.constant 0 : i32
    return %c0_i32, %c0_i32_0 : i32, i32
  }
  func.func @transform_9(%arg0: i32) -> (i32, i32, i32) {
    %c0_i32 = arith.constant 0 : i32
    %c0_i32_0 = arith.constant 0 : i32
    %c0_i32_1 = arith.constant 0 : i32
    %c0_i32_2 = arith.constant 0 : i32
    return %c0_i32, %c0_i32_0, %c0_i32_1 : i32, i32, i32
  }
  func.func @transform_10(%arg0: i32) -> (i32, i32) {
    %c0_i32 = arith.constant 0 : i32
    %c0_i32_0 = arith.constant 0 : i32
    %c0_i32_1 = arith.constant 0 : i32
    return %c0_i32, %c0_i32_0 : i32, i32
  }
  func.func @transform_11(%arg0: i32) -> (i32, i32) {
    %c0_i32 = arith.constant 0 : i32
    %c0_i32_0 = arith.constant 0 : i32
    return %arg0, %c0_i32 : i32, i32
  }
}

</mosaic_0001>

<llo_original>
// kernel: cnn_forward.1
$region0: #{cnn_forward.1}
  #allocation0 [shape = 'u32[]', space=smem, size = 0x4, offset = 0x4, fixed_abs, tag = 'smem constant byte address 0x4 - core index']
  #allocation1 [shape = 'u32[144,128]{1,0:T(1,128)}', space=vmem, size = 0x12000, scoped, tag = 'internal scratch']
  #allocation2 [shape = 'f32[128,128]{1,0:T(8,128)}', space=vmem, size = 0x10000, scoped, tag = 'scratch operand']
  %s0 = inlined_call_operand.vmem [shape: f32[1,240,28], index: 0, kind: input, shape index: {}]
  %s1 = inlined_call_operand.vmem [shape: bf16[3,28,256], index: 1, kind: input, shape index: {}]
  %s2 = inlined_call_operand.vmem [shape: f32[1,256], index: 2, kind: input, shape index: {}]
  %s3 = inlined_call_operand.vmem [shape: bf16[128,238], index: 3, kind: input, shape index: {}]
  %s4 = inlined_call_operand.vmem [shape: bf16[128,238], index: 4, kind: input, shape index: {}]
  %s5 = inlined_call_operand.vmem [shape: bf16[3,128,256], index: 5, kind: input, shape index: {}]
  %s6 = inlined_call_operand.vmem [shape: f32[1,256], index: 6, kind: input, shape index: {}]
  %s7 = inlined_call_operand.vmem [shape: bf16[56,126], index: 7, kind: input, shape index: {}]
  %s8 = inlined_call_operand.vmem [shape: bf16[56,126], index: 8, kind: input, shape index: {}]
  %s9 = inlined_call_operand.vmem [shape: bf16[7,128,128], index: 9, kind: input, shape index: {}]
  %s10 = inlined_call_operand.vmem [shape: f32[1,128], index: 10, kind: input, shape index: {}]
  %s11 = inlined_call_operand.vmem [shape: f32[8,128], index: 11, kind: output, shape index: {}]
  %s12 = sld [smem:[#allocation0]]
  $region54: #{cnn_forward.1} parent=0
    _
  %s14 = ssub.s32 1, %s12
  %s15 = scalar_select 0, %s14, %s12
  // Predicated region
  $region2: #{cnn_forward.1} parent=0 // pred_check
    _
  $region3: #{cnn_forward.1} parent=0 // pred_check_branch
    %17 = sbr.rel (0) target = $region5
  $region4: #{cnn_forward.1} parent=0 // pred_region
    _
  $region5: #{cnn_forward.1} parent=0 // pred_fallthru
    _
  // Predicated region
  $region6: #{cnn_forward.1} parent=0 // pred_check
    _
  $region7: #{cnn_forward.1} parent=0 // pred_check_branch
    %19 = sbr.rel (0) target = $region9
  $region8: #{cnn_forward.1} parent=0 // pred_region
    _
  $region9: #{cnn_forward.1} parent=0 // pred_fallthru
    _
  // Predicated region
  $region10: #{cnn_forward.1} parent=0 // pred_check
    _
  $region11: #{cnn_forward.1} parent=0 // pred_check_branch
    %21 = sbr.rel (0) target = $region13
  $region12: #{cnn_forward.1} parent=0 // pred_region
    _
  $region13: #{cnn_forward.1} parent=0 // pred_fallthru
    _
  // Predicated region
  $region14: #{cnn_forward.1} parent=0 // pred_check
    _
  $region15: #{cnn_forward.1} parent=0 // pred_check_branch
    %23 = sbr.rel (0) target = $region17
  $region16: #{cnn_forward.1} parent=0 // pred_region
    _
  $region17: #{cnn_forward.1} parent=0 // pred_fallthru
    _
  // Predicated region
  $region18: #{cnn_forward.1} parent=0 // pred_check
    _
  $region19: #{cnn_forward.1} parent=0 // pred_check_branch
    %25 = sbr.rel (0) target = $region21
  $region20: #{cnn_forward.1} parent=0 // pred_region
    _
  $region21: #{cnn_forward.1} parent=0 // pred_fallthru
    _
  // Predicated region
  $region22: #{cnn_forward.1} parent=0 // pred_check
    _
  $region23: #{cnn_forward.1} parent=0 // pred_check_branch
    %27 = sbr.rel (0) target = $region25
  $region24: #{cnn_forward.1} parent=0 // pred_region
    _
  $region25: #{cnn_forward.1} parent=0 // pred_fallthru
    _
  // Predicated region
  $region26: #{cnn_forward.1} parent=0 // pred_check
    _
  $region27: #{cnn_forward.1} parent=0 // pred_check_branch
    %29 = sbr.rel (0) target = $region29
  $region28: #{cnn_forward.1} parent=0 // pred_region
    _
  $region29: #{cnn_forward.1} parent=0 // pred_fallthru
    _
  // Predicated region
  $region30: #{cnn_forward.1} parent=0 // pred_check
    _
  $region31: #{cnn_forward.1} parent=0 // pred_check_branch
    %31 = sbr.rel (0) target = $region33
  $region32: #{cnn_forward.1} parent=0 // pred_region
    _
  $region33: #{cnn_forward.1} parent=0 // pred_fallthru
    _
  // Predicated region
  $region34: #{cnn_forward.1} parent=0 // pred_check
    _
  $region35: #{cnn_forward.1} parent=0 // pred_check_branch
    %33 = sbr.rel (0) target = $region37
  $region36: #{cnn_forward.1} parent=0 // pred_region
    _
  $region37: #{cnn_forward.1} parent=0 // pred_fallthru
    _
  // Predicated region
  $region38: #{cnn_forward.1} parent=0 // pred_check
    _
  $region39: #{cnn_forward.1} parent=0 // pred_check_branch
    %35 = sbr.rel (0) target = $region41
  $region40: #{cnn_forward.1} parent=0 // pred_region
    _
  $region41: #{cnn_forward.1} parent=0 // pred_fallthru
    _
  // Predicated region
  $region42: #{cnn_forward.1} parent=0 // pred_check
    _
  $region43: #{cnn_forward.1} parent=0 // pred_check_branch
    %37 = sbr.rel (0) target = $region45
  $region44: #{cnn_forward.1} parent=0 // pred_region
    _
  $region45: #{cnn_forward.1} parent=0 // pred_fallthru
    _
  %v39 = vld [vmem:[%s2] sm:$0x3]
  %v40 = vld [vmem:[%s0] sm:$0xff]
  %v41 = vld [vmem:[%s0 + $0x8] sm:$0xff]
  %v42 = vld [vmem:[%s0 + $0x10] sm:$0xff]
  %v43 = vld [vmem:[%s0 + $0x18] sm:$0xff]
  %v44 = vld [vmem:[%s0 + $0x20] sm:$0xff]
  %v45 = vld [vmem:[%s0 + $0x28] sm:$0xff]
  %v46 = vld [vmem:[%s0 + $0x30] sm:$0xff]
  %v47 = vld [vmem:[%s0 + $0x38] sm:$0xff]
  %v48 = vld [vmem:[%s0 + $0x40] sm:$0xff]
  %v49 = vld [vmem:[%s0 + $0x48] sm:$0xff]
  %v50 = vld [vmem:[%s0 + $0x50] sm:$0xff]
  %v51 = vld [vmem:[%s0 + $0x58] sm:$0xff]
  %v52 = vld [vmem:[%s0 + $0x60] sm:$0xff]
  %v53 = vld [vmem:[%s0 + $0x68] sm:$0xff]
  %v54 = vld [vmem:[%s0 + $0x70] sm:$0xff]
  %v55 = vld [vmem:[%s0 + $0x78] sm:$0xff]
  %v56 = vld [vmem:[%s0 + $0x80] sm:$0xff]
  %v57 = vld [vmem:[%s0 + $0x88] sm:$0xff]
  %v58 = vld [vmem:[%s0 + $0x90] sm:$0xff]
  %v59 = vld [vmem:[%s0 + $0x98] sm:$0xff]
  %v60 = vld [vmem:[%s0 + $0xa0] sm:$0xff]
  %v61 = vld [vmem:[%s0 + $0xa8] sm:$0xff]
  %v62 = vld [vmem:[%s0 + $0xb0] sm:$0xff]
  %v63 = vld [vmem:[%s0 + $0xb8] sm:$0xff]
  %v64 = vld [vmem:[%s0 + $0xc0] sm:$0xff]
  %v65 = vld [vmem:[%s0 + $0xc8] sm:$0xff]
  %v66 = vld [vmem:[%s0 + $0xd0] sm:$0xff]
  %v67 = vld [vmem:[%s0 + $0xd8] sm:$0xff]
  %v68 = vld [vmem:[%s0 + $0xe0] sm:$0xff]
  %v69 = vld [vmem:[%s0 + $0xe8] sm:$0x3f]
  %v70 = vpack.c.bf16 %v41, %v40
  %v71 = vpack.c.bf16 %v43, %v42
  %v72 = vpack.c.bf16 %v45, %v44
  %v73 = vpack.c.bf16 %v47, %v46
  %v74 = vpack.c.bf16 %v49, %v48
  %v75 = vpack.c.bf16 %v51, %v50
  %v76 = vpack.c.bf16 %v53, %v52
  %v77 = vpack.c.bf16 %v55, %v54
  %v78 = vpack.c.bf16 %v57, %v56
  %v79 = vpack.c.bf16 %v59, %v58
  %v80 = vpack.c.bf16 %v61, %v60
  %v81 = vpack.c.bf16 %v63, %v62
  %v82 = vpack.c.bf16 %v65, %v64
  %v83 = vpack.c.bf16 %v67, %v66
  %v84 = vpack.c.bf16 %v69, %v68
  %v85 = vld [vmem:[%s1] sm:$0xff]
  %v86 = vld [vmem:[%s1 + $0x8] sm:$0xff]
  %v87 = vld [vmem:[%s1 + $0x10] sm:$0xff]
  %v88 = vld [vmem:[%s1 + $0x18] sm:$0x33]
  %v93 = vunpack.c.l.b16 %v85
  %v94 = vunpack.c.h.b16 %v85
  %v95 = vunpack.c.l.b16 %v86
  %v96 = vunpack.c.h.b16 %v86
  %v97 = vunpack.c.l.b16 %v87
  %v98 = vunpack.c.h.b16 %v87
  %v99 = vunpack.c.l.b16 %v88
  %v100 = vunpack.c.h.b16 %v88
  %v101 = vpack.c.b16 %v95, %v93
  %v102 = vpack.c.b16 %v96, %v94
  %v103 = vpack.c.b16 %v99, %v97
  %v104 = vpack.c.b16 %v100, %v98
  %vm107 = vcmask 228352
  %v109 = vsel %vm107, %v70, 0
  %v112 = vsel %vm107, %v71, 0
  %v115 = vsel %vm107, %v72, 0
  %v118 = vsel %vm107, %v73, 0
  %v121 = vsel %vm107, %v74, 0
  %v124 = vsel %vm107, %v75, 0
  %v127 = vsel %vm107, %v76, 0
  %v130 = vsel %vm107, %v77, 0
  %v133 = vsel %vm107, %v78, 0
  %v136 = vsel %vm107, %v79, 0
  %v139 = vsel %vm107, %v80, 0
  %v142 = vsel %vm107, %v81, 0
  %v145 = vsel %vm107, %v82, 0
  %v148 = vsel %vm107, %v83, 0
  %v151 = vsel %vm107, %v84, 0
  %vm153 = vcmask 1045504
  %v155 = vsel %vm153, %v103, 0
  %v158 = vsel %vm153, %v104, 0
  %160 = vmatprep.subr.bf16.mxu0 %v102
  %161 = vmatpush1.bf16.msra.mxu0 %v101
  %162 = vmatprep.subr.bf16.mxu0 %v158
  %163 = vmatpush1.bf16.msra.mxu0 %v155
  %164 = vmatprep.subr.bf16.mxu0 0
  %165 = vmatpush1.bf16.msra.mxu0 0
  %166 = vmatprep.subr.bf16.mxu0 0
  %167 = vmatpush1.bf16.msra.mxu0 0
  %168 = vmatprep.subr.bf16.mxu0 0
  %169 = vmatpush1.bf16.msra.mxu0 0
  %170 = vmatprep.subr.bf16.mxu0 0
  %171 = vmatpush1.bf16.msra.mxu0 0
  %172 = vmatprep.subr.bf16.mxu0 0
  %173 = vmatpush1.bf16.msra.mxu0 0
  %174 = vmatprep.subr.bf16.mxu0 0
  %175 = vmatpush1.bf16.msra.mxu0 0
  %176 = vmatprep.subr.bf16.mxu0 0
  %177 = vmatpush1.bf16.msra.mxu0 0
  %178 = vmatprep.subr.bf16.mxu0 0
  %179 = vmatpush1.bf16.msra.mxu0 0
  %180 = vmatprep.subr.bf16.mxu0 0
  %181 = vmatpush1.bf16.msra.mxu0 0
  %182 = vmatprep.subr.bf16.mxu0 0
  %183 = vmatpush1.bf16.msra.mxu0 0
  %184 = vmatprep.subr.bf16.mxu0 0
  %185 = vmatpush1.bf16.msra.mxu0 0
  %186 = vmatprep.subr.bf16.mxu0 0
  %187 = vmatpush1.bf16.msra.mxu0 0
  %188 = vmatprep.subr.bf16.mxu0 0
  %189 = vmatpush1.bf16.msra.mxu0 0
  %190 = vmatprep.subr.bf16.mxu0 0
  %191 = vmatpush1.bf16.msra.mxu0 0
  %192 = vmatprep.mubr.bf16.mxu0 0
  %193 = vmatmul.mubr.bf16.gmra.mrb[0].mxu0 %v109
  %v194 = vpop.f32.mrb[0].mxu0
  %v195 = vadd.f32 0.0, %v194
  %v196 = vpop.f32.mrb[0].mxu0
  %v197 = vadd.f32 0.0, %v196
  %v198 = vpop.f32.mrb[0].mxu0
  %v199 = vadd.f32 0.0, %v198
  %v200 = vpop.f32.mrb[0].mxu0
  %v201 = vadd.f32 0.0, %v200
  %202 = vmatprep.mubr.bf16.mxu0 0
  %203 = vmatmul.mubr.bf16.gmra.mrb[0].mxu0 %v112
  %v204 = vpop.f32.mrb[0].mxu0
  %v205 = vadd.f32 0.0, %v204
  %v206 = vpop.f32.mrb[0].mxu0
  %v207 = vadd.f32 0.0, %v206
  %v208 = vpop.f32.mrb[0].mxu0
  %v209 = vadd.f32 0.0, %v208
  %v210 = vpop.f32.mrb[0].mxu0
  %v211 = vadd.f32 0.0, %v210
  %212 = vmatprep.mubr.bf16.mxu0 0
  %213 = vmatmul.mubr.bf16.gmra.mrb[0].mxu0 %v115
  %v214 = vpop.f32.mrb[0].mxu0
  %v215 = vadd.f32 0.0, %v214
  %v216 = vpop.f32.mrb[0].mxu0
  %v217 = vadd.f32 0.0, %v216
  %v218 = vpop.f32.mrb[0].mxu0
  %v219 = vadd.f32 0.0, %v218
  %v220 = vpop.f32.mrb[0].mxu0
  %v221 = vadd.f32 0.0, %v220
  %222 = vmatprep.mubr.bf16.mxu0 0
  %223 = vmatmul.mubr.bf16.gmra.mrb[0].mxu0 %v118
  %v224 = vpop.f32.mrb[0].mxu0
  %v225 = vadd.f32 0.0, %v224
  %v226 = vpop.f32.mrb[0].mxu0
  %v227 = vadd.f32 0.0, %v226
  %v228 = vpop.f32.mrb[0].mxu0
  %v229 = vadd.f32 0.0, %v228
  %v230 = vpop.f32.mrb[0].mxu0
  %v231 = vadd.f32 0.0, %v230
  %232 = vmatprep.mubr.bf16.mxu0 0
  %233 = vmatmul.mubr.bf16.gmra.mrb[0].mxu0 %v121
  %v234 = vpop.f32.mrb[0].mxu0
  %v235 = vadd.f32 0.0, %v234
  %v236 = vpop.f32.mrb[0].mxu0
  %v237 = vadd.f32 0.0, %v236
  %v238 = vpop.f32.mrb[0].mxu0
  %v239 = vadd.f32 0.0, %v238
  %v240 = vpop.f32.mrb[0].mxu0
  %v241 = vadd.f32 0.0, %v240
  %242 = vmatprep.mubr.bf16.mxu0 0
  %243 = vmatmul.mubr.bf16.gmra.mrb[0].mxu0 %v124
  %v244 = vpop.f32.mrb[0].mxu0
  %v245 = vadd.f32 0.0, %v244
  %v246 = vpop.f32.mrb[0].mxu0
  %v247 = vadd.f32 0.0, %v246
  %v248 = vpop.f32.mrb[0].mxu0
  %v249 = vadd.f32 0.0, %v248
  %v250 = vpop.f32.mrb[0].mxu0
  %v251 = vadd.f32 0.0, %v250
  %252 = vmatprep.mubr.bf16.mxu0 0
  %253 = vmatmul.mubr.bf16.gmra.mrb[0].mxu0 %v127
  %v254 = vpop.f32.mrb[0].mxu0
  %v255 = vadd.f32 0.0, %v254
  %v256 = vpop.f32.mrb[0].mxu0
  %v257 = vadd.f32 0.0, %v256
  %v258 = vpop.f32.mrb[0].mxu0
  %v259 = vadd.f32 0.0, %v258
  %v260 = vpop.f32.mrb[0].mxu0
  %v261 = vadd.f32 0.0, %v260
  %262 = vmatprep.mubr.bf16.mxu0 0
  %263 = vmatmul.mubr.bf16.gmra.mrb[0].mxu0 %v130
  %v264 = vpop.f32.mrb[0].mxu0
  %v265 = vadd.f32 0.0, %v264
  %v266 = vpop.f32.mrb[0].mxu0
  %v267 = vadd.f32 0.0, %v266
  %v268 = vpop.f32.mrb[0].mxu0
  %v269 = vadd.f32 0.0, %v268
  %v270 = vpop.f32.mrb[0].mxu0
  %v271 = vadd.f32 0.0, %v270
  %272 = vmatprep.mubr.bf16.mxu0 0
  %273 = vmatmul.mubr.bf16.gmra.mrb[0].mxu0 %v133
  %v274 = vpop.f32.mrb[0].mxu0
  %v275 = vadd.f32 0.0, %v274
  %v276 = vpop.f32.mrb[0].mxu0
  %v277 = vadd.f32 0.0, %v276
  %v278 = vpop.f32.mrb[0].mxu0
  %v279 = vadd.f32 0.0, %v278
  %v280 = vpop.f32.mrb[0].mxu0
  %v281 = vadd.f32 0.0, %v280
  %282 = vmatprep.mubr.bf16.mxu0 0
  %283 = vmatmul.mubr.bf16.gmra.mrb[0].mxu0 %v136
  %v284 = vpop.f32.mrb[0].mxu0
  %v285 = vadd.f32 0.0, %v284
  %v286 = vpop.f32.mrb[0].mxu0
  %v287 = vadd.f32 0.0, %v286
  %v288 = vpop.f32.mrb[0].mxu0
  %v289 = vadd.f32 0.0, %v288
  %v290 = vpop.f32.mrb[0].mxu0
  %v291 = vadd.f32 0.0, %v290
  %292 = vmatprep.mubr.bf16.mxu0 0
  %293 = vmatmul.mubr.bf16.gmra.mrb[0].mxu0 %v139
  %v294 = vpop.f32.mrb[0].mxu0
  %v295 = vadd.f32 0.0, %v294
  %v296 = vpop.f32.mrb[0].mxu0
  %v297 = vadd.f32 0.0, %v296
  %v298 = vpop.f32.mrb[0].mxu0
  %v299 = vadd.f32 0.0, %v298
  %v300 = vpop.f32.mrb[0].mxu0
  %v301 = vadd.f32 0.0, %v300
  %302 = vmatprep.mubr.bf16.mxu0 0
  %303 = vmatmul.mubr.bf16.gmra.mrb[0].mxu0 %v142
  %v304 = vpop.f32.mrb[0].mxu0
  %v305 = vadd.f32 0.0, %v304
  %v306 = vpop.f32.mrb[0].mxu0
  %v307 = vadd.f32 0.0, %v306
  %v308 = vpop.f32.mrb[0].mxu0
  %v309 = vadd.f32 0.0, %v308
  %v310 = vpop.f32.mrb[0].mxu0
  %v311 = vadd.f32 0.0, %v310
  %312 = vmatprep.mubr.bf16.mxu0 0
  %313 = vmatmul.mubr.bf16.gmra.mrb[0].mxu0 %v145
  %v314 = vpop.f32.mrb[0].mxu0
  %v315 = vadd.f32 0.0, %v314
  %v316 = vpop.f32.mrb[0].mxu0
  %v317 = vadd.f32 0.0, %v316
  %v318 = vpop.f32.mrb[0].mxu0
  %v319 = vadd.f32 0.0, %v318
  %v320 = vpop.f32.mrb[0].mxu0
  %v321 = vadd.f32 0.0, %v320
  %322 = vmatprep.mubr.bf16.mxu0 0
  %323 = vmatmul.mubr.bf16.gmra.mrb[0].mxu0 %v148
  %v324 = vpop.f32.mrb[0].mxu0
  %v325 = vadd.f32 0.0, %v324
  %v326 = vpop.f32.mrb[0].mxu0
  %v327 = vadd.f32 0.0, %v326
  %v328 = vpop.f32.mrb[0].mxu0
  %v329 = vadd.f32 0.0, %v328
  %v330 = vpop.f32.mrb[0].mxu0
  %v331 = vadd.f32 0.0, %v330
  %332 = vmatprep.mubr.bf16.mxu0 0
  %333 = vmatmul.mubr.bf16.gmra.mrb[0].mxu0 %v151
  %v334 = vpop.f32.mrb[0].mxu0
  %v335 = vadd.f32 0.0, %v334
  %v336 = vpop.f32.mrb[0].mxu0
  %v337 = vadd.f32 0.0, %v336
  %v338 = vpop.f32.mrb[0].mxu0
  %v339 = vadd.f32 0.0, %v338
  %v340 = vpop.f32.mrb[0].mxu0
  %v341 = vadd.f32 0.0, %v340
  %342 = vdwg.mxu0
  %v344 = vlaneseq
  %v345 = vshrl.u32 %v344, 7
  %v346 = vsub.s32 0, %v345
  %v347 = vrot.slane %v39, %v346
  %v348 = vlaneseq
  %v349 = vshrl.u32 %v348, 7
  %v350 = vsub.s32 1, %v349
  %v351 = vrot.slane %v39, %v350
  %v354 = vadd.f32 %v347, %v195
  %v355 = vadd.f32 %v351, %v197
  %v356 = vadd.f32 %v347, %v199
  %v357 = vadd.f32 %v351, %v201
  %v358 = vadd.f32 %v347, %v205
  %v359 = vadd.f32 %v351, %v207
  %v360 = vadd.f32 %v347, %v209
  %v361 = vadd.f32 %v351, %v211
  %v362 = vadd.f32 %v347, %v215
  %v363 = vadd.f32 %v351, %v217
  %v364 = vadd.f32 %v347, %v219
  %v365 = vadd.f32 %v351, %v221
  %v366 = vadd.f32 %v347, %v225
  %v367 = vadd.f32 %v351, %v227
  %v368 = vadd.f32 %v347, %v229
  %v369 = vadd.f32 %v351, %v231
  %v370 = vadd.f32 %v347, %v235
  %v371 = vadd.f32 %v351, %v237
  %v372 = vadd.f32 %v347, %v239
  %v373 = vadd.f32 %v351, %v241
  %v374 = vadd.f32 %v347, %v245
  %v375 = vadd.f32 %v351, %v247
  %v376 = vadd.f32 %v347, %v249
  %v377 = vadd.f32 %v351, %v251
  %v378 = vadd.f32 %v347, %v255
  %v379 = vadd.f32 %v351, %v257
  %v380 = vadd.f32 %v347, %v259
  %v381 = vadd.f32 %v351, %v261
  %v382 = vadd.f32 %v347, %v265
  %v383 = vadd.f32 %v351, %v267
  %v384 = vadd.f32 %v347, %v269
  %v385 = vadd.f32 %v351, %v271
  %v386 = vadd.f32 %v347, %v275
  %v387 = vadd.f32 %v351, %v277
  %v388 = vadd.f32 %v347, %v279
  %v389 = vadd.f32 %v351, %v281
  %v390 = vadd.f32 %v347, %v285
  %v391 = vadd.f32 %v351, %v287
  %v392 = vadd.f32 %v347, %v289
  %v393 = vadd.f32 %v351, %v291
  %v394 = vadd.f32 %v347, %v295
  %v395 = vadd.f32 %v351, %v297
  %v396 = vadd.f32 %v347, %v299
  %v397 = vadd.f32 %v351, %v301
  %v398 = vadd.f32 %v347, %v305
  %v399 = vadd.f32 %v351, %v307
  %v400 = vadd.f32 %v347, %v309
  %v401 = vadd.f32 %v351, %v311
  %v402 = vadd.f32 %v347, %v315
  %v403 = vadd.f32 %v351, %v317
  %v404 = vadd.f32 %v347, %v319
  %v405 = vadd.f32 %v351, %v321
  %v406 = vadd.f32 %v347, %v325
  %v407 = vadd.f32 %v351, %v327
  %v408 = vadd.f32 %v347, %v329
  %v409 = vadd.f32 %v351, %v331
  %v410 = vadd.f32 %v347, %v335
  %v411 = vadd.f32 %v351, %v337
  %v412 = vadd.f32 %v347, %v339
  %v413 = vadd.f32 %v351, %v341
  %v414 = vld [vmem:[%s0 + $0x1] sm:$0xff]
  %v415 = vld [vmem:[%s0 + $0x9] sm:$0xff]
  %v416 = vld [vmem:[%s0 + $0x11] sm:$0xff]
  %v417 = vld [vmem:[%s0 + $0x19] sm:$0xff]
  %v418 = vld [vmem:[%s0 + $0x21] sm:$0xff]
  %v419 = vld [vmem:[%s0 + $0x29] sm:$0xff]
  %v420 = vld [vmem:[%s0 + $0x31] sm:$0xff]
  %v421 = vld [vmem:[%s0 + $0x39] sm:$0xff]
  %v422 = vld [vmem:[%s0 + $0x41] sm:$0xff]
  %v423 = vld [vmem:[%s0 + $0x49] sm:$0xff]
  %v424 = vld [vmem:[%s0 + $0x51] sm:$0xff]
  %v425 = vld [vmem:[%s0 + $0x59] sm:$0xff]
  %v426 = vld [vmem:[%s0 + $0x61] sm:$0xff]
  %v427 = vld [vmem:[%s0 + $0x69] sm:$0xff]
  %v428 = vld [vmem:[%s0 + $0x71] sm:$0xff]
  %v429 = vld [vmem:[%s0 + $0x79] sm:$0xff]
  %v430 = vld [vmem:[%s0 + $0x81] sm:$0xff]
  %v431 = vld [vmem:[%s0 + $0x89] sm:$0xff]
  %v432 = vld [vmem:[%s0 + $0x91] sm:$0xff]
  %v433 = vld [vmem:[%s0 + $0x99] sm:$0xff]
  %v434 = vld [vmem:[%s0 + $0xa1] sm:$0xff]
  %v435 = vld [vmem:[%s0 + $0xa9] sm:$0xff]
  %v436 = vld [vmem:[%s0 + $0xb1] sm:$0xff]
  %v437 = vld [vmem:[%s0 + $0xb9] sm:$0xff]
  %v438 = vld [vmem:[%s0 + $0xc1] sm:$0xff]
  %v439 = vld [vmem:[%s0 + $0xc9] sm:$0xff]
  %v440 = vld [vmem:[%s0 + $0xd1] sm:$0xff]
  %v441 = vld [vmem:[%s0 + $0xd9] sm:$0xff]
  %v442 = vld [vmem:[%s0 + $0xe1] sm:$0xff]
  %v443 = vld [vmem:[%s0 + $0xe9] sm:$0x3f]
  %v444 = vpack.c.bf16 %v415, %v414
  %v445 = vpack.c.bf16 %v417, %v416
  %v446 = vpack.c.bf16 %v419, %v418
  %v447 = vpack.c.bf16 %v421, %v420
  %v448 = vpack.c.bf16 %v423, %v422
  %v449 = vpack.c.bf16 %v425, %v424
  %v450 = vpack.c.bf16 %v427, %v426
  %v451 = vpack.c.bf16 %v429, %v428
  %v452 = vpack.c.bf16 %v431, %v430
  %v453 = vpack.c.bf16 %v433, %v432
  %v454 = vpack.c.bf16 %v435, %v434
  %v455 = vpack.c.bf16 %v437, %v436
  %v456 = vpack.c.bf16 %v439, %v438
  %v457 = vpack.c.bf16 %v441, %v440
  %v458 = vpack.c.bf16 %v443, %v442
  %s459 = scalar_lea.vmem %s1, 32
  %v460 = vld [vmem:[%s459] sm:$0xff]
  %v461 = vld [vmem:[%s459 + $0x8] sm:$0xff]
  %v462 = vld [vmem:[%s459 + $0x10] sm:$0xff]
  %v463 = vld [vmem:[%s459 + $0x18] sm:$0x33]
  %v468 = vunpack.c.l.b16 %v460
  %v469 = vunpack.c.h.b16 %v460
  %v470 = vunpack.c.l.b16 %v461
  %v471 = vunpack.c.h.b16 %v461
  %v472 = vunpack.c.l.b16 %v462
  %v473 = vunpack.c.h.b16 %v462
  %v474 = vunpack.c.l.b16 %v463
  %v475 = vunpack.c.h.b16 %v463
  %v476 = vpack.c.b16 %v470, %v468
  %v477 = vpack.c.b16 %v471, %v469
  %v478 = vpack.c.b16 %v474, %v472
  %v479 = vpack.c.b16 %v475, %v473
  %v483 = vsel %vm107, %v444, 0
  %v486 = vsel %vm107, %v445, 0
  %v489 = vsel %vm107, %v446, 0
  %v492 = vsel %vm107, %v447, 0
  %v495 = vsel %vm107, %v448, 0
  %v498 = vsel %vm107, %v449, 0
  %v501 = vsel %vm107, %v450, 0
  %v504 = vsel %vm107, %v451, 0
  %v507 = vsel %vm107, %v452, 0
  %v510 = vsel %vm107, %v453, 0
  %v513 = vsel %vm107, %v454, 0
  %v516 = vsel %vm107, %v455, 0
  %v519 = vsel %vm107, %v456, 0
  %v522 = vsel %vm107, %v457, 0
  %v525 = vsel %vm107, %v458, 0
  %v528 = vsel %vm153, %v478, 0
  %v531 = vsel %vm153, %v479, 0
  %533 = vmatprep.subr.bf16.mxu0 %v477
  %534 = vmatpush1.bf16.msra.mxu0 %v476
  %535 = vmatprep.subr.bf16.mxu0 %v531
  %536 = vmatpush1.bf16.msra.mxu0 %v528
  %537 = vmatprep.subr.bf16.mxu0 0
  %538 = vmatpush1.bf16.msra.mxu0 0
  %539 = vmatprep.subr.bf16.mxu0 0
  %540 = vmatpush1.bf16.msra.mxu0 0
  %541 = vmatprep.subr.bf16.mxu0 0
  %542 = vmatpush1.bf16.msra.mxu0 0
  %543 = vmatprep.subr.bf16.mxu0 0
  %544 = vmatpush1.bf16.msra.mxu0 0
  %545 = vmatprep.subr.bf16.mxu0 0
  %546 = vmatpush1.bf16.msra.mxu0 0
  %547 = vmatprep.subr.bf16.mxu0 0
  %548 = vmatpush1.bf16.msra.mxu0 0
  %549 = vmatprep.subr.bf16.mxu0 0
  %550 = vmatpush1.bf16.msra.mxu0 0
  %551 = vmatprep.subr.bf16.mxu0 0
  %552 = vmatpush1.bf16.msra.mxu0 0
  %553 = vmatprep.subr.bf16.mxu0 0
  %554 = vmatpush1.bf16.msra.mxu0 0
  %555 = vmatprep.subr.bf16.mxu0 0
  %556 = vmatpush1.bf16.msra.mxu0 0
  %557 = vmatprep.subr.bf16.mxu0 0
  %558 = vmatpush1.bf16.msra.mxu0 0
  %559 = vmatprep.subr.bf16.mxu0 0
  %560 = vmatpush1.bf16.msra.mxu0 0
  %561 = vmatprep.subr.bf16.mxu0 0
  %562 = vmatpush1.bf16.msra.mxu0 0
  %563 = vmatprep.subr.bf16.mxu0 0
  %564 = vmatpush1.bf16.msra.mxu0 0
  %565 = vmatprep.mubr.bf16.mxu0 0
  %566 = vmatmul.mubr.bf16.gmra.mrb[0].mxu0 %v483
  %v567 = vpop.f32.mrb[0].mxu0
  %v568 = vadd.f32 0.0, %v567
  %v569 = vpop.f32.mrb[0].mxu0
  %v570 = vadd.f32 0.0, %v569
  %v571 = vpop.f32.mrb[0].mxu0
  %v572 = vadd.f32 0.0, %v571
  %v573 = vpop.f32.mrb[0].mxu0
  %v574 = vadd.f32 0.0, %v573
  %575 = vmatprep.mubr.bf16.mxu0 0
  %576 = vmatmul.mubr.bf16.gmra.mrb[0].mxu0 %v486
  %v577 = vpop.f32.mrb[0].mxu0
  %v578 = vadd.f32 0.0, %v577
  %v579 = vpop.f32.mrb[0].mxu0
  %v580 = vadd.f32 0.0, %v579
  %v581 = vpop.f32.mrb[0].mxu0
  %v582 = vadd.f32 0.0, %v581
  %v583 = vpop.f32.mrb[0].mxu0
  %v584 = vadd.f32 0.0, %v583
  %585 = vmatprep.mubr.bf16.mxu0 0
  %586 = vmatmul.mubr.bf16.gmra.mrb[0].mxu0 %v489
  %v587 = vpop.f32.mrb[0].mxu0
  %v588 = vadd.f32 0.0, %v587
  %v589 = vpop.f32.mrb[0].mxu0
  %v590 = vadd.f32 0.0, %v589
  %v591 = vpop.f32.mrb[0].mxu0
  %v592 = vadd.f32 0.0, %v591
  %v593 = vpop.f32.mrb[0].mxu0
  %v594 = vadd.f32 0.0, %v593
  %595 = vmatprep.mubr.bf16.mxu0 0
  %596 = vmatmul.mubr.bf16.gmra.mrb[0].mxu0 %v492
  %v597 = vpop.f32.mrb[0].mxu0
  %v598 = vadd.f32 0.0, %v597
  %v599 = vpop.f32.mrb[0].mxu0
  %v600 = vadd.f32 0.0, %v599
  %v601 = vpop.f32.mrb[0].mxu0
  %v602 = vadd.f32 0.0, %v601
  %v603 = vpop.f32.mrb[0].mxu0
  %v604 = vadd.f32 0.0, %v603
  %605 = vmatprep.mubr.bf16.mxu0 0
  %606 = vmatmul.mubr.bf16.gmra.mrb[0].mxu0 %v495
  %v607 = vpop.f32.mrb[0].mxu0
  %v608 = vadd.f32 0.0, %v607
  %v609 = vpop.f32.mrb[0].mxu0
  %v610 = vadd.f32 0.0, %v609
  %v611 = vpop.f32.mrb[0].mxu0
  %v612 = vadd.f32 0.0, %v611
  %v613 = vpop.f32.mrb[0].mxu0
  %v614 = vadd.f32 0.0, %v613
  %615 = vmatprep.mubr.bf16.mxu0 0
  %616 = vmatmul.mubr.bf16.gmra.mrb[0].mxu0 %v498
  %v617 = vpop.f32.mrb[0].mxu0
  %v618 = vadd.f32 0.0, %v617
  %v619 = vpop.f32.mrb[0].mxu0
  %v620 = vadd.f32 0.0, %v619
  %v621 = vpop.f32.mrb[0].mxu0
  %v622 = vadd.f32 0.0, %v621
  %v623 = vpop.f32.mrb[0].mxu0
  %v624 = vadd.f32 0.0, %v623
  %625 = vmatprep.mubr.bf16.mxu0 0
  %626 = vmatmul.mubr.bf16.gmra.mrb[0].mxu0 %v501
  %v627 = vpop.f32.mrb[0].mxu0
  %v628 = vadd.f32 0.0, %v627
  %v629 = vpop.f32.mrb[0].mxu0
  %v630 = vadd.f32 0.0, %v629
  %v631 = vpop.f32.mrb[0].mxu0
  %v632 = vadd.f32 0.0, %v631
  %v633 = vpop.f32.mrb[0].mxu0
  %v634 = vadd.f32 0.0, %v633
  %635 = vmatprep.mubr.bf16.mxu0 0
  %636 = vmatmul.mubr.bf16.gmra.mrb[0].mxu0 %v504
  %v637 = vpop.f32.mrb[0].mxu0
  %v638 = vadd.f32 0.0, %v637
  %v639 = vpop.f32.mrb[0].mxu0
  %v640 = vadd.f32 0.0, %v639
  %v641 = vpop.f32.mrb[0].mxu0
  %v642 = vadd.f32 0.0, %v641
  %v643 = vpop.f32.mrb[0].mxu0
  %v644 = vadd.f32 0.0, %v643
  %645 = vmatprep.mubr.bf16.mxu0 0
  %646 = vmatmul.mubr.bf16.gmra.mrb[0].mxu0 %v507
  %v647 = vpop.f32.mrb[0].mxu0
  %v648 = vadd.f32 0.0, %v647
  %v649 = vpop.f32.mrb[0].mxu0
  %v650 = vadd.f32 0.0, %v649
  %v651 = vpop.f32.mrb[0].mxu0
  %v652 = vadd.f32 0.0, %v651
  %v653 = vpop.f32.mrb[0].mxu0
  %v654 = vadd.f32 0.0, %v653
  %655 = vmatprep.mubr.bf16.mxu0 0
  %656 = vmatmul.mubr.bf16.gmra.mrb[0].mxu0 %v510
  %v657 = vpop.f32.mrb[0].mxu0
  %v658 = vadd.f32 0.0, %v657
  %v659 = vpop.f32.mrb[0].mxu0
  %v660 = vadd.f32 0.0, %v659
  %v661 = vpop.f32.mrb[0].mxu0
  %v662 = vadd.f32 0.0, %v661
  %v663 = vpop.f32.mrb[0].mxu0
  %v664 = vadd.f32 0.0, %v663
  %665 = vmatprep.mubr.bf16.mxu0 0
  %666 = vmatmul.mubr.bf16.gmra.mrb[0].mxu0 %v513
  %v667 = vpop.f32.mrb[0].mxu0
  %v668 = vadd.f32 0.0, %v667
  %v669 = vpop.f32.mrb[0].mxu0
  %v670 = vadd.f32 0.0, %v669
  %v671 = vpop.f32.mrb[0].mxu0
  %v672 = vadd.f32 0.0, %v671
  %v673 = vpop.f32.mrb[0].mxu0
  %v674 = vadd.f32 0.0, %v673
  %675 = vmatprep.mubr.bf16.mxu0 0
  %676 = vmatmul.mubr.bf16.gmra.mrb[0].mxu0 %v516
  %v677 = vpop.f32.mrb[0].mxu0
  %v678 = vadd.f32 0.0, %v677
  %v679 = vpop.f32.mrb[0].mxu0
  %v680 = vadd.f32 0.0, %v679
  %v681 = vpop.f32.mrb[0].mxu0
  %v682 = vadd.f32 0.0, %v681
  %v683 = vpop.f32.mrb[0].mxu0
  %v684 = vadd.f32 0.0, %v683
  %685 = vmatprep.mubr.bf16.mxu0 0
  %686 = vmatmul.mubr.bf16.gmra.mrb[0].mxu0 %v519
  %v687 = vpop.f32.mrb[0].mxu0
  %v688 = vadd.f32 0.0, %v687
  %v689 = vpop.f32.mrb[0].mxu0
  %v690 = vadd.f32 0.0, %v689
  %v691 = vpop.f32.mrb[0].mxu0
  %v692 = vadd.f32 0.0, %v691
  %v693 = vpop.f32.mrb[0].mxu0
  %v694 = vadd.f32 0.0, %v693
  %695 = vmatprep.mubr.bf16.mxu0 0
  %696 = vmatmul.mubr.bf16.gmra.mrb[0].mxu0 %v522
  %v697 = vpop.f32.mrb[0].mxu0
  %v698 = vadd.f32 0.0, %v697
  %v699 = vpop.f32.mrb[0].mxu0
  %v700 = vadd.f32 0.0, %v699
  %v701 = vpop.f32.mrb[0].mxu0
  %v702 = vadd.f32 0.0, %v701
  %v703 = vpop.f32.mrb[0].mxu0
  %v704 = vadd.f32 0.0, %v703
  %705 = vmatprep.mubr.bf16.mxu0 0
  %706 = vmatmul.mubr.bf16.gmra.mrb[0].mxu0 %v525
  %v707 = vpop.f32.mrb[0].mxu0
  %v708 = vadd.f32 0.0, %v707
  %v709 = vpop.f32.mrb[0].mxu0
  %v710 = vadd.f32 0.0, %v709
  %v711 = vpop.f32.mrb[0].mxu0
  %v712 = vadd.f32 0.0, %v711
  %v713 = vpop.f32.mrb[0].mxu0
  %v714 = vadd.f32 0.0, %v713
  %715 = vdwg.mxu0
  %v716 = vadd.f32 %v354, %v568
  %v717 = vadd.f32 %v355, %v570
  %v718 = vadd.f32 %v356, %v572
  %v719 = vadd.f32 %v357, %v574
  %v720 = vadd.f32 %v358, %v578
  %v721 = vadd.f32 %v359, %v580
  %v722 = vadd.f32 %v360, %v582
  %v723 = vadd.f32 %v361, %v584
  %v724 = vadd.f32 %v362, %v588
  %v725 = vadd.f32 %v363, %v590
  %v726 = vadd.f32 %v364, %v592
  %v727 = vadd.f32 %v365, %v594
  %v728 = vadd.f32 %v366, %v598
  %v729 = vadd.f32 %v367, %v600
  %v730 = vadd.f32 %v368, %v602
  %v731 = vadd.f32 %v369, %v604
  %v732 = vadd.f32 %v370, %v608
  %v733 = vadd.f32 %v371, %v610
  %v734 = vadd.f32 %v372, %v612
  %v735 = vadd.f32 %v373, %v614
  %v736 = vadd.f32 %v374, %v618
  %v737 = vadd.f32 %v375, %v620
  %v738 = vadd.f32 %v376, %v622
  %v739 = vadd.f32 %v377, %v624
  %v740 = vadd.f32 %v378, %v628
  %v741 = vadd.f32 %v379, %v630
  %v742 = vadd.f32 %v380, %v632
  %v743 = vadd.f32 %v381, %v634
  %v744 = vadd.f32 %v382, %v638
  %v745 = vadd.f32 %v383, %v640
  %v746 = vadd.f32 %v384, %v642
  %v747 = vadd.f32 %v385, %v644
  %v748 = vadd.f32 %v386, %v648
  %v749 = vadd.f32 %v387, %v650
  %v750 = vadd.f32 %v388, %v652
  %v751 = vadd.f32 %v389, %v654
  %v752 = vadd.f32 %v390, %v658
  %v753 = vadd.f32 %v391, %v660
  %v754 = vadd.f32 %v392, %v662
  %v755 = vadd.f32 %v393, %v664
  %v756 = vadd.f32 %v394, %v668
  %v757 = vadd.f32 %v395, %v670
  %v758 = vadd.f32 %v396, %v672
  %v759 = vadd.f32 %v397, %v674
  %v760 = vadd.f32 %v398, %v678
  %v761 = vadd.f32 %v399, %v680
  %v762 = vadd.f32 %v400, %v682
  %v763 = vadd.f32 %v401, %v684
  %v764 = vadd.f32 %v402, %v688
  %v765 = vadd.f32 %v403, %v690
  %v766 = vadd.f32 %v404, %v692
  %v767 = vadd.f32 %v405, %v694
  %v768 = vadd.f32 %v406, %v698
  %v769 = vadd.f32 %v407, %v700
  %v770 = vadd.f32 %v408, %v702
  %v771 = vadd.f32 %v409, %v704
  %v772 = vadd.f32 %v410, %v708
  %v773 = vadd.f32 %v411, %v710
  %v774 = vadd.f32 %v412, %v712
  %v775 = vadd.f32 %v413, %v714
  %v776 = vld [vmem:[%s0 + $0x2] sm:$0xff]
  %v777 = vld [vmem:[%s0 + $0xa] sm:$0xff]
  %v778 = vld [vmem:[%s0 + $0x12] sm:$0xff]
  %v779 = vld [vmem:[%s0 + $0x1a] sm:$0xff]
  %v780 = vld [vmem:[%s0 + $0x22] sm:$0xff]
  %v781 = vld [vmem:[%s0 + $0x2a] sm:$0xff]
  %v782 = vld [vmem:[%s0 + $0x32] sm:$0xff]
  %v783 = vld [vmem:[%s0 + $0x3a] sm:$0xff]
  %v784 = vld [vmem:[%s0 + $0x42] sm:$0xff]
  %v785 = vld [vmem:[%s0 + $0x4a] sm:$0xff]
  %v786 = vld [vmem:[%s0 + $0x52] sm:$0xff]
  %v787 = vld [vmem:[%s0 + $0x5a] sm:$0xff]
  %v788 = vld [vmem:[%s0 + $0x62] sm:$0xff]
  %v789 = vld [vmem:[%s0 + $0x6a] sm:$0xff]
  %v790 = vld [vmem:[%s0 + $0x72] sm:$0xff]
  %v791 = vld [vmem:[%s0 + $0x7a] sm:$0xff]
  %v792 = vld [vmem:[%s0 + $0x82] sm:$0xff]
  %v793 = vld [vmem:[%s0 + $0x8a] sm:$0xff]
  %v794 = vld [vmem:[%s0 + $0x92] sm:$0xff]
  %v795 = vld [vmem:[%s0 + $0x9a] sm:$0xff]
  %v796 = vld [vmem:[%s0 + $0xa2] sm:$0xff]
  %v797 = vld [vmem:[%s0 + $0xaa] sm:$0xff]
  %v798 = vld [vmem:[%s0 + $0xb2] sm:$0xff]
  %v799 = vld [vmem:[%s0 + $0xba] sm:$0xff]
  %v800 = vld [vmem:[%s0 + $0xc2] sm:$0xff]
  %v801 = vld [vmem:[%s0 + $0xca] sm:$0xff]
  %v802 = vld [vmem:[%s0 + $0xd2] sm:$0xff]
  %v803 = vld [vmem:[%s0 + $0xda] sm:$0xff]
  %v804 = vld [vmem:[%s0 + $0xe2] sm:$0xff]
  %v805 = vld [vmem:[%s0 + $0xea] sm:$0x3f]
  %v806 = vpack.c.bf16 %v777, %v776
  %v807 = vpack.c.bf16 %v779, %v778
  %v808 = vpack.c.bf16 %v781, %v780
  %v809 = vpack.c.bf16 %v783, %v782
  %v810 = vpack.c.bf16 %v785, %v784
  %v811 = vpack.c.bf16 %v787, %v786
  %v812 = vpack.c.bf16 %v789, %v788
  %v813 = vpack.c.bf16 %v791, %v790
  %v814 = vpack.c.bf16 %v793, %v792
  %v815 = vpack.c.bf16 %v795, %v794
  %v816 = vpack.c.bf16 %v797, %v796
  %v817 = vpack.c.bf16 %v799, %v798
  %v818 = vpack.c.bf16 %v801, %v800
  %v819 = vpack.c.bf16 %v803, %v802
  %v820 = vpack.c.bf16 %v805, %v804
  %s821 = scalar_lea.vmem %s1, 64
  %v822 = vld [vmem:[%s821] sm:$0xff]
  %v823 = vld [vmem:[%s821 + $0x8] sm:$0xff]
  %v824 = vld [vmem:[%s821 + $0x10] sm:$0xff]
  %v825 = vld [vmem:[%s821 + $0x18] sm:$0x33]
  %v830 = vunpack.c.l.b16 %v822
  %v831 = vunpack.c.h.b16 %v822
  %v832 = vunpack.c.l.b16 %v823
  %v833 = vunpack.c.h.b16 %v823
  %v834 = vunpack.c.l.b16 %v824
  %v835 = vunpack.c.h.b16 %v824
  %v836 = vunpack.c.l.b16 %v825
  %v837 = vunpack.c.h.b16 %v825
  %v838 = vpack.c.b16 %v832, %v830
  %v839 = vpack.c.b16 %v833, %v831
  %v840 = vpack.c.b16 %v836, %v834
  %v841 = vpack.c.b16 %v837, %v835
  %v845 = vsel %vm107, %v806, 0
  %v848 = vsel %vm107, %v807, 0
  %v851 = vsel %vm107, %v808, 0
  %v854 = vsel %vm107, %v809, 0
  %v857 = vsel %vm107, %v810, 0
  %v860 = vsel %vm107, %v811, 0
  %v863 = vsel %vm107, %v812, 0
  %v866 = vsel %vm107, %v813, 0
  %v869 = vsel %vm107, %v814, 0
  %v872 = vsel %vm107, %v815, 0
  %v875 = vsel %vm107, %v816, 0
  %v878 = vsel %vm107, %v817, 0
  %v881 = vsel %vm107, %v818, 0
  %v884 = vsel %vm107, %v819, 0
  %v887 = vsel %vm107, %v820, 0
  %v890 = vsel %vm153, %v840, 0
  %v893 = vsel %vm153, %v841, 0
  %895 = vmatprep.subr.bf16.mxu0 %v839
  %896 = vmatpush1.bf16.msra.mxu0 %v838
  %897 = vmatprep.subr.bf16.mxu0 %v893
  %898 = vmatpush1.bf16.msra.mxu0 %v890
  %899 = vmatprep.subr.bf16.mxu0 0
  %900 = vmatpush1.bf16.msra.mxu0 0
  %901 = vmatprep.subr.bf16.mxu0 0
  %902 = vmatpush1.bf16.msra.mxu0 0
  %903 = vmatprep.subr.bf16.mxu0 0
  %904 = vmatpush1.bf16.msra.mxu0 0
  %905 = vmatprep.subr.bf16.mxu0 0
  %906 = vmatpush1.bf16.msra.mxu0 0
  %907 = vmatprep.subr.bf16.mxu0 0
  %908 = vmatpush1.bf16.msra.mxu0 0
  %909 = vmatprep.subr.bf16.mxu0 0
  %910 = vmatpush1.bf16.msra.mxu0 0
  %911 = vmatprep.subr.bf16.mxu0 0
  %912 = vmatpush1.bf16.msra.mxu0 0
  %913 = vmatprep.subr.bf16.mxu0 0
  %914 = vmatpush1.bf16.msra.mxu0 0
  %915 = vmatprep.subr.bf16.mxu0 0
  %916 = vmatpush1.bf16.msra.mxu0 0
  %917 = vmatprep.subr.bf16.mxu0 0
  %918 = vmatpush1.bf16.msra.mxu0 0
  %919 = vmatprep.subr.bf16.mxu0 0
  %920 = vmatpush1.bf16.msra.mxu0 0
  %921 = vmatprep.subr.bf16.mxu0 0
  %922 = vmatpush1.bf16.msra.mxu0 0
  %923 = vmatprep.subr.bf16.mxu0 0
  %924 = vmatpush1.bf16.msra.mxu0 0
  %925 = vmatprep.subr.bf16.mxu0 0
  %926 = vmatpush1.bf16.msra.mxu0 0
  %927 = vmatprep.mubr.bf16.mxu0 0
  %928 = vmatmul.mubr.bf16.gmra.mrb[0].mxu0 %v845
  %v929 = vpop.f32.mrb[0].mxu0
  %v930 = vadd.f32 0.0, %v929
  %v931 = vpop.f32.mrb[0].mxu0
  %v932 = vadd.f32 0.0, %v931
  %v933 = vpop.f32.mrb[0].mxu0
  %v934 = vadd.f32 0.0, %v933
  %v935 = vpop.f32.mrb[0].mxu0
  %v936 = vadd.f32 0.0, %v935
  %937 = vmatprep.mubr.bf16.mxu0 0
  %938 = vmatmul.mubr.bf16.gmra.mrb[0].mxu0 %v848
  %v939 = vpop.f32.mrb[0].mxu0
  %v940 = vadd.f32 0.0, %v939
  %v941 = vpop.f32.mrb[0].mxu0
  %v942 = vadd.f32 0.0, %v941
  %v943 = vpop.f32.mrb[0].mxu0
  %v944 = vadd.f32 0.0, %v943
  %v945 = vpop.f32.mrb[0].mxu0
  %v946 = vadd.f32 0.0, %v945
  %947 = vmatprep.mubr.bf16.mxu0 0
  %948 = vmatmul.mubr.bf16.gmra.mrb[0].mxu0 %v851
  %v949 = vpop.f32.mrb[0].mxu0
  %v950 = vadd.f32 0.0, %v949
  %v951 = vpop.f32.mrb[0].mxu0
  %v952 = vadd.f32 0.0, %v951
  %v953 = vpop.f32.mrb[0].mxu0
  %v954 = vadd.f32 0.0, %v953
  %v955 = vpop.f32.mrb[0].mxu0
  %v956 = vadd.f32 0.0, %v955
  %957 = vmatprep.mubr.bf16.mxu0 0
  %958 = vmatmul.mubr.bf16.gmra.mrb[0].mxu0 %v854
  %v959 = vpop.f32.mrb[0].mxu0
  %v960 = vadd.f32 0.0, %v959
  %v961 = vpop.f32.mrb[0].mxu0
  %v962 = vadd.f32 0.0, %v961
  %v963 = vpop.f32.mrb[0].mxu0
  %v964 = vadd.f32 0.0, %v963
  %v965 = vpop.f32.mrb[0].mxu0
  %v966 = vadd.f32 0.0, %v965
  %967 = vmatprep.mubr.bf16.mxu0 0
  %968 = vmatmul.mubr.bf16.gmra.mrb[0].mxu0 %v857
  %v969 = vpop.f32.mrb[0].mxu0
  %v970 = vadd.f32 0.0, %v969
  %v971 = vpop.f32.mrb[0].mxu0
  %v972 = vadd.f32 0.0, %v971
  %v973 = vpop.f32.mrb[0].mxu0
  %v974 = vadd.f32 0.0, %v973
  %v975 = vpop.f32.mrb[0].mxu0
  %v976 = vadd.f32 0.0, %v975
  %977 = vmatprep.mubr.bf16.mxu0 0
  %978 = vmatmul.mubr.bf16.gmra.mrb[0].mxu0 %v860
  %v979 = vpop.f32.mrb[0].mxu0
  %v980 = vadd.f32 0.0, %v979
  %v981 = vpop.f32.mrb[0].mxu0
  %v982 = vadd.f32 0.0, %v981
  %v983 = vpop.f32.mrb[0].mxu0
  %v984 = vadd.f32 0.0, %v983
  %v985 = vpop.f32.mrb[0].mxu0
  %v986 = vadd.f32 0.0, %v985
  %987 = vmatprep.mubr.bf16.mxu0 0
  %988 = vmatmul.mubr.bf16.gmra.mrb[0].mxu0 %v863
  %v989 = vpop.f32.mrb[0].mxu0
  %v990 = vadd.f32 0.0, %v989
  %v991 = vpop.f32.mrb[0].mxu0
  %v992 = vadd.f32 0.0, %v991
  %v993 = vpop.f32.mrb[0].mxu0
  %v994 = vadd.f32 0.0, %v993
  %v995 = vpop.f32.mrb[0].mxu0
  %v996 = vadd.f32 0.0, %v995
  %997 = vmatprep.mubr.bf16.mxu0 0
  %998 = vmatmul.mubr.bf16.gmra.mrb[0].mxu0 %v866
  %v999 = vpop.f32.mrb[0].mxu0
  %v1000 = vadd.f32 0.0, %v999
  %v1001 = vpop.f32.mrb[0].mxu0
  %v1002 = vadd.f32 0.0, %v1001
  %v1003 = vpop.f32.mrb[0].mxu0
  %v1004 = vadd.f32 0.0, %v1003
  %v1005 = vpop.f32.mrb[0].mxu0
  %v1006 = vadd.f32 0.0, %v1005
  %1007 = vmatprep.mubr.bf16.mxu0 0
  %1008 = vmatmul.mubr.bf16.gmra.mrb[0].mxu0 %v869
  %v1009 = vpop.f32.mrb[0].mxu0
  %v1010 = vadd.f32 0.0, %v1009
  %v1011 = vpop.f32.mrb[0].mxu0
  %v1012 = vadd.f32 0.0, %v1011
  %v1013 = vpop.f32.mrb[0].mxu0
  %v1014 = vadd.f32 0.0, %v1013
  %v1015 = vpop.f32.mrb[0].mxu0
  %v1016 = vadd.f32 0.0, %v1015
  %1017 = vmatprep.mubr.bf16.mxu0 0
  %1018 = vmatmul.mubr.bf16.gmra.mrb[0].mxu0 %v872
  %v1019 = vpop.f32.mrb[0].mxu0
  %v1020 = vadd.f32 0.0, %v1019
  %v1021 = vpop.f32.mrb[0].mxu0
  %v1022 = vadd.f32 0.0, %v1021
  %v1023 = vpop.f32.mrb[0].mxu0
  %v1024 = vadd.f32 0.0, %v1023
  %v1025 = vpop.f32.mrb[0].mxu0
  %v1026 = vadd.f32 0.0, %v1025
  %1027 = vmatprep.mubr.bf16.mxu0 0
  %1028 = vmatmul.mubr.bf16.gmra.mrb[0].mxu0 %v875
  %v1029 = vpop.f32.mrb[0].mxu0
  %v1030 = vadd.f32 0.0, %v1029
  %v1031 = vpop.f32.mrb[0].mxu0
  %v1032 = vadd.f32 0.0, %v1031
  %v1033 = vpop.f32.mrb[0].mxu0
  %v1034 = vadd.f32 0.0, %v1033
  %v1035 = vpop.f32.mrb[0].mxu0
  %v1036 = vadd.f32 0.0, %v1035
  %1037 = vmatprep.mubr.bf16.mxu0 0
  %1038 = vmatmul.mubr.bf16.gmra.mrb[0].mxu0 %v878
  %v1039 = vpop.f32.mrb[0].mxu0
  %v1040 = vadd.f32 0.0, %v1039
  %v1041 = vpop.f32.mrb[0].mxu0
  %v1042 = vadd.f32 0.0, %v1041
  %v1043 = vpop.f32.mrb[0].mxu0
  %v1044 = vadd.f32 0.0, %v1043
  %v1045 = vpop.f32.mrb[0].mxu0
  %v1046 = vadd.f32 0.0, %v1045
  %1047 = vmatprep.mubr.bf16.mxu0 0
  %1048 = vmatmul.mubr.bf16.gmra.mrb[0].mxu0 %v881
  %v1049 = vpop.f32.mrb[0].mxu0
  %v1050 = vadd.f32 0.0, %v1049
  %v1051 = vpop.f32.mrb[0].mxu0
  %v1052 = vadd.f32 0.0, %v1051
  %v1053 = vpop.f32.mrb[0].mxu0
  %v1054 = vadd.f32 0.0, %v1053
  %v1055 = vpop.f32.mrb[0].mxu0
  %v1056 = vadd.f32 0.0, %v1055
  %1057 = vmatprep.mubr.bf16.mxu0 0
  %1058 = vmatmul.mubr.bf16.gmra.mrb[0].mxu0 %v884
  %v1059 = vpop.f32.mrb[0].mxu0
  %v1060 = vadd.f32 0.0, %v1059
  %v1061 = vpop.f32.mrb[0].mxu0
  %v1062 = vadd.f32 0.0, %v1061
  %v1063 = vpop.f32.mrb[0].mxu0
  %v1064 = vadd.f32 0.0, %v1063
  %v1065 = vpop.f32.mrb[0].mxu0
  %v1066 = vadd.f32 0.0, %v1065
  %1067 = vmatprep.mubr.bf16.mxu0 0
  %1068 = vmatmul.mubr.bf16.gmra.mrb[0].mxu0 %v887
  %v1069 = vpop.f32.mrb[0].mxu0
  %v1070 = vadd.f32 0.0, %v1069
  %v1071 = vpop.f32.mrb[0].mxu0
  %v1072 = vadd.f32 0.0, %v1071
  %v1073 = vpop.f32.mrb[0].mxu0
  %v1074 = vadd.f32 0.0, %v1073
  %v1075 = vpop.f32.mrb[0].mxu0
  %v1076 = vadd.f32 0.0, %v1075
  %1077 = vdwg.mxu0
  %v1078 = vadd.f32 %v716, %v930
  %v1079 = vadd.f32 %v717, %v932
  %v1080 = vadd.f32 %v718, %v934
  %v1081 = vadd.f32 %v719, %v936
  %v1082 = vadd.f32 %v720, %v940
  %v1083 = vadd.f32 %v721, %v942
  %v1084 = vadd.f32 %v722, %v944
  %v1085 = vadd.f32 %v723, %v946
  %v1086 = vadd.f32 %v724, %v950
  %v1087 = vadd.f32 %v725, %v952
  %v1088 = vadd.f32 %v726, %v954
  %v1089 = vadd.f32 %v727, %v956
  %v1090 = vadd.f32 %v728, %v960
  %v1091 = vadd.f32 %v729, %v962
  %v1092 = vadd.f32 %v730, %v964
  %v1093 = vadd.f32 %v731, %v966
  %v1094 = vadd.f32 %v732, %v970
  %v1095 = vadd.f32 %v733, %v972
  %v1096 = vadd.f32 %v734, %v974
  %v1097 = vadd.f32 %v735, %v976
  %v1098 = vadd.f32 %v736, %v980
  %v1099 = vadd.f32 %v737, %v982
  %v1100 = vadd.f32 %v738, %v984
  %v1101 = vadd.f32 %v739, %v986
  %v1102 = vadd.f32 %v740, %v990
  %v1103 = vadd.f32 %v741, %v992
  %v1104 = vadd.f32 %v742, %v994
  %v1105 = vadd.f32 %v743, %v996
  %v1106 = vadd.f32 %v744, %v1000
  %v1107 = vadd.f32 %v745, %v1002
  %v1108 = vadd.f32 %v746, %v1004
  %v1109 = vadd.f32 %v747, %v1006
  %v1110 = vadd.f32 %v748, %v1010
  %v1111 = vadd.f32 %v749, %v1012
  %v1112 = vadd.f32 %v750, %v1014
  %v1113 = vadd.f32 %v751, %v1016
  %v1114 = vadd.f32 %v752, %v1020
  %v1115 = vadd.f32 %v753, %v1022
  %v1116 = vadd.f32 %v754, %v1024
  %v1117 = vadd.f32 %v755, %v1026
  %v1118 = vadd.f32 %v756, %v1030
  %v1119 = vadd.f32 %v757, %v1032
  %v1120 = vadd.f32 %v758, %v1034
  %v1121 = vadd.f32 %v759, %v1036
  %v1122 = vadd.f32 %v760, %v1040
  %v1123 = vadd.f32 %v761, %v1042
  %v1124 = vadd.f32 %v762, %v1044
  %v1125 = vadd.f32 %v763, %v1046
  %v1126 = vadd.f32 %v764, %v1050
  %v1127 = vadd.f32 %v765, %v1052
  %v1128 = vadd.f32 %v766, %v1054
  %v1129 = vadd.f32 %v767, %v1056
  %v1130 = vadd.f32 %v768, %v1060
  %v1131 = vadd.f32 %v769, %v1062
  %v1132 = vadd.f32 %v770, %v1064
  %v1133 = vadd.f32 %v771, %v1066
  %v1134 = vadd.f32 %v772, %v1070
  %v1135 = vadd.f32 %v773, %v1072
  %v1136 = vadd.f32 %v774, %v1074
  %v1137 = vadd.f32 %v775, %v1076
  %v1138 = vmax.f32 %v1078, 0.0
  %v1139 = vmax.f32 %v1079, 0.0
  %v1140 = vmax.f32 %v1080, 0.0
  %v1141 = vmax.f32 %v1081, 0.0
  %v1142 = vmax.f32 %v1082, 0.0
  %v1143 = vmax.f32 %v1083, 0.0
  %v1144 = vmax.f32 %v1084, 0.0
  %v1145 = vmax.f32 %v1085, 0.0
  %v1146 = vmax.f32 %v1086, 0.0
  %v1147 = vmax.f32 %v1087, 0.0
  %v1148 = vmax.f32 %v1088, 0.0
  %v1149 = vmax.f32 %v1089, 0.0
  %v1150 = vmax.f32 %v1090, 0.0
  %v1151 = vmax.f32 %v1091, 0.0
  %v1152 = vmax.f32 %v1092, 0.0
  %v1153 = vmax.f32 %v1093, 0.0
  %v1154 = vmax.f32 %v1094, 0.0
  %v1155 = vmax.f32 %v1095, 0.0
  %v1156 = vmax.f32 %v1096, 0.0
  %v1157 = vmax.f32 %v1097, 0.0
  %v1158 = vmax.f32 %v1098, 0.0
  %v1159 = vmax.f32 %v1099, 0.0
  %v1160 = vmax.f32 %v1100, 0.0
  %v1161 = vmax.f32 %v1101, 0.0
  %v1162 = vmax.f32 %v1102, 0.0
  %v1163 = vmax.f32 %v1103, 0.0
  %v1164 = vmax.f32 %v1104, 0.0
  %v1165 = vmax.f32 %v1105, 0.0
  %v1166 = vmax.f32 %v1106, 0.0
  %v1167 = vmax.f32 %v1107, 0.0
  %v1168 = vmax.f32 %v1108, 0.0
  %v1169 = vmax.f32 %v1109, 0.0
  %v1170 = vmax.f32 %v1110, 0.0
  %v1171 = vmax.f32 %v1111, 0.0
  %v1172 = vmax.f32 %v1112, 0.0
  %v1173 = vmax.f32 %v1113, 0.0
  %v1174 = vmax.f32 %v1114, 0.0
  %v1175 = vmax.f32 %v1115, 0.0
  %v1176 = vmax.f32 %v1116, 0.0
  %v1177 = vmax.f32 %v1117, 0.0
  %v1178 = vmax.f32 %v1118, 0.0
  %v1179 = vmax.f32 %v1119, 0.0
  %v1180 = vmax.f32 %v1120, 0.0
  %v1181 = vmax.f32 %v1121, 0.0
  %v1182 = vmax.f32 %v1122, 0.0
  %v1183 = vmax.f32 %v1123, 0.0
  %v1184 = vmax.f32 %v1124, 0.0
  %v1185 = vmax.f32 %v1125, 0.0
  %v1186 = vmax.f32 %v1126, 0.0
  %v1187 = vmax.f32 %v1127, 0.0
  %v1188 = vmax.f32 %v1128, 0.0
  %v1189 = vmax.f32 %v1129, 0.0
  %v1190 = vmax.f32 %v1130, 0.0
  %v1191 = vmax.f32 %v1131, 0.0
  %v1192 = vmax.f32 %v1132, 0.0
  %v1193 = vmax.f32 %v1133, 0.0
  %v1194 = vmax.f32 %v1134, 0.0
  %v1195 = vmax.f32 %v1135, 0.0
  %v1196 = vmax.f32 %v1136, 0.0
  %v1197 = vmax.f32 %v1137, 0.0
  %v1198 = vmax.f32 %v1138, %v1139
  %v1199 = vmax.f32 %v1140, %v1141
  %v1200 = vmax.f32 %v1142, %v1143
  %v1201 = vmax.f32 %v1144, %v1145
  %v1202 = vmax.f32 %v1146, %v1147
  %v1203 = vmax.f32 %v1148, %v1149
  %v1204 = vmax.f32 %v1150, %v1151
  %v1205 = vmax.f32 %v1152, %v1153
  %v1206 = vmax.f32 %v1154, %v1155
  %v1207 = vmax.f32 %v1156, %v1157
  %v1208 = vmax.f32 %v1158, %v1159
  %v1209 = vmax.f32 %v1160, %v1161
  %v1210 = vmax.f32 %v1162, %v1163
  %v1211 = vmax.f32 %v1164, %v1165
  %v1212 = vmax.f32 %v1166, %v1167
  %v1213 = vmax.f32 %v1168, %v1169
  %v1214 = vmax.f32 %v1170, %v1171
  %v1215 = vmax.f32 %v1172, %v1173
  %v1216 = vmax.f32 %v1174, %v1175
  %v1217 = vmax.f32 %v1176, %v1177
  %v1218 = vmax.f32 %v1178, %v1179
  %v1219 = vmax.f32 %v1180, %v1181
  %v1220 = vmax.f32 %v1182, %v1183
  %v1221 = vmax.f32 %v1184, %v1185
  %v1222 = vmax.f32 %v1186, %v1187
  %v1223 = vmax.f32 %v1188, %v1189
  %v1224 = vmax.f32 %v1190, %v1191
  %v1225 = vmax.f32 %v1192, %v1193
  %v1226 = vmax.f32 %v1194, %v1195
  %v1227 = vmax.f32 %v1196, %v1197
  %v1228 = vpack.c.bf16 %v1199, %v1198
  %v1229 = vpack.c.bf16 %v1201, %v1200
  %v1230 = vpack.c.bf16 %v1203, %v1202
  %v1231 = vpack.c.bf16 %v1205, %v1204
  %v1232 = vpack.c.bf16 %v1207, %v1206
  %v1233 = vpack.c.bf16 %v1209, %v1208
  %v1234 = vpack.c.bf16 %v1211, %v1210
  %v1235 = vpack.c.bf16 %v1213, %v1212
  %v1236 = vpack.c.bf16 %v1215, %v1214
  %v1237 = vpack.c.bf16 %v1217, %v1216
  %v1238 = vpack.c.bf16 %v1219, %v1218
  %v1239 = vpack.c.bf16 %v1221, %v1220
  %v1240 = vpack.c.bf16 %v1223, %v1222
  %v1241 = vpack.c.bf16 %v1225, %v1224
  %v1242 = vpack.c.bf16 %v1227, %v1226
  %v1243 = vld [vmem:[%s3] sm:$0xff]
  %v1244 = vld [vmem:[%s3 + $0x8] sm:$0xff]
  %v1245 = vld [vmem:[%s3 + $0x10] sm:$0xff]
  %v1246 = vld [vmem:[%s3 + $0x18] sm:$0xff]
  %v1247 = vld [vmem:[%s3 + $0x20] sm:$0xff]
  %v1248 = vld [vmem:[%s3 + $0x28] sm:$0xff]
  %v1249 = vld [vmem:[%s3 + $0x30] sm:$0xff]
  %v1250 = vld [vmem:[%s3 + $0x38] sm:$0xff]
  %v1251 = vld [vmem:[%s3 + $0x40] sm:$0xff]
  %v1252 = vld [vmem:[%s3 + $0x48] sm:$0xff]
  %v1253 = vld [vmem:[%s3 + $0x50] sm:$0xff]
  %v1254 = vld [vmem:[%s3 + $0x58] sm:$0xff]
  %v1255 = vld [vmem:[%s3 + $0x60] sm:$0xff]
  %v1256 = vld [vmem:[%s3 + $0x68] sm:$0xff]
  %v1257 = vld [vmem:[%s3 + $0x70] sm:$0xff]
  %v1258 = vld [vmem:[%s3 + $0x78] sm:$0xff]
  %v1275 = vunpack.c.l.b16 %v1243
  %v1276 = vunpack.c.h.b16 %v1243
  %v1277 = vunpack.c.l.b16 %v1244
  %v1278 = vunpack.c.h.b16 %v1244
  %v1279 = vunpack.c.l.b16 %v1245
  %v1280 = vunpack.c.h.b16 %v1245
  %v1281 = vunpack.c.l.b16 %v1246
  %v1282 = vunpack.c.h.b16 %v1246
  %v1283 = vunpack.c.l.b16 %v1247
  %v1284 = vunpack.c.h.b16 %v1247
  %v1285 = vunpack.c.l.b16 %v1248
  %v1286 = vunpack.c.h.b16 %v1248
  %v1287 = vunpack.c.l.b16 %v1249
  %v1288 = vunpack.c.h.b16 %v1249
  %v1289 = vunpack.c.l.b16 %v1250
  %v1290 = vunpack.c.h.b16 %v1250
  %v1291 = vunpack.c.l.b16 %v1251
  %v1292 = vunpack.c.h.b16 %v1251
  %v1293 = vunpack.c.l.b16 %v1252
  %v1294 = vunpack.c.h.b16 %v1252
  %v1295 = vunpack.c.l.b16 %v1253
  %v1296 = vunpack.c.h.b16 %v1253
  %v1297 = vunpack.c.l.b16 %v1254
  %v1298 = vunpack.c.h.b16 %v1254
  %v1299 = vunpack.c.l.b16 %v1255
  %v1300 = vunpack.c.h.b16 %v1255
  %v1301 = vunpack.c.l.b16 %v1256
  %v1302 = vunpack.c.h.b16 %v1256
  %v1303 = vunpack.c.l.b16 %v1257
  %v1304 = vunpack.c.h.b16 %v1257
  %v1305 = vunpack.c.l.b16 %v1258
  %v1306 = vunpack.c.h.b16 %v1258
  %v1307 = vpack.c.b16 %v1277, %v1275
  %v1308 = vpack.c.b16 %v1278, %v1276
  %v1309 = vpack.c.b16 %v1281, %v1279
  %v1310 = vpack.c.b16 %v1282, %v1280
  %v1311 = vpack.c.b16 %v1285, %v1283
  %v1312 = vpack.c.b16 %v1286, %v1284
  %v1313 = vpack.c.b16 %v1289, %v1287
  %v1314 = vpack.c.b16 %v1290, %v1288
  %v1315 = vpack.c.b16 %v1293, %v1291
  %v1316 = vpack.c.b16 %v1294, %v1292
  %v1317 = vpack.c.b16 %v1297, %v1295
  %v1318 = vpack.c.b16 %v1298, %v1296
  %v1319 = vpack.c.b16 %v1301, %v1299
  %v1320 = vpack.c.b16 %v1302, %v1300
  %v1321 = vpack.c.b16 %v1305, %v1303
  %v1322 = vpack.c.b16 %v1306, %v1304
  %vm1331 = vcmask 900096
  %v1333 = vsel %vm1331, %v1308, 0
  %v1336 = vsel %vm1331, %v1310, 0
  %v1339 = vsel %vm1331, %v1312, 0
  %v1342 = vsel %vm1331, %v1314, 0
  %v1345 = vsel %vm1331, %v1316, 0
  %v1348 = vsel %vm1331, %v1318, 0
  %v1351 = vsel %vm1331, %v1320, 0
  %v1354 = vsel %vm1331, %v1322, 0
  %vm1356 = vcmask 1046528
  %v1358 = vsel %vm1356, %v1242, 0
  %1360 = vmatprep.subr.bf16.mxu0 0
  %1361 = vmatpush1.bf16.msra.mxu0 %v1228
  %1362 = vmatprep.subr.bf16.mxu0 0
  %1363 = vmatpush1.bf16.msra.mxu0 %v1229
  %1364 = vmatprep.subr.bf16.mxu0 0
  %1365 = vmatpush1.bf16.msra.mxu0 %v1230
  %1366 = vmatprep.subr.bf16.mxu0 0
  %1367 = vmatpush1.bf16.msra.mxu0 %v1231
  %1368 = vmatprep.subr.bf16.mxu0 0
  %1369 = vmatpush1.bf16.msra.mxu0 %v1232
  %1370 = vmatprep.subr.bf16.mxu0 0
  %1371 = vmatpush1.bf16.msra.mxu0 %v1233
  %1372 = vmatprep.subr.bf16.mxu0 0
  %1373 = vmatpush1.bf16.msra.mxu0 %v1234
  %1374 = vmatprep.subr.bf16.mxu0 0
  %1375 = vmatpush1.bf16.msra.mxu0 %v1235
  %1376 = vmatprep.subr.bf16.mxu0 0
  %1377 = vmatpush1.bf16.msra.mxu0 %v1236
  %1378 = vmatprep.subr.bf16.mxu0 0
  %1379 = vmatpush1.bf16.msra.mxu0 %v1237
  %1380 = vmatprep.subr.bf16.mxu0 0
  %1381 = vmatpush1.bf16.msra.mxu0 %v1238
  %1382 = vmatprep.subr.bf16.mxu0 0
  %1383 = vmatpush1.bf16.msra.mxu0 %v1239
  %1384 = vmatprep.subr.bf16.mxu0 0
  %1385 = vmatpush1.bf16.msra.mxu0 %v1240
  %1386 = vmatprep.subr.bf16.mxu0 0
  %1387 = vmatpush1.bf16.msra.mxu0 %v1241
  %1388 = vmatprep.subr.bf16.mxu0 0
  %1389 = vmatpush1.bf16.msra.mxu0 %v1358
  %1390 = vmatprep.subr.bf16.mxu0 0
  %1391 = vmatpush1.bf16.msra.mxu0 0
  %1392 = vmatprep.mubr.bf16.mxu0 %v1333
  %1393 = vmatmul.mubr.bf16.gmra.mrb[0].mxu0 %v1307
  %v1394 = vpop.f32.mrb[0].mxu0
  %v1395 = vadd.f32 0.0, %v1394
  %v1396 = vpop.f32.mrb[0].mxu0
  %v1397 = vpop.f32.mrb[0].mxu0
  %v1398 = vadd.f32 0.0, %v1397
  %v1399 = vpop.f32.mrb[0].mxu0
  %1400 = vmatprep.mubr.bf16.mxu0 %v1336
  %1401 = vmatmul.mubr.bf16.gmra.mrb[0].mxu0 %v1309
  %v1402 = vpop.f32.mrb[0].mxu0
  %v1403 = vadd.f32 0.0, %v1402
  %v1404 = vpop.f32.mrb[0].mxu0
  %v1405 = vpop.f32.mrb[0].mxu0
  %v1406 = vadd.f32 0.0, %v1405
  %v1407 = vpop.f32.mrb[0].mxu0
  %1408 = vmatprep.mubr.bf16.mxu0 %v1339
  %1409 = vmatmul.mubr.bf16.gmra.mrb[0].mxu0 %v1311
  %v1410 = vpop.f32.mrb[0].mxu0
  %v1411 = vadd.f32 0.0, %v1410
  %v1412 = vpop.f32.mrb[0].mxu0
  %v1413 = vpop.f32.mrb[0].mxu0
  %v1414 = vadd.f32 0.0, %v1413
  %v1415 = vpop.f32.mrb[0].mxu0
  %1416 = vmatprep.mubr.bf16.mxu0 %v1342
  %1417 = vmatmul.mubr.bf16.gmra.mrb[0].mxu0 %v1313
  %v1418 = vpop.f32.mrb[0].mxu0
  %v1419 = vadd.f32 0.0, %v1418
  %v1420 = vpop.f32.mrb[0].mxu0
  %v1421 = vpop.f32.mrb[0].mxu0
  %v1422 = vadd.f32 0.0, %v1421
  %v1423 = vpop.f32.mrb[0].mxu0
  %1424 = vmatprep.mubr.bf16.mxu0 %v1345
  %1425 = vmatmul.mubr.bf16.gmra.mrb[0].mxu0 %v1315
  %v1426 = vpop.f32.mrb[0].mxu0
  %v1427 = vadd.f32 0.0, %v1426
  %v1428 = vpop.f32.mrb[0].mxu0
  %v1429 = vpop.f32.mrb[0].mxu0
  %v1430 = vadd.f32 0.0, %v1429
  %v1431 = vpop.f32.mrb[0].mxu0
  %1432 = vmatprep.mubr.bf16.mxu0 %v1348
  %1433 = vmatmul.mubr.bf16.gmra.mrb[0].mxu0 %v1317
  %v1434 = vpop.f32.mrb[0].mxu0
  %v1435 = vadd.f32 0.0, %v1434
  %v1436 = vpop.f32.mrb[0].mxu0
  %v1437 = vpop.f32.mrb[0].mxu0
  %v1438 = vadd.f32 0.0, %v1437
  %v1439 = vpop.f32.mrb[0].mxu0
  %1440 = vmatprep.mubr.bf16.mxu0 %v1351
  %1441 = vmatmul.mubr.bf16.gmra.mrb[0].mxu0 %v1319
  %v1442 = vpop.f32.mrb[0].mxu0
  %v1443 = vadd.f32 0.0, %v1442
  %v1444 = vpop.f32.mrb[0].mxu0
  %v1445 = vpop.f32.mrb[0].mxu0
  %v1446 = vadd.f32 0.0, %v1445
  %v1447 = vpop.f32.mrb[0].mxu0
  %1448 = vmatprep.mubr.bf16.mxu0 %v1354
  %1449 = vmatmul.mubr.bf16.gmra.mrb[0].mxu0 %v1321
  %v1450 = vpop.f32.mrb[0].mxu0
  %v1451 = vadd.f32 0.0, %v1450
  %v1452 = vpop.f32.mrb[0].mxu0
  %v1453 = vpop.f32.mrb[0].mxu0
  %v1454 = vadd.f32 0.0, %v1453
  %v1455 = vpop.f32.mrb[0].mxu0
  %1456 = vdwg.mxu0
  %v1457 = vld [vmem:[%s4] sm:$0xff]
  %v1458 = vld [vmem:[%s4 + $0x8] sm:$0xff]
  %v1459 = vld [vmem:[%s4 + $0x10] sm:$0xff]
  %v1460 = vld [vmem:[%s4 + $0x18] sm:$0xff]
  %v1461 = vld [vmem:[%s4 + $0x20] sm:$0xff]
  %v1462 = vld [vmem:[%s4 + $0x28] sm:$0xff]
  %v1463 = vld [vmem:[%s4 + $0x30] sm:$0xff]
  %v1464 = vld [vmem:[%s4 + $0x38] sm:$0xff]
  %v1465 = vld [vmem:[%s4 + $0x40] sm:$0xff]
  %v1466 = vld [vmem:[%s4 + $0x48] sm:$0xff]
  %v1467 = vld [vmem:[%s4 + $0x50] sm:$0xff]
  %v1468 = vld [vmem:[%s4 + $0x58] sm:$0xff]
  %v1469 = vld [vmem:[%s4 + $0x60] sm:$0xff]
  %v1470 = vld [vmem:[%s4 + $0x68] sm:$0xff]
  %v1471 = vld [vmem:[%s4 + $0x70] sm:$0xff]
  %v1472 = vld [vmem:[%s4 + $0x78] sm:$0xff]
  %v1489 = vunpack.c.l.b16 %v1457
  %v1490 = vunpack.c.h.b16 %v1457
  %v1491 = vunpack.c.l.b16 %v1458
  %v1492 = vunpack.c.h.b16 %v1458
  %v1493 = vunpack.c.l.b16 %v1459
  %v1494 = vunpack.c.h.b16 %v1459
  %v1495 = vunpack.c.l.b16 %v1460
  %v1496 = vunpack.c.h.b16 %v1460
  %v1497 = vunpack.c.l.b16 %v1461
  %v1498 = vunpack.c.h.b16 %v1461
  %v1499 = vunpack.c.l.b16 %v1462
  %v1500 = vunpack.c.h.b16 %v1462
  %v1501 = vunpack.c.l.b16 %v1463
  %v1502 = vunpack.c.h.b16 %v1463
  %v1503 = vunpack.c.l.b16 %v1464
  %v1504 = vunpack.c.h.b16 %v1464
  %v1505 = vunpack.c.l.b16 %v1465
  %v1506 = vunpack.c.h.b16 %v1465
  %v1507 = vunpack.c.l.b16 %v1466
  %v1508 = vunpack.c.h.b16 %v1466
  %v1509 = vunpack.c.l.b16 %v1467
  %v1510 = vunpack.c.h.b16 %v1467
  %v1511 = vunpack.c.l.b16 %v1468
  %v1512 = vunpack.c.h.b16 %v1468
  %v1513 = vunpack.c.l.b16 %v1469
  %v1514 = vunpack.c.h.b16 %v1469
  %v1515 = vunpack.c.l.b16 %v1470
  %v1516 = vunpack.c.h.b16 %v1470
  %v1517 = vunpack.c.l.b16 %v1471
  %v1518 = vunpack.c.h.b16 %v1471
  %v1519 = vunpack.c.l.b16 %v1472
  %v1520 = vunpack.c.h.b16 %v1472
  %v1521 = vpack.c.b16 %v1491, %v1489
  %v1522 = vpack.c.b16 %v1492, %v1490
  %v1523 = vpack.c.b16 %v1495, %v1493
  %v1524 = vpack.c.b16 %v1496, %v1494
  %v1525 = vpack.c.b16 %v1499, %v1497
  %v1526 = vpack.c.b16 %v1500, %v1498
  %v1527 = vpack.c.b16 %v1503, %v1501
  %v1528 = vpack.c.b16 %v1504, %v1502
  %v1529 = vpack.c.b16 %v1507, %v1505
  %v1530 = vpack.c.b16 %v1508, %v1506
  %v1531 = vpack.c.b16 %v1511, %v1509
  %v1532 = vpack.c.b16 %v1512, %v1510
  %v1533 = vpack.c.b16 %v1515, %v1513
  %v1534 = vpack.c.b16 %v1516, %v1514
  %v1535 = vpack.c.b16 %v1519, %v1517
  %v1536 = vpack.c.b16 %v1520, %v1518
  %v1546 = vsel %vm1331, %v1522, 0
  %v1549 = vsel %vm1331, %v1524, 0
  %v1552 = vsel %vm1331, %v1526, 0
  %v1555 = vsel %vm1331, %v1528, 0
  %v1558 = vsel %vm1331, %v1530, 0
  %v1561 = vsel %vm1331, %v1532, 0
  %v1564 = vsel %vm1331, %v1534, 0
  %v1567 = vsel %vm1331, %v1536, 0
  %1569 = vmatprep.subr.bf16.mxu0 0
  %1570 = vmatpush1.bf16.msra.mxu0 %v1228
  %1571 = vmatprep.subr.bf16.mxu0 0
  %1572 = vmatpush1.bf16.msra.mxu0 %v1229
  %1573 = vmatprep.subr.bf16.mxu0 0
  %1574 = vmatpush1.bf16.msra.mxu0 %v1230
  %1575 = vmatprep.subr.bf16.mxu0 0
  %1576 = vmatpush1.bf16.msra.mxu0 %v1231
  %1577 = vmatprep.subr.bf16.mxu0 0
  %1578 = vmatpush1.bf16.msra.mxu0 %v1232
  %1579 = vmatprep.subr.bf16.mxu0 0
  %1580 = vmatpush1.bf16.msra.mxu0 %v1233
  %1581 = vmatprep.subr.bf16.mxu0 0
  %1582 = vmatpush1.bf16.msra.mxu0 %v1234
  %1583 = vmatprep.subr.bf16.mxu0 0
  %1584 = vmatpush1.bf16.msra.mxu0 %v1235
  %1585 = vmatprep.subr.bf16.mxu0 0
  %1586 = vmatpush1.bf16.msra.mxu0 %v1236
  %1587 = vmatprep.subr.bf16.mxu0 0
  %1588 = vmatpush1.bf16.msra.mxu0 %v1237
  %1589 = vmatprep.subr.bf16.mxu0 0
  %1590 = vmatpush1.bf16.msra.mxu0 %v1238
  %1591 = vmatprep.subr.bf16.mxu0 0
  %1592 = vmatpush1.bf16.msra.mxu0 %v1239
  %1593 = vmatprep.subr.bf16.mxu0 0
  %1594 = vmatpush1.bf16.msra.mxu0 %v1240
  %1595 = vmatprep.subr.bf16.mxu0 0
  %1596 = vmatpush1.bf16.msra.mxu0 %v1241
  %1597 = vmatprep.subr.bf16.mxu0 0
  %1598 = vmatpush1.bf16.msra.mxu0 %v1358
  %1599 = vmatprep.subr.bf16.mxu0 0
  %1600 = vmatpush1.bf16.msra.mxu0 0
  %1601 = vmatprep.mubr.bf16.mxu0 %v1546
  %1602 = vmatmul.mubr.bf16.gmra.mrb[0].mxu0 %v1521
  %v1603 = vpop.f32.mrb[0].mxu0
  %v1604 = vadd.f32 0.0, %v1603
  %v1605 = vpop.f32.mrb[0].mxu0
  %v1606 = vpop.f32.mrb[0].mxu0
  %v1607 = vadd.f32 0.0, %v1606
  %v1608 = vpop.f32.mrb[0].mxu0
  %1609 = vmatprep.mubr.bf16.mxu0 %v1549
  %1610 = vmatmul.mubr.bf16.gmra.mrb[0].mxu0 %v1523
  %v1611 = vpop.f32.mrb[0].mxu0
  %v1612 = vadd.f32 0.0, %v1611
  %v1613 = vpop.f32.mrb[0].mxu0
  %v1614 = vpop.f32.mrb[0].mxu0
  %v1615 = vadd.f32 0.0, %v1614
  %v1616 = vpop.f32.mrb[0].mxu0
  %1617 = vmatprep.mubr.bf16.mxu0 %v1552
  %1618 = vmatmul.mubr.bf16.gmra.mrb[0].mxu0 %v1525
  %v1619 = vpop.f32.mrb[0].mxu0
  %v1620 = vadd.f32 0.0, %v1619
  %v1621 = vpop.f32.mrb[0].mxu0
  %v1622 = vpop.f32.mrb[0].mxu0
  %v1623 = vadd.f32 0.0, %v1622
  %v1624 = vpop.f32.mrb[0].mxu0
  %1625 = vmatprep.mubr.bf16.mxu0 %v1555
  %1626 = vmatmul.mubr.bf16.gmra.mrb[0].mxu0 %v1527
  %v1627 = vpop.f32.mrb[0].mxu0
  %v1628 = vadd.f32 0.0, %v1627
  %v1629 = vpop.f32.mrb[0].mxu0
  %v1630 = vpop.f32.mrb[0].mxu0
  %v1631 = vadd.f32 0.0, %v1630
  %v1632 = vpop.f32.mrb[0].mxu0
  %1633 = vmatprep.mubr.bf16.mxu0 %v1558
  %1634 = vmatmul.mubr.bf16.gmra.mrb[0].mxu0 %v1529
  %v1635 = vpop.f32.mrb[0].mxu0
  %v1636 = vadd.f32 0.0, %v1635
  %v1637 = vpop.f32.mrb[0].mxu0
  %v1638 = vpop.f32.mrb[0].mxu0
  %v1639 = vadd.f32 0.0, %v1638
  %v1640 = vpop.f32.mrb[0].mxu0
  %1641 = vmatprep.mubr.bf16.mxu0 %v1561
  %1642 = vmatmul.mubr.bf16.gmra.mrb[0].mxu0 %v1531
  %v1643 = vpop.f32.mrb[0].mxu0
  %v1644 = vadd.f32 0.0, %v1643
  %v1645 = vpop.f32.mrb[0].mxu0
  %v1646 = vpop.f32.mrb[0].mxu0
  %v1647 = vadd.f32 0.0, %v1646
  %v1648 = vpop.f32.mrb[0].mxu0
  %1649 = vmatprep.mubr.bf16.mxu0 %v1564
  %1650 = vmatmul.mubr.bf16.gmra.mrb[0].mxu0 %v1533
  %v1651 = vpop.f32.mrb[0].mxu0
  %v1652 = vadd.f32 0.0, %v1651
  %v1653 = vpop.f32.mrb[0].mxu0
  %v1654 = vpop.f32.mrb[0].mxu0
  %v1655 = vadd.f32 0.0, %v1654
  %v1656 = vpop.f32.mrb[0].mxu0
  %1657 = vmatprep.mubr.bf16.mxu0 %v1567
  %1658 = vmatmul.mubr.bf16.gmra.mrb[0].mxu0 %v1535
  %v1659 = vpop.f32.mrb[0].mxu0
  %v1660 = vadd.f32 0.0, %v1659
  %v1661 = vpop.f32.mrb[0].mxu0
  %v1662 = vpop.f32.mrb[0].mxu0
  %v1663 = vadd.f32 0.0, %v1662
  %v1664 = vpop.f32.mrb[0].mxu0
  %1665 = vdwg.mxu0
  %v1666 = vmax.f32 %v1395, %v1604
  %v1667 = vmax.f32 %v1398, %v1607
  %v1668 = vmax.f32 %v1403, %v1612
  %v1669 = vmax.f32 %v1406, %v1615
  %v1670 = vmax.f32 %v1411, %v1620
  %v1671 = vmax.f32 %v1414, %v1623
  %v1672 = vmax.f32 %v1419, %v1628
  %v1673 = vmax.f32 %v1422, %v1631
  %v1674 = vmax.f32 %v1427, %v1636
  %v1675 = vmax.f32 %v1430, %v1639
  %v1676 = vmax.f32 %v1435, %v1644
  %v1677 = vmax.f32 %v1438, %v1647
  %v1678 = vmax.f32 %v1443, %v1652
  %v1679 = vmax.f32 %v1446, %v1655
  %v1680 = vmax.f32 %v1451, %v1660
  %v1681 = vmax.f32 %v1454, %v1663
  %1682 = vst [vmem:[#allocation2] sm:$0xff] %v1666
  %1683 = vst [vmem:[#allocation2 + $0x8] sm:$0xff] %v1667
  %1684 = vst [vmem:[#allocation2 + $0x10] sm:$0xff] %v1668
  %1685 = vst [vmem:[#allocation2 + $0x18] sm:$0xff] %v1669
  %1686 = vst [vmem:[#allocation2 + $0x20] sm:$0xff] %v1670
  %1687 = vst [vmem:[#allocation2 + $0x28] sm:$0xff] %v1671
  %1688 = vst [vmem:[#allocation2 + $0x30] sm:$0xff] %v1672
  %1689 = vst [vmem:[#allocation2 + $0x38] sm:$0xff] %v1673
  %1690 = vst [vmem:[#allocation2 + $0x40] sm:$0xff] %v1674
  %1691 = vst [vmem:[#allocation2 + $0x48] sm:$0xff] %v1675
  %1692 = vst [vmem:[#allocation2 + $0x50] sm:$0xff] %v1676
  %1693 = vst [vmem:[#allocation2 + $0x58] sm:$0xff] %v1677
  %1694 = vst [vmem:[#allocation2 + $0x60] sm:$0xff] %v1678
  %1695 = vst [vmem:[#allocation2 + $0x68] sm:$0xff] %v1679
  %1696 = vst [vmem:[#allocation2 + $0x70] sm:$0xff] %v1680
  %1697 = vst [vmem:[#allocation2 + $0x78] sm:$0xff] %v1681
  %v1698 = vld [vmem:[%s6] sm:$0x3]
  %v1699 = vld [vmem:[#allocation2] sm:$0xff]
  %v1700 = vld [vmem:[#allocation2 + $0x8] sm:$0xff]
  %v1701 = vld [vmem:[#allocation2 + $0x10] sm:$0xff]
  %v1702 = vld [vmem:[#allocation2 + $0x18] sm:$0xff]
  %v1703 = vld [vmem:[#allocation2 + $0x20] sm:$0xff]
  %v1704 = vld [vmem:[#allocation2 + $0x28] sm:$0xff]
  %v1705 = vld [vmem:[#allocation2 + $0x30] sm:$0xff]
  %v1706 = vld [vmem:[#allocation2 + $0x38] sm:$0xff]
  %v1707 = vld [vmem:[#allocation2 + $0x40] sm:$0xff]
  %v1708 = vld [vmem:[#allocation2 + $0x48] sm:$0xff]
  %v1709 = vld [vmem:[#allocation2 + $0x50] sm:$0xff]
  %v1710 = vld [vmem:[#allocation2 + $0x58] sm:$0xff]
  %v1711 = vld [vmem:[#allocation2 + $0x60] sm:$0xff]
  %v1712 = vld [vmem:[#allocation2 + $0x68] sm:$0xff]
  %v1713 = vld [vmem:[#allocation2 + $0x70] sm:$0xff]
  %v1714 = vld [vmem:[#allocation2 + $0x78] sm:$0x3f]
  %v1715 = vpack.c.bf16 %v1700, %v1699
  %v1716 = vpack.c.bf16 %v1702, %v1701
  %v1717 = vpack.c.bf16 %v1704, %v1703
  %v1718 = vpack.c.bf16 %v1706, %v1705
  %v1719 = vpack.c.bf16 %v1708, %v1707
  %v1720 = vpack.c.bf16 %v1710, %v1709
  %v1721 = vpack.c.bf16 %v1712, %v1711
  %v1722 = vpack.c.bf16 %v1714, %v1713
  %v1723 = vld [vmem:[%s5] sm:$0xff]
  %v1724 = vld [vmem:[%s5 + $0x8] sm:$0xff]
  %v1725 = vld [vmem:[%s5 + $0x10] sm:$0xff]
  %v1726 = vld [vmem:[%s5 + $0x18] sm:$0xff]
  %v1727 = vld [vmem:[%s5 + $0x20] sm:$0xff]
  %v1728 = vld [vmem:[%s5 + $0x28] sm:$0xff]
  %v1729 = vld [vmem:[%s5 + $0x30] sm:$0xff]
  %v1730 = vld [vmem:[%s5 + $0x38] sm:$0xff]
  %v1731 = vld [vmem:[%s5 + $0x40] sm:$0xff]
  %v1732 = vld [vmem:[%s5 + $0x48] sm:$0xff]
  %v1733 = vld [vmem:[%s5 + $0x50] sm:$0xff]
  %v1734 = vld [vmem:[%s5 + $0x58] sm:$0xff]
  %v1735 = vld [vmem:[%s5 + $0x60] sm:$0xff]
  %v1736 = vld [vmem:[%s5 + $0x68] sm:$0xff]
  %v1737 = vld [vmem:[%s5 + $0x70] sm:$0xff]
  %v1738 = vld [vmem:[%s5 + $0x78] sm:$0xff]
  %v1755 = vunpack.c.l.b16 %v1723
  %v1756 = vunpack.c.h.b16 %v1723
  %v1757 = vunpack.c.l.b16 %v1724
  %v1758 = vunpack.c.h.b16 %v1724
  %v1759 = vunpack.c.l.b16 %v1725
  %v1760 = vunpack.c.h.b16 %v1725
  %v1761 = vunpack.c.l.b16 %v1726
  %v1762 = vunpack.c.h.b16 %v1726
  %v1763 = vunpack.c.l.b16 %v1727
  %v1764 = vunpack.c.h.b16 %v1727
  %v1765 = vunpack.c.l.b16 %v1728
  %v1766 = vunpack.c.h.b16 %v1728
  %v1767 = vunpack.c.l.b16 %v1729
  %v1768 = vunpack.c.h.b16 %v1729
  %v1769 = vunpack.c.l.b16 %v1730
  %v1770 = vunpack.c.h.b16 %v1730
  %v1771 = vunpack.c.l.b16 %v1731
  %v1772 = vunpack.c.h.b16 %v1731
  %v1773 = vunpack.c.l.b16 %v1732
  %v1774 = vunpack.c.h.b16 %v1732
  %v1775 = vunpack.c.l.b16 %v1733
  %v1776 = vunpack.c.h.b16 %v1733
  %v1777 = vunpack.c.l.b16 %v1734
  %v1778 = vunpack.c.h.b16 %v1734
  %v1779 = vunpack.c.l.b16 %v1735
  %v1780 = vunpack.c.h.b16 %v1735
  %v1781 = vunpack.c.l.b16 %v1736
  %v1782 = vunpack.c.h.b16 %v1736
  %v1783 = vunpack.c.l.b16 %v1737
  %v1784 = vunpack.c.h.b16 %v1737
  %v1785 = vunpack.c.l.b16 %v1738
  %v1786 = vunpack.c.h.b16 %v1738
  %v1787 = vpack.c.b16 %v1757, %v1755
  %v1788 = vpack.c.b16 %v1758, %v1756
  %v1789 = vpack.c.b16 %v1761, %v1759
  %v1790 = vpack.c.b16 %v1762, %v1760
  %v1791 = vpack.c.b16 %v1765, %v1763
  %v1792 = vpack.c.b16 %v1766, %v1764
  %v1793 = vpack.c.b16 %v1769, %v1767
  %v1794 = vpack.c.b16 %v1770, %v1768
  %v1795 = vpack.c.b16 %v1773, %v1771
  %v1796 = vpack.c.b16 %v1774, %v1772
  %v1797 = vpack.c.b16 %v1777, %v1775
  %v1798 = vpack.c.b16 %v1778, %v1776
  %v1799 = vpack.c.b16 %v1781, %v1779
  %v1800 = vpack.c.b16 %v1782, %v1780
  %v1801 = vpack.c.b16 %v1785, %v1783
  %v1802 = vpack.c.b16 %v1786, %v1784
  %1819 = vmatprep.subr.bf16.mxu0 %v1788
  %1820 = vmatpush1.bf16.msra.mxu0 %v1787
  %1821 = vmatprep.subr.bf16.mxu0 %v1790
  %1822 = vmatpush1.bf16.msra.mxu0 %v1789
  %1823 = vmatprep.subr.bf16.mxu0 %v1792
  %1824 = vmatpush1.bf16.msra.mxu0 %v1791
  %1825 = vmatprep.subr.bf16.mxu0 %v1794
  %1826 = vmatpush1.bf16.msra.mxu0 %v1793
  %1827 = vmatprep.subr.bf16.mxu0 %v1796
  %1828 = vmatpush1.bf16.msra.mxu0 %v1795
  %1829 = vmatprep.subr.bf16.mxu0 %v1798
  %1830 = vmatpush1.bf16.msra.mxu0 %v1797
  %1831 = vmatprep.subr.bf16.mxu0 %v1800
  %1832 = vmatpush1.bf16.msra.mxu0 %v1799
  %1833 = vmatprep.subr.bf16.mxu0 %v1802
  %1834 = vmatpush1.bf16.msra.mxu0 %v1801
  %1835 = vmatprep.subr.bf16.mxu0 0
  %1836 = vmatpush1.bf16.msra.mxu0 0
  %1837 = vmatprep.subr.bf16.mxu0 0
  %1838 = vmatpush1.bf16.msra.mxu0 0
  %1839 = vmatprep.subr.bf16.mxu0 0
  %1840 = vmatpush1.bf16.msra.mxu0 0
  %1841 = vmatprep.subr.bf16.mxu0 0
  %1842 = vmatpush1.bf16.msra.mxu0 0
  %1843 = vmatprep.subr.bf16.mxu0 0
  %1844 = vmatpush1.bf16.msra.mxu0 0
  %1845 = vmatprep.subr.bf16.mxu0 0
  %1846 = vmatpush1.bf16.msra.mxu0 0
  %1847 = vmatprep.subr.bf16.mxu0 0
  %1848 = vmatpush1.bf16.msra.mxu0 0
  %1849 = vmatprep.subr.bf16.mxu0 0
  %1850 = vmatpush1.bf16.msra.mxu0 0
  %1851 = vmatprep.mubr.bf16.mxu0 0
  %1852 = vmatmul.mubr.bf16.gmra.mrb[0].mxu0 %v1715
  %v1853 = vpop.f32.mrb[0].mxu0
  %v1854 = vadd.f32 0.0, %v1853
  %v1855 = vpop.f32.mrb[0].mxu0
  %v1856 = vadd.f32 0.0, %v1855
  %v1857 = vpop.f32.mrb[0].mxu0
  %v1858 = vadd.f32 0.0, %v1857
  %v1859 = vpop.f32.mrb[0].mxu0
  %v1860 = vadd.f32 0.0, %v1859
  %1861 = vmatprep.mubr.bf16.mxu0 0
  %1862 = vmatmul.mubr.bf16.gmra.mrb[0].mxu0 %v1716
  %v1863 = vpop.f32.mrb[0].mxu0
  %v1864 = vadd.f32 0.0, %v1863
  %v1865 = vpop.f32.mrb[0].mxu0
  %v1866 = vadd.f32 0.0, %v1865
  %v1867 = vpop.f32.mrb[0].mxu0
  %v1868 = vadd.f32 0.0, %v1867
  %v1869 = vpop.f32.mrb[0].mxu0
  %v1870 = vadd.f32 0.0, %v1869
  %1871 = vmatprep.mubr.bf16.mxu0 0
  %1872 = vmatmul.mubr.bf16.gmra.mrb[0].mxu0 %v1717
  %v1873 = vpop.f32.mrb[0].mxu0
  %v1874 = vadd.f32 0.0, %v1873
  %v1875 = vpop.f32.mrb[0].mxu0
  %v1876 = vadd.f32 0.0, %v1875
  %v1877 = vpop.f32.mrb[0].mxu0
  %v1878 = vadd.f32 0.0, %v1877
  %v1879 = vpop.f32.mrb[0].mxu0
  %v1880 = vadd.f32 0.0, %v1879
  %1881 = vmatprep.mubr.bf16.mxu0 0
  %1882 = vmatmul.mubr.bf16.gmra.mrb[0].mxu0 %v1718
  %v1883 = vpop.f32.mrb[0].mxu0
  %v1884 = vadd.f32 0.0, %v1883
  %v1885 = vpop.f32.mrb[0].mxu0
  %v1886 = vadd.f32 0.0, %v1885
  %v1887 = vpop.f32.mrb[0].mxu0
  %v1888 = vadd.f32 0.0, %v1887
  %v1889 = vpop.f32.mrb[0].mxu0
  %v1890 = vadd.f32 0.0, %v1889
  %1891 = vmatprep.mubr.bf16.mxu0 0
  %1892 = vmatmul.mubr.bf16.gmra.mrb[0].mxu0 %v1719
  %v1893 = vpop.f32.mrb[0].mxu0
  %v1894 = vadd.f32 0.0, %v1893
  %v1895 = vpop.f32.mrb[0].mxu0
  %v1896 = vadd.f32 0.0, %v1895
  %v1897 = vpop.f32.mrb[0].mxu0
  %v1898 = vadd.f32 0.0, %v1897
  %v1899 = vpop.f32.mrb[0].mxu0
  %v1900 = vadd.f32 0.0, %v1899
  %1901 = vmatprep.mubr.bf16.mxu0 0
  %1902 = vmatmul.mubr.bf16.gmra.mrb[0].mxu0 %v1720
  %v1903 = vpop.f32.mrb[0].mxu0
  %v1904 = vadd.f32 0.0, %v1903
  %v1905 = vpop.f32.mrb[0].mxu0
  %v1906 = vadd.f32 0.0, %v1905
  %v1907 = vpop.f32.mrb[0].mxu0
  %v1908 = vadd.f32 0.0, %v1907
  %v1909 = vpop.f32.mrb[0].mxu0
  %v1910 = vadd.f32 0.0, %v1909
  %1911 = vmatprep.mubr.bf16.mxu0 0
  %1912 = vmatmul.mubr.bf16.gmra.mrb[0].mxu0 %v1721
  %v1913 = vpop.f32.mrb[0].mxu0
  %v1914 = vadd.f32 0.0, %v1913
  %v1915 = vpop.f32.mrb[0].mxu0
  %v1916 = vadd.f32 0.0, %v1915
  %v1917 = vpop.f32.mrb[0].mxu0
  %v1918 = vadd.f32 0.0, %v1917
  %v1919 = vpop.f32.mrb[0].mxu0
  %v1920 = vadd.f32 0.0, %v1919
  %1921 = vmatprep.mubr.bf16.mxu0 0
  %1922 = vmatmul.mubr.bf16.gmra.mrb[0].mxu0 %v1722
  %v1923 = vpop.f32.mrb[0].mxu0
  %v1924 = vadd.f32 0.0, %v1923
  %v1925 = vpop.f32.mrb[0].mxu0
  %v1926 = vadd.f32 0.0, %v1925
  %v1927 = vpop.f32.mrb[0].mxu0
  %v1928 = vadd.f32 0.0, %v1927
  %v1929 = vpop.f32.mrb[0].mxu0
  %v1930 = vadd.f32 0.0, %v1929
  %1931 = vdwg.mxu0
  %v1933 = vlaneseq
  %v1934 = vshrl.u32 %v1933, 7
  %v1935 = vsub.s32 0, %v1934
  %v1936 = vrot.slane %v1698, %v1935
  %v1937 = vlaneseq
  %v1938 = vshrl.u32 %v1937, 7
  %v1939 = vsub.s32 1, %v1938
  %v1940 = vrot.slane %v1698, %v1939
  %v1943 = vadd.f32 %v1936, %v1854
  %v1944 = vadd.f32 %v1940, %v1856
  %v1945 = vadd.f32 %v1936, %v1858
  %v1946 = vadd.f32 %v1940, %v1860
  %v1947 = vadd.f32 %v1936, %v1864
  %v1948 = vadd.f32 %v1940, %v1866
  %v1949 = vadd.f32 %v1936, %v1868
  %v1950 = vadd.f32 %v1940, %v1870
  %v1951 = vadd.f32 %v1936, %v1874
  %v1952 = vadd.f32 %v1940, %v1876
  %v1953 = vadd.f32 %v1936, %v1878
  %v1954 = vadd.f32 %v1940, %v1880
  %v1955 = vadd.f32 %v1936, %v1884
  %v1956 = vadd.f32 %v1940, %v1886
  %v1957 = vadd.f32 %v1936, %v1888
  %v1958 = vadd.f32 %v1940, %v1890
  %v1959 = vadd.f32 %v1936, %v1894
  %v1960 = vadd.f32 %v1940, %v1896
  %v1961 = vadd.f32 %v1936, %v1898
  %v1962 = vadd.f32 %v1940, %v1900
  %v1963 = vadd.f32 %v1936, %v1904
  %v1964 = vadd.f32 %v1940, %v1906
  %v1965 = vadd.f32 %v1936, %v1908
  %v1966 = vadd.f32 %v1940, %v1910
  %v1967 = vadd.f32 %v1936, %v1914
  %v1968 = vadd.f32 %v1940, %v1916
  %v1969 = vadd.f32 %v1936, %v1918
  %v1970 = vadd.f32 %v1940, %v1920
  %v1971 = vadd.f32 %v1936, %v1924
  %v1972 = vadd.f32 %v1940, %v1926
  %v1973 = vadd.f32 %v1936, %v1928
  %v1974 = vadd.f32 %v1940, %v1930
  %v1975 = vld [vmem:[#allocation2 + $0x1] sm:$0xff]
  %v1976 = vld [vmem:[#allocation2 + $0x9] sm:$0xff]
  %v1977 = vld [vmem:[#allocation2 + $0x11] sm:$0xff]
  %v1978 = vld [vmem:[#allocation2 + $0x19] sm:$0xff]
  %v1979 = vld [vmem:[#allocation2 + $0x21] sm:$0xff]
  %v1980 = vld [vmem:[#allocation2 + $0x29] sm:$0xff]
  %v1981 = vld [vmem:[#allocation2 + $0x31] sm:$0xff]
  %v1982 = vld [vmem:[#allocation2 + $0x39] sm:$0xff]
  %v1983 = vld [vmem:[#allocation2 + $0x41] sm:$0xff]
  %v1984 = vld [vmem:[#allocation2 + $0x49] sm:$0xff]
  %v1985 = vld [vmem:[#allocation2 + $0x51] sm:$0xff]
  %v1986 = vld [vmem:[#allocation2 + $0x59] sm:$0xff]
  %v1987 = vld [vmem:[#allocation2 + $0x61] sm:$0xff]
  %v1988 = vld [vmem:[#allocation2 + $0x69] sm:$0xff]
  %v1989 = vld [vmem:[#allocation2 + $0x71] sm:$0xff]
  %v1990 = vld [vmem:[#allocation2 + $0x79] sm:$0x3f]
  %v1991 = vpack.c.bf16 %v1976, %v1975
  %v1992 = vpack.c.bf16 %v1978, %v1977
  %v1993 = vpack.c.bf16 %v1980, %v1979
  %v1994 = vpack.c.bf16 %v1982, %v1981
  %v1995 = vpack.c.bf16 %v1984, %v1983
  %v1996 = vpack.c.bf16 %v1986, %v1985
  %v1997 = vpack.c.bf16 %v1988, %v1987
  %v1998 = vpack.c.bf16 %v1990, %v1989
  %s1999 = scalar_lea.vmem %s5, 128
  %v2000 = vld [vmem:[%s1999] sm:$0xff]
  %v2001 = vld [vmem:[%s1999 + $0x8] sm:$0xff]
  %v2002 = vld [vmem:[%s1999 + $0x10] sm:$0xff]
  %v2003 = vld [vmem:[%s1999 + $0x18] sm:$0xff]
  %v2004 = vld [vmem:[%s1999 + $0x20] sm:$0xff]
  %v2005 = vld [vmem:[%s1999 + $0x28] sm:$0xff]
  %v2006 = vld [vmem:[%s1999 + $0x30] sm:$0xff]
  %v2007 = vld [vmem:[%s1999 + $0x38] sm:$0xff]
  %v2008 = vld [vmem:[%s1999 + $0x40] sm:$0xff]
  %v2009 = vld [vmem:[%s1999 + $0x48] sm:$0xff]
  %v2010 = vld [vmem:[%s1999 + $0x50] sm:$0xff]
  %v2011 = vld [vmem:[%s1999 + $0x58] sm:$0xff]
  %v2012 = vld [vmem:[%s1999 + $0x60] sm:$0xff]
  %v2013 = vld [vmem:[%s1999 + $0x68] sm:$0xff]
  %v2014 = vld [vmem:[%s1999 + $0x70] sm:$0xff]
  %v2015 = vld [vmem:[%s1999 + $0x78] sm:$0xff]
  %v2032 = vunpack.c.l.b16 %v2000
  %v2033 = vunpack.c.h.b16 %v2000
  %v2034 = vunpack.c.l.b16 %v2001
  %v2035 = vunpack.c.h.b16 %v2001
  %v2036 = vunpack.c.l.b16 %v2002
  %v2037 = vunpack.c.h.b16 %v2002
  %v2038 = vunpack.c.l.b16 %v2003
  %v2039 = vunpack.c.h.b16 %v2003
  %v2040 = vunpack.c.l.b16 %v2004
  %v2041 = vunpack.c.h.b16 %v2004
  %v2042 = vunpack.c.l.b16 %v2005
  %v2043 = vunpack.c.h.b16 %v2005
  %v2044 = vunpack.c.l.b16 %v2006
  %v2045 = vunpack.c.h.b16 %v2006
  %v2046 = vunpack.c.l.b16 %v2007
  %v2047 = vunpack.c.h.b16 %v2007
  %v2048 = vunpack.c.l.b16 %v2008
  %v2049 = vunpack.c.h.b16 %v2008
  %v2050 = vunpack.c.l.b16 %v2009
  %v2051 = vunpack.c.h.b16 %v2009
  %v2052 = vunpack.c.l.b16 %v2010
  %v2053 = vunpack.c.h.b16 %v2010
  %v2054 = vunpack.c.l.b16 %v2011
  %v2055 = vunpack.c.h.b16 %v2011
  %v2056 = vunpack.c.l.b16 %v2012
  %v2057 = vunpack.c.h.b16 %v2012
  %v2058 = vunpack.c.l.b16 %v2013
  %v2059 = vunpack.c.h.b16 %v2013
  %v2060 = vunpack.c.l.b16 %v2014
  %v2061 = vunpack.c.h.b16 %v2014
  %v2062 = vunpack.c.l.b16 %v2015
  %v2063 = vunpack.c.h.b16 %v2015
  %v2064 = vpack.c.b16 %v2034, %v2032
  %v2065 = vpack.c.b16 %v2035, %v2033
  %v2066 = vpack.c.b16 %v2038, %v2036
  %v2067 = vpack.c.b16 %v2039, %v2037
  %v2068 = vpack.c.b16 %v2042, %v2040
  %v2069 = vpack.c.b16 %v2043, %v2041
  %v2070 = vpack.c.b16 %v2046, %v2044
  %v2071 = vpack.c.b16 %v2047, %v2045
  %v2072 = vpack.c.b16 %v2050, %v2048
  %v2073 = vpack.c.b16 %v2051, %v2049
  %v2074 = vpack.c.b16 %v2054, %v2052
  %v2075 = vpack.c.b16 %v2055, %v2053
  %v2076 = vpack.c.b16 %v2058, %v2056
  %v2077 = vpack.c.b16 %v2059, %v2057
  %v2078 = vpack.c.b16 %v2062, %v2060
  %v2079 = vpack.c.b16 %v2063, %v2061
  %2096 = vmatprep.subr.bf16.mxu0 %v2065
  %2097 = vmatpush1.bf16.msra.mxu0 %v2064
  %2098 = vmatprep.subr.bf16.mxu0 %v2067
  %2099 = vmatpush1.bf16.msra.mxu0 %v2066
  %2100 = vmatprep.subr.bf16.mxu0 %v2069
  %2101 = vmatpush1.bf16.msra.mxu0 %v2068
  %2102 = vmatprep.subr.bf16.mxu0 %v2071
  %2103 = vmatpush1.bf16.msra.mxu0 %v2070
  %2104 = vmatprep.subr.bf16.mxu0 %v2073
  %2105 = vmatpush1.bf16.msra.mxu0 %v2072
  %2106 = vmatprep.subr.bf16.mxu0 %v2075
  %2107 = vmatpush1.bf16.msra.mxu0 %v2074
  %2108 = vmatprep.subr.bf16.mxu0 %v2077
  %2109 = vmatpush1.bf16.msra.mxu0 %v2076
  %2110 = vmatprep.subr.bf16.mxu0 %v2079
  %2111 = vmatpush1.bf16.msra.mxu0 %v2078
  %2112 = vmatprep.subr.bf16.mxu0 0
  %2113 = vmatpush1.bf16.msra.mxu0 0
  %2114 = vmatprep.subr.bf16.mxu0 0
  %2115 = vmatpush1.bf16.msra.mxu0 0
  %2116 = vmatprep.subr.bf16.mxu0 0
  %2117 = vmatpush1.bf16.msra.mxu0 0
  %2118 = vmatprep.subr.bf16.mxu0 0
  %2119 = vmatpush1.bf16.msra.mxu0 0
  %2120 = vmatprep.subr.bf16.mxu0 0
  %2121 = vmatpush1.bf16.msra.mxu0 0
  %2122 = vmatprep.subr.bf16.mxu0 0
  %2123 = vmatpush1.bf16.msra.mxu0 0
  %2124 = vmatprep.subr.bf16.mxu0 0
  %2125 = vmatpush1.bf16.msra.mxu0 0
  %2126 = vmatprep.subr.bf16.mxu0 0
  %2127 = vmatpush1.bf16.msra.mxu0 0
  %2128 = vmatprep.mubr.bf16.mxu0 0
  %2129 = vmatmul.mubr.bf16.gmra.mrb[0].mxu0 %v1991
  %v2130 = vpop.f32.mrb[0].mxu0
  %v2131 = vadd.f32 0.0, %v2130
  %v2132 = vpop.f32.mrb[0].mxu0
  %v2133 = vadd.f32 0.0, %v2132
  %v2134 = vpop.f32.mrb[0].mxu0
  %v2135 = vadd.f32 0.0, %v2134
  %v2136 = vpop.f32.mrb[0].mxu0
  %v2137 = vadd.f32 0.0, %v2136
  %2138 = vmatprep.mubr.bf16.mxu0 0
  %2139 = vmatmul.mubr.bf16.gmra.mrb[0].mxu0 %v1992
  %v2140 = vpop.f32.mrb[0].mxu0
  %v2141 = vadd.f32 0.0, %v2140
  %v2142 = vpop.f32.mrb[0].mxu0
  %v2143 = vadd.f32 0.0, %v2142
  %v2144 = vpop.f32.mrb[0].mxu0
  %v2145 = vadd.f32 0.0, %v2144
  %v2146 = vpop.f32.mrb[0].mxu0
  %v2147 = vadd.f32 0.0, %v2146
  %2148 = vmatprep.mubr.bf16.mxu0 0
  %2149 = vmatmul.mubr.bf16.gmra.mrb[0].mxu0 %v1993
  %v2150 = vpop.f32.mrb[0].mxu0
  %v2151 = vadd.f32 0.0, %v2150
  %v2152 = vpop.f32.mrb[0].mxu0
  %v2153 = vadd.f32 0.0, %v2152
  %v2154 = vpop.f32.mrb[0].mxu0
  %v2155 = vadd.f32 0.0, %v2154
  %v2156 = vpop.f32.mrb[0].mxu0
  %v2157 = vadd.f32 0.0, %v2156
  %2158 = vmatprep.mubr.bf16.mxu0 0
  %2159 = vmatmul.mubr.bf16.gmra.mrb[0].mxu0 %v1994
  %v2160 = vpop.f32.mrb[0].mxu0
  %v2161 = vadd.f32 0.0, %v2160
  %v2162 = vpop.f32.mrb[0].mxu0
  %v2163 = vadd.f32 0.0, %v2162
  %v2164 = vpop.f32.mrb[0].mxu0
  %v2165 = vadd.f32 0.0, %v2164
  %v2166 = vpop.f32.mrb[0].mxu0
  %v2167 = vadd.f32 0.0, %v2166
  %2168 = vmatprep.mubr.bf16.mxu0 0
  %2169 = vmatmul.mubr.bf16.gmra.mrb[0].mxu0 %v1995
  %v2170 = vpop.f32.mrb[0].mxu0
  %v2171 = vadd.f32 0.0, %v2170
  %v2172 = vpop.f32.mrb[0].mxu0
  %v2173 = vadd.f32 0.0, %v2172
  %v2174 = vpop.f32.mrb[0].mxu0
  %v2175 = vadd.f32 0.0, %v2174
  %v2176 = vpop.f32.mrb[0].mxu0
  %v2177 = vadd.f32 0.0, %v2176
  %2178 = vmatprep.mubr.bf16.mxu0 0
  %2179 = vmatmul.mubr.bf16.gmra.mrb[0].mxu0 %v1996
  %v2180 = vpop.f32.mrb[0].mxu0
  %v2181 = vadd.f32 0.0, %v2180
  %v2182 = vpop.f32.mrb[0].mxu0
  %v2183 = vadd.f32 0.0, %v2182
  %v2184 = vpop.f32.mrb[0].mxu0
  %v2185 = vadd.f32 0.0, %v2184
  %v2186 = vpop.f32.mrb[0].mxu0
  %v2187 = vadd.f32 0.0, %v2186
  %2188 = vmatprep.mubr.bf16.mxu0 0
  %2189 = vmatmul.mubr.bf16.gmra.mrb[0].mxu0 %v1997
  %v2190 = vpop.f32.mrb[0].mxu0
  %v2191 = vadd.f32 0.0, %v2190
  %v2192 = vpop.f32.mrb[0].mxu0
  %v2193 = vadd.f32 0.0, %v2192
  %v2194 = vpop.f32.mrb[0].mxu0
  %v2195 = vadd.f32 0.0, %v2194
  %v2196 = vpop.f32.mrb[0].mxu0
  %v2197 = vadd.f32 0.0, %v2196
  %2198 = vmatprep.mubr.bf16.mxu0 0
  %2199 = vmatmul.mubr.bf16.gmra.mrb[0].mxu0 %v1998
  %v2200 = vpop.f32.mrb[0].mxu0
  %v2201 = vadd.f32 0.0, %v2200
  %v2202 = vpop.f32.mrb[0].mxu0
  %v2203 = vadd.f32 0.0, %v2202
  %v2204 = vpop.f32.mrb[0].mxu0
  %v2205 = vadd.f32 0.0, %v2204
  %v2206 = vpop.f32.mrb[0].mxu0
  %v2207 = vadd.f32 0.0, %v2206
  %2208 = vdwg.mxu0
  %v2209 = vadd.f32 %v1943, %v2131
  %v2210 = vadd.f32 %v1944, %v2133
  %v2211 = vadd.f32 %v1945, %v2135
  %v2212 = vadd.f32 %v1946, %v2137
  %v2213 = vadd.f32 %v1947, %v2141
  %v2214 = vadd.f32 %v1948, %v2143
  %v2215 = vadd.f32 %v1949, %v2145
  %v2216 = vadd.f32 %v1950, %v2147
  %v2217 = vadd.f32 %v1951, %v2151
  %v2218 = vadd.f32 %v1952, %v2153
  %v2219 = vadd.f32 %v1953, %v2155
  %v2220 = vadd.f32 %v1954, %v2157
  %v2221 = vadd.f32 %v1955, %v2161
  %v2222 = vadd.f32 %v1956, %v2163
  %v2223 = vadd.f32 %v1957, %v2165
  %v2224 = vadd.f32 %v1958, %v2167
  %v2225 = vadd.f32 %v1959, %v2171
  %v2226 = vadd.f32 %v1960, %v2173
  %v2227 = vadd.f32 %v1961, %v2175
  %v2228 = vadd.f32 %v1962, %v2177
  %v2229 = vadd.f32 %v1963, %v2181
  %v2230 = vadd.f32 %v1964, %v2183
  %v2231 = vadd.f32 %v1965, %v2185
  %v2232 = vadd.f32 %v1966, %v2187
  %v2233 = vadd.f32 %v1967, %v2191
  %v2234 = vadd.f32 %v1968, %v2193
  %v2235 = vadd.f32 %v1969, %v2195
  %v2236 = vadd.f32 %v1970, %v2197
  %v2237 = vadd.f32 %v1971, %v2201
  %v2238 = vadd.f32 %v1972, %v2203
  %v2239 = vadd.f32 %v1973, %v2205
  %v2240 = vadd.f32 %v1974, %v2207
  %v2241 = vld [vmem:[#allocation2 + $0x2] sm:$0xff]
  %v2242 = vld [vmem:[#allocation2 + $0xa] sm:$0xff]
  %v2243 = vld [vmem:[#allocation2 + $0x12] sm:$0xff]
  %v2244 = vld [vmem:[#allocation2 + $0x1a] sm:$0xff]
  %v2245 = vld [vmem:[#allocation2 + $0x22] sm:$0xff]
  %v2246 = vld [vmem:[#allocation2 + $0x2a] sm:$0xff]
  %v2247 = vld [vmem:[#allocation2 + $0x32] sm:$0xff]
  %v2248 = vld [vmem:[#allocation2 + $0x3a] sm:$0xff]
  %v2249 = vld [vmem:[#allocation2 + $0x42] sm:$0xff]
  %v2250 = vld [vmem:[#allocation2 + $0x4a] sm:$0xff]
  %v2251 = vld [vmem:[#allocation2 + $0x52] sm:$0xff]
  %v2252 = vld [vmem:[#allocation2 + $0x5a] sm:$0xff]
  %v2253 = vld [vmem:[#allocation2 + $0x62] sm:$0xff]
  %v2254 = vld [vmem:[#allocation2 + $0x6a] sm:$0xff]
  %v2255 = vld [vmem:[#allocation2 + $0x72] sm:$0xff]
  %v2256 = vld [vmem:[#allocation2 + $0x7a] sm:$0x3f]
  %v2257 = vpack.c.bf16 %v2242, %v2241
  %v2258 = vpack.c.bf16 %v2244, %v2243
  %v2259 = vpack.c.bf16 %v2246, %v2245
  %v2260 = vpack.c.bf16 %v2248, %v2247
  %v2261 = vpack.c.bf16 %v2250, %v2249
  %v2262 = vpack.c.bf16 %v2252, %v2251
  %v2263 = vpack.c.bf16 %v2254, %v2253
  %v2264 = vpack.c.bf16 %v2256, %v2255
  %s2265 = scalar_lea.vmem %s5, 256
  %v2266 = vld [vmem:[%s2265] sm:$0xff]
  %v2267 = vld [vmem:[%s2265 + $0x8] sm:$0xff]
  %v2268 = vld [vmem:[%s2265 + $0x10] sm:$0xff]
  %v2269 = vld [vmem:[%s2265 + $0x18] sm:$0xff]
  %v2270 = vld [vmem:[%s2265 + $0x20] sm:$0xff]
  %v2271 = vld [vmem:[%s2265 + $0x28] sm:$0xff]
  %v2272 = vld [vmem:[%s2265 + $0x30] sm:$0xff]
  %v2273 = vld [vmem:[%s2265 + $0x38] sm:$0xff]
  %v2274 = vld [vmem:[%s2265 + $0x40] sm:$0xff]
  %v2275 = vld [vmem:[%s2265 + $0x48] sm:$0xff]
  %v2276 = vld [vmem:[%s2265 + $0x50] sm:$0xff]
  %v2277 = vld [vmem:[%s2265 + $0x58] sm:$0xff]
  %v2278 = vld [vmem:[%s2265 + $0x60] sm:$0xff]
  %v2279 = vld [vmem:[%s2265 + $0x68] sm:$0xff]
  %v2280 = vld [vmem:[%s2265 + $0x70] sm:$0xff]
  %v2281 = vld [vmem:[%s2265 + $0x78] sm:$0xff]
  %v2298 = vunpack.c.l.b16 %v2266
  %v2299 = vunpack.c.h.b16 %v2266
  %v2300 = vunpack.c.l.b16 %v2267
  %v2301 = vunpack.c.h.b16 %v2267
  %v2302 = vunpack.c.l.b16 %v2268
  %v2303 = vunpack.c.h.b16 %v2268
  %v2304 = vunpack.c.l.b16 %v2269
  %v2305 = vunpack.c.h.b16 %v2269
  %v2306 = vunpack.c.l.b16 %v2270
  %v2307 = vunpack.c.h.b16 %v2270
  %v2308 = vunpack.c.l.b16 %v2271
  %v2309 = vunpack.c.h.b16 %v2271
  %v2310 = vunpack.c.l.b16 %v2272
  %v2311 = vunpack.c.h.b16 %v2272
  %v2312 = vunpack.c.l.b16 %v2273
  %v2313 = vunpack.c.h.b16 %v2273
  %v2314 = vunpack.c.l.b16 %v2274
  %v2315 = vunpack.c.h.b16 %v2274
  %v2316 = vunpack.c.l.b16 %v2275
  %v2317 = vunpack.c.h.b16 %v2275
  %v2318 = vunpack.c.l.b16 %v2276
  %v2319 = vunpack.c.h.b16 %v2276
  %v2320 = vunpack.c.l.b16 %v2277
  %v2321 = vunpack.c.h.b16 %v2277
  %v2322 = vunpack.c.l.b16 %v2278
  %v2323 = vunpack.c.h.b16 %v2278
  %v2324 = vunpack.c.l.b16 %v2279
  %v2325 = vunpack.c.h.b16 %v2279
  %v2326 = vunpack.c.l.b16 %v2280
  %v2327 = vunpack.c.h.b16 %v2280
  %v2328 = vunpack.c.l.b16 %v2281
  %v2329 = vunpack.c.h.b16 %v2281
  %v2330 = vpack.c.b16 %v2300, %v2298
  %v2331 = vpack.c.b16 %v2301, %v2299
  %v2332 = vpack.c.b16 %v2304, %v2302
  %v2333 = vpack.c.b16 %v2305, %v2303
  %v2334 = vpack.c.b16 %v2308, %v2306
  %v2335 = vpack.c.b16 %v2309, %v2307
  %v2336 = vpack.c.b16 %v2312, %v2310
  %v2337 = vpack.c.b16 %v2313, %v2311
  %v2338 = vpack.c.b16 %v2316, %v2314
  %v2339 = vpack.c.b16 %v2317, %v2315
  %v2340 = vpack.c.b16 %v2320, %v2318
  %v2341 = vpack.c.b16 %v2321, %v2319
  %v2342 = vpack.c.b16 %v2324, %v2322
  %v2343 = vpack.c.b16 %v2325, %v2323
  %v2344 = vpack.c.b16 %v2328, %v2326
  %v2345 = vpack.c.b16 %v2329, %v2327
  %2362 = vmatprep.subr.bf16.mxu0 %v2331
  %2363 = vmatpush1.bf16.msra.mxu0 %v2330
  %2364 = vmatprep.subr.bf16.mxu0 %v2333
  %2365 = vmatpush1.bf16.msra.mxu0 %v2332
  %2366 = vmatprep.subr.bf16.mxu0 %v2335
  %2367 = vmatpush1.bf16.msra.mxu0 %v2334
  %2368 = vmatprep.subr.bf16.mxu0 %v2337
  %2369 = vmatpush1.bf16.msra.mxu0 %v2336
  %2370 = vmatprep.subr.bf16.mxu0 %v2339
  %2371 = vmatpush1.bf16.msra.mxu0 %v2338
  %2372 = vmatprep.subr.bf16.mxu0 %v2341
  %2373 = vmatpush1.bf16.msra.mxu0 %v2340
  %2374 = vmatprep.subr.bf16.mxu0 %v2343
  %2375 = vmatpush1.bf16.msra.mxu0 %v2342
  %2376 = vmatprep.subr.bf16.mxu0 %v2345
  %2377 = vmatpush1.bf16.msra.mxu0 %v2344
  %2378 = vmatprep.subr.bf16.mxu0 0
  %2379 = vmatpush1.bf16.msra.mxu0 0
  %2380 = vmatprep.subr.bf16.mxu0 0
  %2381 = vmatpush1.bf16.msra.mxu0 0
  %2382 = vmatprep.subr.bf16.mxu0 0
  %2383 = vmatpush1.bf16.msra.mxu0 0
  %2384 = vmatprep.subr.bf16.mxu0 0
  %2385 = vmatpush1.bf16.msra.mxu0 0
  %2386 = vmatprep.subr.bf16.mxu0 0
  %2387 = vmatpush1.bf16.msra.mxu0 0
  %2388 = vmatprep.subr.bf16.mxu0 0
  %2389 = vmatpush1.bf16.msra.mxu0 0
  %2390 = vmatprep.subr.bf16.mxu0 0
  %2391 = vmatpush1.bf16.msra.mxu0 0
  %2392 = vmatprep.subr.bf16.mxu0 0
  %2393 = vmatpush1.bf16.msra.mxu0 0
  %2394 = vmatprep.mubr.bf16.mxu0 0
  %2395 = vmatmul.mubr.bf16.gmra.mrb[0].mxu0 %v2257
  %v2396 = vpop.f32.mrb[0].mxu0
  %v2397 = vadd.f32 0.0, %v2396
  %v2398 = vpop.f32.mrb[0].mxu0
  %v2399 = vadd.f32 0.0, %v2398
  %v2400 = vpop.f32.mrb[0].mxu0
  %v2401 = vadd.f32 0.0, %v2400
  %v2402 = vpop.f32.mrb[0].mxu0
  %v2403 = vadd.f32 0.0, %v2402
  %2404 = vmatprep.mubr.bf16.mxu0 0
  %2405 = vmatmul.mubr.bf16.gmra.mrb[0].mxu0 %v2258
  %v2406 = vpop.f32.mrb[0].mxu0
  %v2407 = vadd.f32 0.0, %v2406
  %v2408 = vpop.f32.mrb[0].mxu0
  %v2409 = vadd.f32 0.0, %v2408
  %v2410 = vpop.f32.mrb[0].mxu0
  %v2411 = vadd.f32 0.0, %v2410
  %v2412 = vpop.f32.mrb[0].mxu0
  %v2413 = vadd.f32 0.0, %v2412
  %2414 = vmatprep.mubr.bf16.mxu0 0
  %2415 = vmatmul.mubr.bf16.gmra.mrb[0].mxu0 %v2259
  %v2416 = vpop.f32.mrb[0].mxu0
  %v2417 = vadd.f32 0.0, %v2416
  %v2418 = vpop.f32.mrb[0].mxu0
  %v2419 = vadd.f32 0.0, %v2418
  %v2420 = vpop.f32.mrb[0].mxu0
  %v2421 = vadd.f32 0.0, %v2420
  %v2422 = vpop.f32.mrb[0].mxu0
  %v2423 = vadd.f32 0.0, %v2422
  %2424 = vmatprep.mubr.bf16.mxu0 0
  %2425 = vmatmul.mubr.bf16.gmra.mrb[0].mxu0 %v2260
  %v2426 = vpop.f32.mrb[0].mxu0
  %v2427 = vadd.f32 0.0, %v2426
  %v2428 = vpop.f32.mrb[0].mxu0
  %v2429 = vadd.f32 0.0, %v2428
  %v2430 = vpop.f32.mrb[0].mxu0
  %v2431 = vadd.f32 0.0, %v2430
  %v2432 = vpop.f32.mrb[0].mxu0
  %v2433 = vadd.f32 0.0, %v2432
  %2434 = vmatprep.mubr.bf16.mxu0 0
  %2435 = vmatmul.mubr.bf16.gmra.mrb[0].mxu0 %v2261
  %v2436 = vpop.f32.mrb[0].mxu0
  %v2437 = vadd.f32 0.0, %v2436
  %v2438 = vpop.f32.mrb[0].mxu0
  %v2439 = vadd.f32 0.0, %v2438
  %v2440 = vpop.f32.mrb[0].mxu0
  %v2441 = vadd.f32 0.0, %v2440
  %v2442 = vpop.f32.mrb[0].mxu0
  %v2443 = vadd.f32 0.0, %v2442
  %2444 = vmatprep.mubr.bf16.mxu0 0
  %2445 = vmatmul.mubr.bf16.gmra.mrb[0].mxu0 %v2262
  %v2446 = vpop.f32.mrb[0].mxu0
  %v2447 = vadd.f32 0.0, %v2446
  %v2448 = vpop.f32.mrb[0].mxu0
  %v2449 = vadd.f32 0.0, %v2448
  %v2450 = vpop.f32.mrb[0].mxu0
  %v2451 = vadd.f32 0.0, %v2450
  %v2452 = vpop.f32.mrb[0].mxu0
  %v2453 = vadd.f32 0.0, %v2452
  %2454 = vmatprep.mubr.bf16.mxu0 0
  %2455 = vmatmul.mubr.bf16.gmra.mrb[0].mxu0 %v2263
  %v2456 = vpop.f32.mrb[0].mxu0
  %v2457 = vadd.f32 0.0, %v2456
  %v2458 = vpop.f32.mrb[0].mxu0
  %v2459 = vadd.f32 0.0, %v2458
  %v2460 = vpop.f32.mrb[0].mxu0
  %v2461 = vadd.f32 0.0, %v2460
  %v2462 = vpop.f32.mrb[0].mxu0
  %v2463 = vadd.f32 0.0, %v2462
  %2464 = vmatprep.mubr.bf16.mxu0 0
  %2465 = vmatmul.mubr.bf16.gmra.mrb[0].mxu0 %v2264
  %v2466 = vpop.f32.mrb[0].mxu0
  %v2467 = vadd.f32 0.0, %v2466
  %v2468 = vpop.f32.mrb[0].mxu0
  %v2469 = vadd.f32 0.0, %v2468
  %v2470 = vpop.f32.mrb[0].mxu0
  %v2471 = vadd.f32 0.0, %v2470
  %v2472 = vpop.f32.mrb[0].mxu0
  %v2473 = vadd.f32 0.0, %v2472
  %2474 = vdwg.mxu0
  %v2475 = vadd.f32 %v2209, %v2397
  %v2476 = vadd.f32 %v2210, %v2399
  %v2477 = vadd.f32 %v2211, %v2401
  %v2478 = vadd.f32 %v2212, %v2403
  %v2479 = vadd.f32 %v2213, %v2407
  %v2480 = vadd.f32 %v2214, %v2409
  %v2481 = vadd.f32 %v2215, %v2411
  %v2482 = vadd.f32 %v2216, %v2413
  %v2483 = vadd.f32 %v2217, %v2417
  %v2484 = vadd.f32 %v2218, %v2419
  %v2485 = vadd.f32 %v2219, %v2421
  %v2486 = vadd.f32 %v2220, %v2423
  %v2487 = vadd.f32 %v2221, %v2427
  %v2488 = vadd.f32 %v2222, %v2429
  %v2489 = vadd.f32 %v2223, %v2431
  %v2490 = vadd.f32 %v2224, %v2433
  %v2491 = vadd.f32 %v2225, %v2437
  %v2492 = vadd.f32 %v2226, %v2439
  %v2493 = vadd.f32 %v2227, %v2441
  %v2494 = vadd.f32 %v2228, %v2443
  %v2495 = vadd.f32 %v2229, %v2447
  %v2496 = vadd.f32 %v2230, %v2449
  %v2497 = vadd.f32 %v2231, %v2451
  %v2498 = vadd.f32 %v2232, %v2453
  %v2499 = vadd.f32 %v2233, %v2457
  %v2500 = vadd.f32 %v2234, %v2459
  %v2501 = vadd.f32 %v2235, %v2461
  %v2502 = vadd.f32 %v2236, %v2463
  %v2503 = vadd.f32 %v2237, %v2467
  %v2504 = vadd.f32 %v2238, %v2469
  %v2505 = vadd.f32 %v2239, %v2471
  %v2506 = vadd.f32 %v2240, %v2473
  %v2507 = vmax.f32 %v2475, 0.0
  %v2508 = vmax.f32 %v2476, 0.0
  %v2509 = vmax.f32 %v2477, 0.0
  %v2510 = vmax.f32 %v2478, 0.0
  %v2511 = vmax.f32 %v2479, 0.0
  %v2512 = vmax.f32 %v2480, 0.0
  %v2513 = vmax.f32 %v2481, 0.0
  %v2514 = vmax.f32 %v2482, 0.0
  %v2515 = vmax.f32 %v2483, 0.0
  %v2516 = vmax.f32 %v2484, 0.0
  %v2517 = vmax.f32 %v2485, 0.0
  %v2518 = vmax.f32 %v2486, 0.0
  %v2519 = vmax.f32 %v2487, 0.0
  %v2520 = vmax.f32 %v2488, 0.0
  %v2521 = vmax.f32 %v2489, 0.0
  %v2522 = vmax.f32 %v2490, 0.0
  %v2523 = vmax.f32 %v2491, 0.0
  %v2524 = vmax.f32 %v2492, 0.0
  %v2525 = vmax.f32 %v2493, 0.0
  %v2526 = vmax.f32 %v2494, 0.0
  %v2527 = vmax.f32 %v2495, 0.0
  %v2528 = vmax.f32 %v2496, 0.0
  %v2529 = vmax.f32 %v2497, 0.0
  %v2530 = vmax.f32 %v2498, 0.0
  %v2531 = vmax.f32 %v2499, 0.0
  %v2532 = vmax.f32 %v2500, 0.0
  %v2533 = vmax.f32 %v2501, 0.0
  %v2534 = vmax.f32 %v2502, 0.0
  %v2535 = vmax.f32 %v2503, 0.0
  %v2536 = vmax.f32 %v2504, 0.0
  %v2537 = vmax.f32 %v2505, 0.0
  %v2538 = vmax.f32 %v2506, 0.0
  %v2539 = vmax.f32 %v2507, %v2508
  %v2540 = vmax.f32 %v2509, %v2510
  %v2541 = vmax.f32 %v2511, %v2512
  %v2542 = vmax.f32 %v2513, %v2514
  %v2543 = vmax.f32 %v2515, %v2516
  %v2544 = vmax.f32 %v2517, %v2518
  %v2545 = vmax.f32 %v2519, %v2520
  %v2546 = vmax.f32 %v2521, %v2522
  %v2547 = vmax.f32 %v2523, %v2524
  %v2548 = vmax.f32 %v2525, %v2526
  %v2549 = vmax.f32 %v2527, %v2528
  %v2550 = vmax.f32 %v2529, %v2530
  %v2551 = vmax.f32 %v2531, %v2532
  %v2552 = vmax.f32 %v2533, %v2534
  %v2553 = vmax.f32 %v2535, %v2536
  %v2554 = vmax.f32 %v2537, %v2538
  %v2555 = vpack.c.bf16 %v2540, %v2539
  %v2556 = vpack.c.bf16 %v2542, %v2541
  %v2557 = vpack.c.bf16 %v2544, %v2543
  %v2558 = vpack.c.bf16 %v2546, %v2545
  %v2559 = vpack.c.bf16 %v2548, %v2547
  %v2560 = vpack.c.bf16 %v2550, %v2549
  %v2561 = vpack.c.bf16 %v2552, %v2551
  %v2562 = vpack.c.bf16 %v2554, %v2553
  %v2563 = vld [vmem:[%s7] sm:$0xf]
  %v2564 = vld [vmem:[%s7 + $0x4] sm:$0xf]
  %v2565 = vld [vmem:[%s7 + $0x8] sm:$0xf]
  %v2566 = vld [vmem:[%s7 + $0xc] sm:$0xf]
  %v2567 = vld [vmem:[%s7 + $0x10] sm:$0xf]
  %v2568 = vld [vmem:[%s7 + $0x14] sm:$0xf]
  %v2569 = vld [vmem:[%s7 + $0x18] sm:$0xf]
  %v2577 = vunpack.c.l.b16 %v2563
  %v2578 = vunpack.c.l.b16 %v2564
  %v2579 = vunpack.c.l.b16 %v2565
  %v2580 = vunpack.c.l.b16 %v2566
  %v2581 = vunpack.c.l.b16 %v2567
  %v2582 = vunpack.c.l.b16 %v2568
  %v2583 = vunpack.c.l.b16 %v2569
  %v2584 = vpack.c.b16 %v2578, %v2577
  %v2585 = vpack.c.b16 %v2580, %v2579
  %v2586 = vpack.c.b16 %v2582, %v2581
  %v2587 = vpack.c.b16 %v2583, %v2583
  %vm2588 = vcmask 1031168
  %v2590 = vsel %vm2588, %v2584, 0
  %v2593 = vsel %vm2588, %v2585, 0
  %v2596 = vsel %vm2588, %v2586, 0
  %v2599 = vsel %vm2588, %v2587, 0
  %v2602 = vsel %vm1356, %v2562, 0
  %2604 = vmatprep.subr.bf16.mxu0 0
  %2605 = vmatpush1.bf16.msra.mxu0 %v2555
  %2606 = vmatprep.subr.bf16.mxu0 0
  %2607 = vmatpush1.bf16.msra.mxu0 %v2556
  %2608 = vmatprep.subr.bf16.mxu0 0
  %2609 = vmatpush1.bf16.msra.mxu0 %v2557
  %2610 = vmatprep.subr.bf16.mxu0 0
  %2611 = vmatpush1.bf16.msra.mxu0 %v2558
  %2612 = vmatprep.subr.bf16.mxu0 0
  %2613 = vmatpush1.bf16.msra.mxu0 %v2559
  %2614 = vmatprep.subr.bf16.mxu0 0
  %2615 = vmatpush1.bf16.msra.mxu0 %v2560
  %2616 = vmatprep.subr.bf16.mxu0 0
  %2617 = vmatpush1.bf16.msra.mxu0 %v2561
  %2618 = vmatprep.subr.bf16.mxu0 0
  %2619 = vmatpush1.bf16.msra.mxu0 %v2602
  %2620 = vmatprep.subr.bf16.mxu0 0
  %2621 = vmatpush1.bf16.msra.mxu0 0
  %2622 = vmatprep.subr.bf16.mxu0 0
  %2623 = vmatpush1.bf16.msra.mxu0 0
  %2624 = vmatprep.subr.bf16.mxu0 0
  %2625 = vmatpush1.bf16.msra.mxu0 0
  %2626 = vmatprep.subr.bf16.mxu0 0
  %2627 = vmatpush1.bf16.msra.mxu0 0
  %2628 = vmatprep.subr.bf16.mxu0 0
  %2629 = vmatpush1.bf16.msra.mxu0 0
  %2630 = vmatprep.subr.bf16.mxu0 0
  %2631 = vmatpush1.bf16.msra.mxu0 0
  %2632 = vmatprep.subr.bf16.mxu0 0
  %2633 = vmatpush1.bf16.msra.mxu0 0
  %2634 = vmatprep.subr.bf16.mxu0 0
  %2635 = vmatpush1.bf16.msra.mxu0 0
  %2636 = vmatprep.mubr.bf16.mxu0 0
  %2637 = vmatmul.mubr.bf16.gmra.mrb[0].mxu0 %v2590
  %v2638 = vpop.f32.mrb[0].mxu0
  %v2639 = vadd.f32 0.0, %v2638
  %v2640 = vpop.f32.mrb[0].mxu0
  %v2641 = vpop.f32.mrb[0].mxu0
  %v2642 = vadd.f32 0.0, %v2641
  %v2643 = vpop.f32.mrb[0].mxu0
  %2644 = vmatprep.mubr.bf16.mxu0 0
  %2645 = vmatmul.mubr.bf16.gmra.mrb[0].mxu0 %v2593
  %v2646 = vpop.f32.mrb[0].mxu0
  %v2647 = vadd.f32 0.0, %v2646
  %v2648 = vpop.f32.mrb[0].mxu0
  %v2649 = vpop.f32.mrb[0].mxu0
  %v2650 = vadd.f32 0.0, %v2649
  %v2651 = vpop.f32.mrb[0].mxu0
  %2652 = vmatprep.mubr.bf16.mxu0 0
  %2653 = vmatmul.mubr.bf16.gmra.mrb[0].mxu0 %v2596
  %v2654 = vpop.f32.mrb[0].mxu0
  %v2655 = vadd.f32 0.0, %v2654
  %v2656 = vpop.f32.mrb[0].mxu0
  %v2657 = vpop.f32.mrb[0].mxu0
  %v2658 = vadd.f32 0.0, %v2657
  %v2659 = vpop.f32.mrb[0].mxu0
  %2660 = vmatprep.mubr.bf16.mxu0 0
  %2661 = vmatmul.mubr.bf16.gmra.mrb[0].mxu0 %v2599
  %v2662 = vpop.f32.mrb[0].mxu0
  %v2663 = vadd.f32 0.0, %v2662
  %v2664 = vpop.f32.mrb[0].mxu0
  %v2665 = vpop.f32.mrb[0].mxu0
  %v2666 = vpop.f32.mrb[0].mxu0
  %2667 = vdwg.mxu0
  %v2668 = vld [vmem:[%s8] sm:$0xf]
  %v2669 = vld [vmem:[%s8 + $0x4] sm:$0xf]
  %v2670 = vld [vmem:[%s8 + $0x8] sm:$0xf]
  %v2671 = vld [vmem:[%s8 + $0xc] sm:$0xf]
  %v2672 = vld [vmem:[%s8 + $0x10] sm:$0xf]
  %v2673 = vld [vmem:[%s8 + $0x14] sm:$0xf]
  %v2674 = vld [vmem:[%s8 + $0x18] sm:$0xf]
  %v2682 = vunpack.c.l.b16 %v2668
  %v2683 = vunpack.c.l.b16 %v2669
  %v2684 = vunpack.c.l.b16 %v2670
  %v2685 = vunpack.c.l.b16 %v2671
  %v2686 = vunpack.c.l.b16 %v2672
  %v2687 = vunpack.c.l.b16 %v2673
  %v2688 = vunpack.c.l.b16 %v2674
  %v2689 = vpack.c.b16 %v2683, %v2682
  %v2690 = vpack.c.b16 %v2685, %v2684
  %v2691 = vpack.c.b16 %v2687, %v2686
  %v2692 = vpack.c.b16 %v2688, %v2688
  %v2694 = vsel %vm2588, %v2689, 0
  %v2697 = vsel %vm2588, %v2690, 0
  %v2700 = vsel %vm2588, %v2691, 0
  %v2703 = vsel %vm2588, %v2692, 0
  %2705 = vmatprep.subr.bf16.mxu0 0
  %2706 = vmatpush1.bf16.msra.mxu0 %v2555
  %2707 = vmatprep.subr.bf16.mxu0 0
  %2708 = vmatpush1.bf16.msra.mxu0 %v2556
  %2709 = vmatprep.subr.bf16.mxu0 0
  %2710 = vmatpush1.bf16.msra.mxu0 %v2557
  %2711 = vmatprep.subr.bf16.mxu0 0
  %2712 = vmatpush1.bf16.msra.mxu0 %v2558
  %2713 = vmatprep.subr.bf16.mxu0 0
  %2714 = vmatpush1.bf16.msra.mxu0 %v2559
  %2715 = vmatprep.subr.bf16.mxu0 0
  %2716 = vmatpush1.bf16.msra.mxu0 %v2560
  %2717 = vmatprep.subr.bf16.mxu0 0
  %2718 = vmatpush1.bf16.msra.mxu0 %v2561
  %2719 = vmatprep.subr.bf16.mxu0 0
  %2720 = vmatpush1.bf16.msra.mxu0 %v2602
  %2721 = vmatprep.subr.bf16.mxu0 0
  %2722 = vmatpush1.bf16.msra.mxu0 0
  %2723 = vmatprep.subr.bf16.mxu0 0
  %2724 = vmatpush1.bf16.msra.mxu0 0
  %2725 = vmatprep.subr.bf16.mxu0 0
  %2726 = vmatpush1.bf16.msra.mxu0 0
  %2727 = vmatprep.subr.bf16.mxu0 0
  %2728 = vmatpush1.bf16.msra.mxu0 0
  %2729 = vmatprep.subr.bf16.mxu0 0
  %2730 = vmatpush1.bf16.msra.mxu0 0
  %2731 = vmatprep.subr.bf16.mxu0 0
  %2732 = vmatpush1.bf16.msra.mxu0 0
  %2733 = vmatprep.subr.bf16.mxu0 0
  %2734 = vmatpush1.bf16.msra.mxu0 0
  %2735 = vmatprep.subr.bf16.mxu0 0
  %2736 = vmatpush1.bf16.msra.mxu0 0
  %2737 = vmatprep.mubr.bf16.mxu0 0
  %2738 = vmatmul.mubr.bf16.gmra.mrb[0].mxu0 %v2694
  %v2739 = vpop.f32.mrb[0].mxu0
  %v2740 = vadd.f32 0.0, %v2739
  %v2741 = vpop.f32.mrb[0].mxu0
  %v2742 = vpop.f32.mrb[0].mxu0
  %v2743 = vadd.f32 0.0, %v2742
  %v2744 = vpop.f32.mrb[0].mxu0
  %2745 = vmatprep.mubr.bf16.mxu0 0
  %2746 = vmatmul.mubr.bf16.gmra.mrb[0].mxu0 %v2697
  %v2747 = vpop.f32.mrb[0].mxu0
  %v2748 = vadd.f32 0.0, %v2747
  %v2749 = vpop.f32.mrb[0].mxu0
  %v2750 = vpop.f32.mrb[0].mxu0
  %v2751 = vadd.f32 0.0, %v2750
  %v2752 = vpop.f32.mrb[0].mxu0
  %2753 = vmatprep.mubr.bf16.mxu0 0
  %2754 = vmatmul.mubr.bf16.gmra.mrb[0].mxu0 %v2700
  %v2755 = vpop.f32.mrb[0].mxu0
  %v2756 = vadd.f32 0.0, %v2755
  %v2757 = vpop.f32.mrb[0].mxu0
  %v2758 = vpop.f32.mrb[0].mxu0
  %v2759 = vadd.f32 0.0, %v2758
  %v2760 = vpop.f32.mrb[0].mxu0
  %2761 = vmatprep.mubr.bf16.mxu0 0
  %2762 = vmatmul.mubr.bf16.gmra.mrb[0].mxu0 %v2703
  %v2763 = vpop.f32.mrb[0].mxu0
  %v2764 = vadd.f32 0.0, %v2763
  %v2765 = vpop.f32.mrb[0].mxu0
  %v2766 = vpop.f32.mrb[0].mxu0
  %v2767 = vpop.f32.mrb[0].mxu0
  %2768 = vdwg.mxu0
  %v2769 = vmax.f32 %v2639, %v2740
  %v2770 = vmax.f32 %v2642, %v2743
  %v2771 = vmax.f32 %v2647, %v2748
  %v2772 = vmax.f32 %v2650, %v2751
  %v2773 = vmax.f32 %v2655, %v2756
  %v2774 = vmax.f32 %v2658, %v2759
  %v2775 = vmax.f32 %v2663, %v2764
  %v2776 = vld [vmem:[%s10] sm:$0x1]
  %v2777 = vpack.c.bf16 %v2769, %v2769
  %v2778 = vld [vmem:[%s9] sm:$0xf]
  %v2779 = vld [vmem:[%s9 + $0x4] sm:$0xf]
  %v2780 = vld [vmem:[%s9 + $0x8] sm:$0xf]
  %v2781 = vld [vmem:[%s9 + $0xc] sm:$0xf]
  %v2782 = vld [vmem:[%s9 + $0x10] sm:$0xf]
  %v2783 = vld [vmem:[%s9 + $0x14] sm:$0xf]
  %v2784 = vld [vmem:[%s9 + $0x18] sm:$0xf]
  %v2785 = vld [vmem:[%s9 + $0x1c] sm:$0xf]
  %v2786 = vld [vmem:[%s9 + $0x20] sm:$0xf]
  %v2787 = vld [vmem:[%s9 + $0x24] sm:$0xf]
  %v2788 = vld [vmem:[%s9 + $0x28] sm:$0xf]
  %v2789 = vld [vmem:[%s9 + $0x2c] sm:$0xf]
  %v2790 = vld [vmem:[%s9 + $0x30] sm:$0xf]
  %v2791 = vld [vmem:[%s9 + $0x34] sm:$0xf]
  %v2792 = vld [vmem:[%s9 + $0x38] sm:$0xf]
  %v2793 = vld [vmem:[%s9 + $0x3c] sm:$0xf]
  %v2810 = vunpack.c.l.b16 %v2778
  %v2811 = vunpack.c.l.b16 %v2779
  %v2812 = vunpack.c.l.b16 %v2780
  %v2813 = vunpack.c.l.b16 %v2781
  %v2814 = vunpack.c.l.b16 %v2782
  %v2815 = vunpack.c.l.b16 %v2783
  %v2816 = vunpack.c.l.b16 %v2784
  %v2817 = vunpack.c.l.b16 %v2785
  %v2818 = vunpack.c.l.b16 %v2786
  %v2819 = vunpack.c.l.b16 %v2787
  %v2820 = vunpack.c.l.b16 %v2788
  %v2821 = vunpack.c.l.b16 %v2789
  %v2822 = vunpack.c.l.b16 %v2790
  %v2823 = vunpack.c.l.b16 %v2791
  %v2824 = vunpack.c.l.b16 %v2792
  %v2825 = vunpack.c.l.b16 %v2793
  %v2826 = vpack.c.b16 %v2811, %v2810
  %v2827 = vpack.c.b16 %v2813, %v2812
  %v2828 = vpack.c.b16 %v2815, %v2814
  %v2829 = vpack.c.b16 %v2817, %v2816
  %v2830 = vpack.c.b16 %v2819, %v2818
  %v2831 = vpack.c.b16 %v2821, %v2820
  %v2832 = vpack.c.b16 %v2823, %v2822
  %v2833 = vpack.c.b16 %v2825, %v2824
  %2842 = vmatprep.subr.bf16.mxu0 0
  %2843 = vmatpush1.bf16.msra.mxu0 %v2826
  %2844 = vmatprep.subr.bf16.mxu0 0
  %2845 = vmatpush1.bf16.msra.mxu0 %v2827
  %2846 = vmatprep.subr.bf16.mxu0 0
  %2847 = vmatpush1.bf16.msra.mxu0 %v2828
  %2848 = vmatprep.subr.bf16.mxu0 0
  %2849 = vmatpush1.bf16.msra.mxu0 %v2829
  %2850 = vmatprep.subr.bf16.mxu0 0
  %2851 = vmatpush1.bf16.msra.mxu0 %v2830
  %2852 = vmatprep.subr.bf16.mxu0 0
  %2853 = vmatpush1.bf16.msra.mxu0 %v2831
  %2854 = vmatprep.subr.bf16.mxu0 0
  %2855 = vmatpush1.bf16.msra.mxu0 %v2832
  %2856 = vmatprep.subr.bf16.mxu0 0
  %2857 = vmatpush1.bf16.msra.mxu0 %v2833
  %2858 = vmatprep.subr.bf16.mxu0 0
  %2859 = vmatpush1.bf16.msra.mxu0 0
  %2860 = vmatprep.subr.bf16.mxu0 0
  %2861 = vmatpush1.bf16.msra.mxu0 0
  %2862 = vmatprep.subr.bf16.mxu0 0
  %2863 = vmatpush1.bf16.msra.mxu0 0
  %2864 = vmatprep.subr.bf16.mxu0 0
  %2865 = vmatpush1.bf16.msra.mxu0 0
  %2866 = vmatprep.subr.bf16.mxu0 0
  %2867 = vmatpush1.bf16.msra.mxu0 0
  %2868 = vmatprep.subr.bf16.mxu0 0
  %2869 = vmatpush1.bf16.msra.mxu0 0
  %2870 = vmatprep.subr.bf16.mxu0 0
  %2871 = vmatpush1.bf16.msra.mxu0 0
  %2872 = vmatprep.subr.bf16.mxu0 0
  %2873 = vmatpush1.bf16.msra.mxu0 0
  %2874 = vmatprep.mubr.bf16.mxu0 0
  %2875 = vmatmul.mubr.bf16.gmra.mrb[0].mxu0 %v2777
  %v2876 = vpop.f32.mrb[0].mxu0
  %v2877 = vadd.f32 0.0, %v2876
  %v2878 = vpop.f32.mrb[0].mxu0
  %v2879 = vpop.f32.mrb[0].mxu0
  %v2880 = vpop.f32.mrb[0].mxu0
  %2881 = vdwg.mxu0
  %v2883 = vlaneseq
  %v2884 = vshrl.u32 %v2883, 7
  %v2885 = vsub.s32 0, %v2884
  %v2886 = vrot.slane %v2776, %v2885
  %v2888 = vadd.f32 %v2886, %v2877
  %v2889 = vpack.c.bf16 %v2770, %v2770
  %s2890 = scalar_lea.vmem %s9, 64
  %v2891 = vld [vmem:[%s2890] sm:$0xf]
  %v2892 = vld [vmem:[%s2890 + $0x4] sm:$0xf]
  %v2893 = vld [vmem:[%s2890 + $0x8] sm:$0xf]
  %v2894 = vld [vmem:[%s2890 + $0xc] sm:$0xf]
  %v2895 = vld [vmem:[%s2890 + $0x10] sm:$0xf]
  %v2896 = vld [vmem:[%s2890 + $0x14] sm:$0xf]
  %v2897 = vld [vmem:[%s2890 + $0x18] sm:$0xf]
  %v2898 = vld [vmem:[%s2890 + $0x1c] sm:$0xf]
  %v2899 = vld [vmem:[%s2890 + $0x20] sm:$0xf]
  %v2900 = vld [vmem:[%s2890 + $0x24] sm:$0xf]
  %v2901 = vld [vmem:[%s2890 + $0x28] sm:$0xf]
  %v2902 = vld [vmem:[%s2890 + $0x2c] sm:$0xf]
  %v2903 = vld [vmem:[%s2890 + $0x30] sm:$0xf]
  %v2904 = vld [vmem:[%s2890 + $0x34] sm:$0xf]
  %v2905 = vld [vmem:[%s2890 + $0x38] sm:$0xf]
  %v2906 = vld [vmem:[%s2890 + $0x3c] sm:$0xf]
  %v2923 = vunpack.c.l.b16 %v2891
  %v2924 = vunpack.c.l.b16 %v2892
  %v2925 = vunpack.c.l.b16 %v2893
  %v2926 = vunpack.c.l.b16 %v2894
  %v2927 = vunpack.c.l.b16 %v2895
  %v2928 = vunpack.c.l.b16 %v2896
  %v2929 = vunpack.c.l.b16 %v2897
  %v2930 = vunpack.c.l.b16 %v2898
  %v2931 = vunpack.c.l.b16 %v2899
  %v2932 = vunpack.c.l.b16 %v2900
  %v2933 = vunpack.c.l.b16 %v2901
  %v2934 = vunpack.c.l.b16 %v2902
  %v2935 = vunpack.c.l.b16 %v2903
  %v2936 = vunpack.c.l.b16 %v2904
  %v2937 = vunpack.c.l.b16 %v2905
  %v2938 = vunpack.c.l.b16 %v2906
  %v2939 = vpack.c.b16 %v2924, %v2923
  %v2940 = vpack.c.b16 %v2926, %v2925
  %v2941 = vpack.c.b16 %v2928, %v2927
  %v2942 = vpack.c.b16 %v2930, %v2929
  %v2943 = vpack.c.b16 %v2932, %v2931
  %v2944 = vpack.c.b16 %v2934, %v2933
  %v2945 = vpack.c.b16 %v2936, %v2935
  %v2946 = vpack.c.b16 %v2938, %v2937
  %2955 = vmatprep.subr.bf16.mxu0 0
  %2956 = vmatpush1.bf16.msra.mxu0 %v2939
  %2957 = vmatprep.subr.bf16.mxu0 0
  %2958 = vmatpush1.bf16.msra.mxu0 %v2940
  %2959 = vmatprep.subr.bf16.mxu0 0
  %2960 = vmatpush1.bf16.msra.mxu0 %v2941
  %2961 = vmatprep.subr.bf16.mxu0 0
  %2962 = vmatpush1.bf16.msra.mxu0 %v2942
  %2963 = vmatprep.subr.bf16.mxu0 0
  %2964 = vmatpush1.bf16.msra.mxu0 %v2943
  %2965 = vmatprep.subr.bf16.mxu0 0
  %2966 = vmatpush1.bf16.msra.mxu0 %v2944
  %2967 = vmatprep.subr.bf16.mxu0 0
  %2968 = vmatpush1.bf16.msra.mxu0 %v2945
  %2969 = vmatprep.subr.bf16.mxu0 0
  %2970 = vmatpush1.bf16.msra.mxu0 %v2946
  %2971 = vmatprep.subr.bf16.mxu0 0
  %2972 = vmatpush1.bf16.msra.mxu0 0
  %2973 = vmatprep.subr.bf16.mxu0 0
  %2974 = vmatpush1.bf16.msra.mxu0 0
  %2975 = vmatprep.subr.bf16.mxu0 0
  %2976 = vmatpush1.bf16.msra.mxu0 0
  %2977 = vmatprep.subr.bf16.mxu0 0
  %2978 = vmatpush1.bf16.msra.mxu0 0
  %2979 = vmatprep.subr.bf16.mxu0 0
  %2980 = vmatpush1.bf16.msra.mxu0 0
  %2981 = vmatprep.subr.bf16.mxu0 0
  %2982 = vmatpush1.bf16.msra.mxu0 0
  %2983 = vmatprep.subr.bf16.mxu0 0
  %2984 = vmatpush1.bf16.msra.mxu0 0
  %2985 = vmatprep.subr.bf16.mxu0 0
  %2986 = vmatpush1.bf16.msra.mxu0 0
  %2987 = vmatprep.mubr.bf16.mxu0 0
  %2988 = vmatmul.mubr.bf16.gmra.mrb[0].mxu0 %v2889
  %v2989 = vpop.f32.mrb[0].mxu0
  %v2990 = vadd.f32 0.0, %v2989
  %v2991 = vpop.f32.mrb[0].mxu0
  %v2992 = vpop.f32.mrb[0].mxu0
  %v2993 = vpop.f32.mrb[0].mxu0
  %2994 = vdwg.mxu0
  %v2995 = vadd.f32 %v2888, %v2990
  %v2996 = vpack.c.bf16 %v2771, %v2771
  %s2997 = scalar_lea.vmem %s9, 128
  %v2998 = vld [vmem:[%s2997] sm:$0xf]
  %v2999 = vld [vmem:[%s2997 + $0x4] sm:$0xf]
  %v3000 = vld [vmem:[%s2997 + $0x8] sm:$0xf]
  %v3001 = vld [vmem:[%s2997 + $0xc] sm:$0xf]
  %v3002 = vld [vmem:[%s2997 + $0x10] sm:$0xf]
  %v3003 = vld [vmem:[%s2997 + $0x14] sm:$0xf]
  %v3004 = vld [vmem:[%s2997 + $0x18] sm:$0xf]
  %v3005 = vld [vmem:[%s2997 + $0x1c] sm:$0xf]
  %v3006 = vld [vmem:[%s2997 + $0x20] sm:$0xf]
  %v3007 = vld [vmem:[%s2997 + $0x24] sm:$0xf]
  %v3008 = vld [vmem:[%s2997 + $0x28] sm:$0xf]
  %v3009 = vld [vmem:[%s2997 + $0x2c] sm:$0xf]
  %v3010 = vld [vmem:[%s2997 + $0x30] sm:$0xf]
  %v3011 = vld [vmem:[%s2997 + $0x34] sm:$0xf]
  %v3012 = vld [vmem:[%s2997 + $0x38] sm:$0xf]
  %v3013 = vld [vmem:[%s2997 + $0x3c] sm:$0xf]
  %v3030 = vunpack.c.l.b16 %v2998
  %v3031 = vunpack.c.l.b16 %v2999
  %v3032 = vunpack.c.l.b16 %v3000
  %v3033 = vunpack.c.l.b16 %v3001
  %v3034 = vunpack.c.l.b16 %v3002
  %v3035 = vunpack.c.l.b16 %v3003
  %v3036 = vunpack.c.l.b16 %v3004
  %v3037 = vunpack.c.l.b16 %v3005
  %v3038 = vunpack.c.l.b16 %v3006
  %v3039 = vunpack.c.l.b16 %v3007
  %v3040 = vunpack.c.l.b16 %v3008
  %v3041 = vunpack.c.l.b16 %v3009
  %v3042 = vunpack.c.l.b16 %v3010
  %v3043 = vunpack.c.l.b16 %v3011
  %v3044 = vunpack.c.l.b16 %v3012
  %v3045 = vunpack.c.l.b16 %v3013
  %v3046 = vpack.c.b16 %v3031, %v3030
  %v3047 = vpack.c.b16 %v3033, %v3032
  %v3048 = vpack.c.b16 %v3035, %v3034
  %v3049 = vpack.c.b16 %v3037, %v3036
  %v3050 = vpack.c.b16 %v3039, %v3038
  %v3051 = vpack.c.b16 %v3041, %v3040
  %v3052 = vpack.c.b16 %v3043, %v3042
  %v3053 = vpack.c.b16 %v3045, %v3044
  %3062 = vmatprep.subr.bf16.mxu0 0
  %3063 = vmatpush1.bf16.msra.mxu0 %v3046
  %3064 = vmatprep.subr.bf16.mxu0 0
  %3065 = vmatpush1.bf16.msra.mxu0 %v3047
  %3066 = vmatprep.subr.bf16.mxu0 0
  %3067 = vmatpush1.bf16.msra.mxu0 %v3048
  %3068 = vmatprep.subr.bf16.mxu0 0
  %3069 = vmatpush1.bf16.msra.mxu0 %v3049
  %3070 = vmatprep.subr.bf16.mxu0 0
  %3071 = vmatpush1.bf16.msra.mxu0 %v3050
  %3072 = vmatprep.subr.bf16.mxu0 0
  %3073 = vmatpush1.bf16.msra.mxu0 %v3051
  %3074 = vmatprep.subr.bf16.mxu0 0
  %3075 = vmatpush1.bf16.msra.mxu0 %v3052
  %3076 = vmatprep.subr.bf16.mxu0 0
  %3077 = vmatpush1.bf16.msra.mxu0 %v3053
  %3078 = vmatprep.subr.bf16.mxu0 0
  %3079 = vmatpush1.bf16.msra.mxu0 0
  %3080 = vmatprep.subr.bf16.mxu0 0
  %3081 = vmatpush1.bf16.msra.mxu0 0
  %3082 = vmatprep.subr.bf16.mxu0 0
  %3083 = vmatpush1.bf16.msra.mxu0 0
  %3084 = vmatprep.subr.bf16.mxu0 0
  %3085 = vmatpush1.bf16.msra.mxu0 0
  %3086 = vmatprep.subr.bf16.mxu0 0
  %3087 = vmatpush1.bf16.msra.mxu0 0
  %3088 = vmatprep.subr.bf16.mxu0 0
  %3089 = vmatpush1.bf16.msra.mxu0 0
  %3090 = vmatprep.subr.bf16.mxu0 0
  %3091 = vmatpush1.bf16.msra.mxu0 0
  %3092 = vmatprep.subr.bf16.mxu0 0
  %3093 = vmatpush1.bf16.msra.mxu0 0
  %3094 = vmatprep.mubr.bf16.mxu0 0
  %3095 = vmatmul.mubr.bf16.gmra.mrb[0].mxu0 %v2996
  %v3096 = vpop.f32.mrb[0].mxu0
  %v3097 = vadd.f32 0.0, %v3096
  %v3098 = vpop.f32.mrb[0].mxu0
  %v3099 = vpop.f32.mrb[0].mxu0
  %v3100 = vpop.f32.mrb[0].mxu0
  %3101 = vdwg.mxu0
  %v3102 = vadd.f32 %v2995, %v3097
  %v3103 = vpack.c.bf16 %v2772, %v2772
  %s3104 = scalar_lea.vmem %s9, 192
  %v3105 = vld [vmem:[%s3104] sm:$0xf]
  %v3106 = vld [vmem:[%s3104 + $0x4] sm:$0xf]
  %v3107 = vld [vmem:[%s3104 + $0x8] sm:$0xf]
  %v3108 = vld [vmem:[%s3104 + $0xc] sm:$0xf]
  %v3109 = vld [vmem:[%s3104 + $0x10] sm:$0xf]
  %v3110 = vld [vmem:[%s3104 + $0x14] sm:$0xf]
  %v3111 = vld [vmem:[%s3104 + $0x18] sm:$0xf]
  %v3112 = vld [vmem:[%s3104 + $0x1c] sm:$0xf]
  %v3113 = vld [vmem:[%s3104 + $0x20] sm:$0xf]
  %v3114 = vld [vmem:[%s3104 + $0x24] sm:$0xf]
  %v3115 = vld [vmem:[%s3104 + $0x28] sm:$0xf]
  %v3116 = vld [vmem:[%s3104 + $0x2c] sm:$0xf]
  %v3117 = vld [vmem:[%s3104 + $0x30] sm:$0xf]
  %v3118 = vld [vmem:[%s3104 + $0x34] sm:$0xf]
  %v3119 = vld [vmem:[%s3104 + $0x38] sm:$0xf]
  %v3120 = vld [vmem:[%s3104 + $0x3c] sm:$0xf]
  %v3137 = vunpack.c.l.b16 %v3105
  %v3138 = vunpack.c.l.b16 %v3106
  %v3139 = vunpack.c.l.b16 %v3107
  %v3140 = vunpack.c.l.b16 %v3108
  %v3141 = vunpack.c.l.b16 %v3109
  %v3142 = vunpack.c.l.b16 %v3110
  %v3143 = vunpack.c.l.b16 %v3111
  %v3144 = vunpack.c.l.b16 %v3112
  %v3145 = vunpack.c.l.b16 %v3113
  %v3146 = vunpack.c.l.b16 %v3114
  %v3147 = vunpack.c.l.b16 %v3115
  %v3148 = vunpack.c.l.b16 %v3116
  %v3149 = vunpack.c.l.b16 %v3117
  %v3150 = vunpack.c.l.b16 %v3118
  %v3151 = vunpack.c.l.b16 %v3119
  %v3152 = vunpack.c.l.b16 %v3120
  %v3153 = vpack.c.b16 %v3138, %v3137
  %v3154 = vpack.c.b16 %v3140, %v3139
  %v3155 = vpack.c.b16 %v3142, %v3141
  %v3156 = vpack.c.b16 %v3144, %v3143
  %v3157 = vpack.c.b16 %v3146, %v3145
  %v3158 = vpack.c.b16 %v3148, %v3147
  %v3159 = vpack.c.b16 %v3150, %v3149
  %v3160 = vpack.c.b16 %v3152, %v3151
  %3169 = vmatprep.subr.bf16.mxu0 0
  %3170 = vmatpush1.bf16.msra.mxu0 %v3153
  %3171 = vmatprep.subr.bf16.mxu0 0
  %3172 = vmatpush1.bf16.msra.mxu0 %v3154
  %3173 = vmatprep.subr.bf16.mxu0 0
  %3174 = vmatpush1.bf16.msra.mxu0 %v3155
  %3175 = vmatprep.subr.bf16.mxu0 0
  %3176 = vmatpush1.bf16.msra.mxu0 %v3156
  %3177 = vmatprep.subr.bf16.mxu0 0
  %3178 = vmatpush1.bf16.msra.mxu0 %v3157
  %3179 = vmatprep.subr.bf16.mxu0 0
  %3180 = vmatpush1.bf16.msra.mxu0 %v3158
  %3181 = vmatprep.subr.bf16.mxu0 0
  %3182 = vmatpush1.bf16.msra.mxu0 %v3159
  %3183 = vmatprep.subr.bf16.mxu0 0
  %3184 = vmatpush1.bf16.msra.mxu0 %v3160
  %3185 = vmatprep.subr.bf16.mxu0 0
  %3186 = vmatpush1.bf16.msra.mxu0 0
  %3187 = vmatprep.subr.bf16.mxu0 0
  %3188 = vmatpush1.bf16.msra.mxu0 0
  %3189 = vmatprep.subr.bf16.mxu0 0
  %3190 = vmatpush1.bf16.msra.mxu0 0
  %3191 = vmatprep.subr.bf16.mxu0 0
  %3192 = vmatpush1.bf16.msra.mxu0 0
  %3193 = vmatprep.subr.bf16.mxu0 0
  %3194 = vmatpush1.bf16.msra.mxu0 0
  %3195 = vmatprep.subr.bf16.mxu0 0
  %3196 = vmatpush1.bf16.msra.mxu0 0
  %3197 = vmatprep.subr.bf16.mxu0 0
  %3198 = vmatpush1.bf16.msra.mxu0 0
  %3199 = vmatprep.subr.bf16.mxu0 0
  %3200 = vmatpush1.bf16.msra.mxu0 0
  %3201 = vmatprep.mubr.bf16.mxu0 0
  %3202 = vmatmul.mubr.bf16.gmra.mrb[0].mxu0 %v3103
  %v3203 = vpop.f32.mrb[0].mxu0
  %v3204 = vadd.f32 0.0, %v3203
  %v3205 = vpop.f32.mrb[0].mxu0
  %v3206 = vpop.f32.mrb[0].mxu0
  %v3207 = vpop.f32.mrb[0].mxu0
  %3208 = vdwg.mxu0
  %v3209 = vadd.f32 %v3102, %v3204
  %v3210 = vpack.c.bf16 %v2773, %v2773
  %s3211 = scalar_lea.vmem %s9, 256
  %v3212 = vld [vmem:[%s3211] sm:$0xf]
  %v3213 = vld [vmem:[%s3211 + $0x4] sm:$0xf]
  %v3214 = vld [vmem:[%s3211 + $0x8] sm:$0xf]
  %v3215 = vld [vmem:[%s3211 + $0xc] sm:$0xf]
  %v3216 = vld [vmem:[%s3211 + $0x10] sm:$0xf]
  %v3217 = vld [vmem:[%s3211 + $0x14] sm:$0xf]
  %v3218 = vld [vmem:[%s3211 + $0x18] sm:$0xf]
  %v3219 = vld [vmem:[%s3211 + $0x1c] sm:$0xf]
  %v3220 = vld [vmem:[%s3211 + $0x20] sm:$0xf]
  %v3221 = vld [vmem:[%s3211 + $0x24] sm:$0xf]
  %v3222 = vld [vmem:[%s3211 + $0x28] sm:$0xf]
  %v3223 = vld [vmem:[%s3211 + $0x2c] sm:$0xf]
  %v3224 = vld [vmem:[%s3211 + $0x30] sm:$0xf]
  %v3225 = vld [vmem:[%s3211 + $0x34] sm:$0xf]
  %v3226 = vld [vmem:[%s3211 + $0x38] sm:$0xf]
  %v3227 = vld [vmem:[%s3211 + $0x3c] sm:$0xf]
  %v3244 = vunpack.c.l.b16 %v3212
  %v3245 = vunpack.c.l.b16 %v3213
  %v3246 = vunpack.c.l.b16 %v3214
  %v3247 = vunpack.c.l.b16 %v3215
  %v3248 = vunpack.c.l.b16 %v3216
  %v3249 = vunpack.c.l.b16 %v3217
  %v3250 = vunpack.c.l.b16 %v3218
  %v3251 = vunpack.c.l.b16 %v3219
  %v3252 = vunpack.c.l.b16 %v3220
  %v3253 = vunpack.c.l.b16 %v3221
  %v3254 = vunpack.c.l.b16 %v3222
  %v3255 = vunpack.c.l.b16 %v3223
  %v3256 = vunpack.c.l.b16 %v3224
  %v3257 = vunpack.c.l.b16 %v3225
  %v3258 = vunpack.c.l.b16 %v3226
  %v3259 = vunpack.c.l.b16 %v3227
  %v3260 = vpack.c.b16 %v3245, %v3244
  %v3261 = vpack.c.b16 %v3247, %v3246
  %v3262 = vpack.c.b16 %v3249, %v3248
  %v3263 = vpack.c.b16 %v3251, %v3250
  %v3264 = vpack.c.b16 %v3253, %v3252
  %v3265 = vpack.c.b16 %v3255, %v3254
  %v3266 = vpack.c.b16 %v3257, %v3256
  %v3267 = vpack.c.b16 %v3259, %v3258
  %3276 = vmatprep.subr.bf16.mxu0 0
  %3277 = vmatpush1.bf16.msra.mxu0 %v3260
  %3278 = vmatprep.subr.bf16.mxu0 0
  %3279 = vmatpush1.bf16.msra.mxu0 %v3261
  %3280 = vmatprep.subr.bf16.mxu0 0
  %3281 = vmatpush1.bf16.msra.mxu0 %v3262
  %3282 = vmatprep.subr.bf16.mxu0 0
  %3283 = vmatpush1.bf16.msra.mxu0 %v3263
  %3284 = vmatprep.subr.bf16.mxu0 0
  %3285 = vmatpush1.bf16.msra.mxu0 %v3264
  %3286 = vmatprep.subr.bf16.mxu0 0
  %3287 = vmatpush1.bf16.msra.mxu0 %v3265
  %3288 = vmatprep.subr.bf16.mxu0 0
  %3289 = vmatpush1.bf16.msra.mxu0 %v3266
  %3290 = vmatprep.subr.bf16.mxu0 0
  %3291 = vmatpush1.bf16.msra.mxu0 %v3267
  %3292 = vmatprep.subr.bf16.mxu0 0
  %3293 = vmatpush1.bf16.msra.mxu0 0
  %3294 = vmatprep.subr.bf16.mxu0 0
  %3295 = vmatpush1.bf16.msra.mxu0 0
  %3296 = vmatprep.subr.bf16.mxu0 0
  %3297 = vmatpush1.bf16.msra.mxu0 0
  %3298 = vmatprep.subr.bf16.mxu0 0
  %3299 = vmatpush1.bf16.msra.mxu0 0
  %3300 = vmatprep.subr.bf16.mxu0 0
  %3301 = vmatpush1.bf16.msra.mxu0 0
  %3302 = vmatprep.subr.bf16.mxu0 0
  %3303 = vmatpush1.bf16.msra.mxu0 0
  %3304 = vmatprep.subr.bf16.mxu0 0
  %3305 = vmatpush1.bf16.msra.mxu0 0
  %3306 = vmatprep.subr.bf16.mxu0 0
  %3307 = vmatpush1.bf16.msra.mxu0 0
  %3308 = vmatprep.mubr.bf16.mxu0 0
  %3309 = vmatmul.mubr.bf16.gmra.mrb[0].mxu0 %v3210
  %v3310 = vpop.f32.mrb[0].mxu0
  %v3311 = vadd.f32 0.0, %v3310
  %v3312 = vpop.f32.mrb[0].mxu0
  %v3313 = vpop.f32.mrb[0].mxu0
  %v3314 = vpop.f32.mrb[0].mxu0
  %3315 = vdwg.mxu0
  %v3316 = vadd.f32 %v3209, %v3311
  %v3317 = vpack.c.bf16 %v2774, %v2774
  %s3318 = scalar_lea.vmem %s9, 320
  %v3319 = vld [vmem:[%s3318] sm:$0xf]
  %v3320 = vld [vmem:[%s3318 + $0x4] sm:$0xf]
  %v3321 = vld [vmem:[%s3318 + $0x8] sm:$0xf]
  %v3322 = vld [vmem:[%s3318 + $0xc] sm:$0xf]
  %v3323 = vld [vmem:[%s3318 + $0x10] sm:$0xf]
  %v3324 = vld [vmem:[%s3318 + $0x14] sm:$0xf]
  %v3325 = vld [vmem:[%s3318 + $0x18] sm:$0xf]
  %v3326 = vld [vmem:[%s3318 + $0x1c] sm:$0xf]
  %v3327 = vld [vmem:[%s3318 + $0x20] sm:$0xf]
  %v3328 = vld [vmem:[%s3318 + $0x24] sm:$0xf]
  %v3329 = vld [vmem:[%s3318 + $0x28] sm:$0xf]
  %v3330 = vld [vmem:[%s3318 + $0x2c] sm:$0xf]
  %v3331 = vld [vmem:[%s3318 + $0x30] sm:$0xf]
  %v3332 = vld [vmem:[%s3318 + $0x34] sm:$0xf]
  %v3333 = vld [vmem:[%s3318 + $0x38] sm:$0xf]
  %v3334 = vld [vmem:[%s3318 + $0x3c] sm:$0xf]
  %v3351 = vunpack.c.l.b16 %v3319
  %v3352 = vunpack.c.l.b16 %v3320
  %v3353 = vunpack.c.l.b16 %v3321
  %v3354 = vunpack.c.l.b16 %v3322
  %v3355 = vunpack.c.l.b16 %v3323
  %v3356 = vunpack.c.l.b16 %v3324
  %v3357 = vunpack.c.l.b16 %v3325
  %v3358 = vunpack.c.l.b16 %v3326
  %v3359 = vunpack.c.l.b16 %v3327
  %v3360 = vunpack.c.l.b16 %v3328
  %v3361 = vunpack.c.l.b16 %v3329
  %v3362 = vunpack.c.l.b16 %v3330
  %v3363 = vunpack.c.l.b16 %v3331
  %v3364 = vunpack.c.l.b16 %v3332
  %v3365 = vunpack.c.l.b16 %v3333
  %v3366 = vunpack.c.l.b16 %v3334
  %v3367 = vpack.c.b16 %v3352, %v3351
  %v3368 = vpack.c.b16 %v3354, %v3353
  %v3369 = vpack.c.b16 %v3356, %v3355
  %v3370 = vpack.c.b16 %v3358, %v3357
  %v3371 = vpack.c.b16 %v3360, %v3359
  %v3372 = vpack.c.b16 %v3362, %v3361
  %v3373 = vpack.c.b16 %v3364, %v3363
  %v3374 = vpack.c.b16 %v3366, %v3365
  %3383 = vmatprep.subr.bf16.mxu0 0
  %3384 = vmatpush1.bf16.msra.mxu0 %v3367
  %3385 = vmatprep.subr.bf16.mxu0 0
  %3386 = vmatpush1.bf16.msra.mxu0 %v3368
  %3387 = vmatprep.subr.bf16.mxu0 0
  %3388 = vmatpush1.bf16.msra.mxu0 %v3369
  %3389 = vmatprep.subr.bf16.mxu0 0
  %3390 = vmatpush1.bf16.msra.mxu0 %v3370
  %3391 = vmatprep.subr.bf16.mxu0 0
  %3392 = vmatpush1.bf16.msra.mxu0 %v3371
  %3393 = vmatprep.subr.bf16.mxu0 0
  %3394 = vmatpush1.bf16.msra.mxu0 %v3372
  %3395 = vmatprep.subr.bf16.mxu0 0
  %3396 = vmatpush1.bf16.msra.mxu0 %v3373
  %3397 = vmatprep.subr.bf16.mxu0 0
  %3398 = vmatpush1.bf16.msra.mxu0 %v3374
  %3399 = vmatprep.subr.bf16.mxu0 0
  %3400 = vmatpush1.bf16.msra.mxu0 0
  %3401 = vmatprep.subr.bf16.mxu0 0
  %3402 = vmatpush1.bf16.msra.mxu0 0
  %3403 = vmatprep.subr.bf16.mxu0 0
  %3404 = vmatpush1.bf16.msra.mxu0 0
  %3405 = vmatprep.subr.bf16.mxu0 0
  %3406 = vmatpush1.bf16.msra.mxu0 0
  %3407 = vmatprep.subr.bf16.mxu0 0
  %3408 = vmatpush1.bf16.msra.mxu0 0
  %3409 = vmatprep.subr.bf16.mxu0 0
  %3410 = vmatpush1.bf16.msra.mxu0 0
  %3411 = vmatprep.subr.bf16.mxu0 0
  %3412 = vmatpush1.bf16.msra.mxu0 0
  %3413 = vmatprep.subr.bf16.mxu0 0
  %3414 = vmatpush1.bf16.msra.mxu0 0
  %3415 = vmatprep.mubr.bf16.mxu0 0
  %3416 = vmatmul.mubr.bf16.gmra.mrb[0].mxu0 %v3317
  %v3417 = vpop.f32.mrb[0].mxu0
  %v3418 = vadd.f32 0.0, %v3417
  %v3419 = vpop.f32.mrb[0].mxu0
  %v3420 = vpop.f32.mrb[0].mxu0
  %v3421 = vpop.f32.mrb[0].mxu0
  %3422 = vdwg.mxu0
  %v3423 = vadd.f32 %v3316, %v3418
  %v3424 = vpack.c.bf16 %v2775, %v2775
  %s3425 = scalar_lea.vmem %s9, 384
  %v3426 = vld [vmem:[%s3425] sm:$0xf]
  %v3427 = vld [vmem:[%s3425 + $0x4] sm:$0xf]
  %v3428 = vld [vmem:[%s3425 + $0x8] sm:$0xf]
  %v3429 = vld [vmem:[%s3425 + $0xc] sm:$0xf]
  %v3430 = vld [vmem:[%s3425 + $0x10] sm:$0xf]
  %v3431 = vld [vmem:[%s3425 + $0x14] sm:$0xf]
  %v3432 = vld [vmem:[%s3425 + $0x18] sm:$0xf]
  %v3433 = vld [vmem:[%s3425 + $0x1c] sm:$0xf]
  %v3434 = vld [vmem:[%s3425 + $0x20] sm:$0xf]
  %v3435 = vld [vmem:[%s3425 + $0x24] sm:$0xf]
  %v3436 = vld [vmem:[%s3425 + $0x28] sm:$0xf]
  %v3437 = vld [vmem:[%s3425 + $0x2c] sm:$0xf]
  %v3438 = vld [vmem:[%s3425 + $0x30] sm:$0xf]
  %v3439 = vld [vmem:[%s3425 + $0x34] sm:$0xf]
  %v3440 = vld [vmem:[%s3425 + $0x38] sm:$0xf]
  %v3441 = vld [vmem:[%s3425 + $0x3c] sm:$0xf]
  %v3458 = vunpack.c.l.b16 %v3426
  %v3459 = vunpack.c.l.b16 %v3427
  %v3460 = vunpack.c.l.b16 %v3428
  %v3461 = vunpack.c.l.b16 %v3429
  %v3462 = vunpack.c.l.b16 %v3430
  %v3463 = vunpack.c.l.b16 %v3431
  %v3464 = vunpack.c.l.b16 %v3432
  %v3465 = vunpack.c.l.b16 %v3433
  %v3466 = vunpack.c.l.b16 %v3434
  %v3467 = vunpack.c.l.b16 %v3435
  %v3468 = vunpack.c.l.b16 %v3436
  %v3469 = vunpack.c.l.b16 %v3437
  %v3470 = vunpack.c.l.b16 %v3438
  %v3471 = vunpack.c.l.b16 %v3439
  %v3472 = vunpack.c.l.b16 %v3440
  %v3473 = vunpack.c.l.b16 %v3441
  %v3474 = vpack.c.b16 %v3459, %v3458
  %v3475 = vpack.c.b16 %v3461, %v3460
  %v3476 = vpack.c.b16 %v3463, %v3462
  %v3477 = vpack.c.b16 %v3465, %v3464
  %v3478 = vpack.c.b16 %v3467, %v3466
  %v3479 = vpack.c.b16 %v3469, %v3468
  %v3480 = vpack.c.b16 %v3471, %v3470
  %v3481 = vpack.c.b16 %v3473, %v3472
  %3490 = vmatprep.subr.bf16.mxu0 0
  %3491 = vmatpush1.bf16.msra.mxu0 %v3474
  %3492 = vmatprep.subr.bf16.mxu0 0
  %3493 = vmatpush1.bf16.msra.mxu0 %v3475
  %3494 = vmatprep.subr.bf16.mxu0 0
  %3495 = vmatpush1.bf16.msra.mxu0 %v3476
  %3496 = vmatprep.subr.bf16.mxu0 0
  %3497 = vmatpush1.bf16.msra.mxu0 %v3477
  %3498 = vmatprep.subr.bf16.mxu0 0
  %3499 = vmatpush1.bf16.msra.mxu0 %v3478
  %3500 = vmatprep.subr.bf16.mxu0 0
  %3501 = vmatpush1.bf16.msra.mxu0 %v3479
  %3502 = vmatprep.subr.bf16.mxu0 0
  %3503 = vmatpush1.bf16.msra.mxu0 %v3480
  %3504 = vmatprep.subr.bf16.mxu0 0
  %3505 = vmatpush1.bf16.msra.mxu0 %v3481
  %3506 = vmatprep.subr.bf16.mxu0 0
  %3507 = vmatpush1.bf16.msra.mxu0 0
  %3508 = vmatprep.subr.bf16.mxu0 0
  %3509 = vmatpush1.bf16.msra.mxu0 0
  %3510 = vmatprep.subr.bf16.mxu0 0
  %3511 = vmatpush1.bf16.msra.mxu0 0
  %3512 = vmatprep.subr.bf16.mxu0 0
  %3513 = vmatpush1.bf16.msra.mxu0 0
  %3514 = vmatprep.subr.bf16.mxu0 0
  %3515 = vmatpush1.bf16.msra.mxu0 0
  %3516 = vmatprep.subr.bf16.mxu0 0
  %3517 = vmatpush1.bf16.msra.mxu0 0
  %3518 = vmatprep.subr.bf16.mxu0 0
  %3519 = vmatpush1.bf16.msra.mxu0 0
  %3520 = vmatprep.subr.bf16.mxu0 0
  %3521 = vmatpush1.bf16.msra.mxu0 0
  %3522 = vmatprep.mubr.bf16.mxu0 0
  %3523 = vmatmul.mubr.bf16.gmra.mrb[0].mxu0 %v3424
  %v3524 = vpop.f32.mrb[0].mxu0
  %v3525 = vadd.f32 0.0, %v3524
  %v3526 = vpop.f32.mrb[0].mxu0
  %v3527 = vpop.f32.mrb[0].mxu0
  %v3528 = vpop.f32.mrb[0].mxu0
  %3529 = vdwg.mxu0
  %v3530 = vadd.f32 %v3423, %v3525
  %3531 = vst [vmem:[%s11] sm:$0xff] %v3530
  // Predicated region
  $region46: #{cnn_forward.1} parent=0 // pred_check
    _
  $region47: #{cnn_forward.1} parent=0 // pred_check_branch
    %3533 = sbr.rel (0) target = $region49
  $region48: #{cnn_forward.1} parent=0 // pred_region
    _
  $region49: #{cnn_forward.1} parent=0 // pred_fallthru
    _
  // Predicated region
  $region50: #{cnn_forward.1} parent=0 // pred_check
    _
  $region51: #{cnn_forward.1} parent=0 // pred_check_branch
    %3535 = sbr.rel (0) target = $region53
  $region52: #{cnn_forward.1} parent=0 // pred_region
    _
  $region53: #{cnn_forward.1} parent=0 // pred_fallthru
    _

</llo_original>
